<compile_context>
chip_gen: v7x
topology: tpu7x:2x2x1
jax: 0.10.0
libtpu: 0.0.40
codegen_flags: <defaults>
</compile_context>

<pallas_src>
import functools

import jax
import jax.numpy as jnp
from jax import lax
from jax.experimental import pallas as pl
from jax.experimental.pallas import tpu as pltpu


# ----------------------------------------------------------------------------
# Fused Pallas kernel: all LSTM layers + output Linear
# ----------------------------------------------------------------------------
def _bilstm_fused_kernel(x_ref, *rest, num_layers, seq_len, batch_pad, hidden,
                         unroll):
    L, T, Bp, H = num_layers, seq_len, batch_pad, hidden
    G = 4 * H                                   # gates per direction

    layer_refs = rest[:3 * L]                   # per layer: wih, whh, bias
    w_out_ref, b_out_ref, out_ref, y_f, y_b, xg = rest[3 * L:]

    def cell(gates, c_prev):
        # PyTorch gate order [i, f, g, o] along the 4H axis; f32 element-wise math.
        i = jax.nn.sigmoid(gates[:, 0 * H:1 * H])
        f = jax.nn.sigmoid(gates[:, 1 * H:2 * H])
        g = jnp.tanh(gates[:, 2 * H:3 * H])
        o = jax.nn.sigmoid(gates[:, 3 * H:4 * H])
        c_new = f * c_prev + i * g
        h_new = o * jnp.tanh(c_new)
        return h_new, c_new

    for layer in range(L):
        wih, whh, b = layer_refs[3 * layer: 3 * layer + 3]

        # ---- Hoisted input projection for ALL timesteps & BOTH directions.
        # Columns 0:4H = forward gates, 4H:8H = backward gates.
        if layer == 0:
            xg[...] = (
                jnp.dot(x_ref[...].astype(jnp.bfloat16), wih[...],
                        preferred_element_type=jnp.float32)
                + b[...])
        else:
            # Previous layer output is direction-major: y = [y_f | y_b].
            xg[...] = (
                jnp.dot(y_f[...].astype(jnp.bfloat16), wih[0:H, :],
                        preferred_element_type=jnp.float32)
                + jnp.dot(y_b[...].astype(jnp.bfloat16), wih[H:2 * H, :],
                          preferred_element_type=jnp.float32)
                + b[...])

        # ---- Peeled t = 0: h == c == 0, so no recurrent matmul is needed.
        z = jnp.zeros((Bp, H), jnp.float32)
        r_first = pl.ds(0, Bp)                  # forward input time 0
        r_last = pl.ds((T - 1) * Bp, Bp)        # backward input time T-1
        h_f0, c_f0 = cell(xg[r_first, 0:G], z)
        h_b0, c_b0 = cell(xg[r_last, G:2 * G], z)
        y_f[r_first, :] = h_f0
        y_b[r_last, :] = h_b0

        # ---- Serial recurrence: ONE MXU push per step (block-diagonal W_hh).
        def step(t, carry):
            h_fp, c_fp, h_bp, c_bp = carry
            t_rev = T - 1 - t
            rf = pl.ds(pl.multiple_of(t * Bp, Bp), Bp)        # fwd rows, time t
            rb = pl.ds(pl.multiple_of(t_rev * Bp, Bp), Bp)    # bwd rows, time T-1-t

            h_cat = jnp.concatenate([h_fp, h_bp], axis=1).astype(jnp.bfloat16)
            rec = jnp.dot(h_cat, whh[...], preferred_element_type=jnp.float32)

            h_fn, c_fn = cell(xg[rf, 0:G] + rec[:, 0:G], c_fp)
            h_bn, c_bn = cell(xg[rb, G:2 * G] + rec[:, G:2 * G], c_bp)

            y_f[rf, :] = h_fn                                  # lane-dense writes
            y_b[rb, :] = h_bn
            return h_fn, c_fn, h_bn, c_bn

        if T > 1:
            lax.fori_loop(1, T, step, (h_f0, c_f0, h_b0, c_b0), unroll=unroll)

    # ---- Final Linear(2H -> 2) on the VMEM-resident, direction-major outputs.
    out_ref[...] = (
        jnp.dot(y_f[...].astype(jnp.bfloat16), w_out_ref[0:H, :],
                preferred_element_type=jnp.float32)
        + jnp.dot(y_b[...].astype(jnp.bfloat16), w_out_ref[H:2 * H, :],
                  preferred_element_type=jnp.float32)
        + b_out_ref[...])


# ----------------------------------------------------------------------------
# Wrapper (plain JAX glue around one pallas_call)
# ----------------------------------------------------------------------------
def bilstm_forward(x, lstm_params, out_w, out_b, *, unroll=8):
    """x: (B, T, INPUT_SIZE) batch_first, like the PyTorch module. Returns (B, T, 2)."""
    x = x.astype(jnp.float32)
    B, T, IN = x.shape
    L = len(lstm_params)
    H = lstm_params[0][0][1].shape[0]            # whf: (H, 4H)
    Bp = max(8, ((B + 7) // 8) * 8)              # sublane-aligned batch

    # batch_first -> time-major, batch padded, flattened to (T*Bp, IN).
    x_tm = jnp.transpose(x, (1, 0, 2))
    if Bp != B:
        x_tm = jnp.pad(x_tm, ((0, 0), (0, Bp - B), (0, 0)))
    x2d = x_tm.reshape(T * Bp, IN)

    # Pack weights per layer: wih (in_l, 8H) = [W_ih_f^T | W_ih_b^T] (bf16),
    # whh (2H, 8H) block-diagonal (bf16), bias (1, 8H) (f32, b_ih + b_hh folded).
    flat_params = []
    for (wif, whf, bf), (wib, whb, bb) in lstm_params:
        wih = jnp.concatenate([wif, wib], axis=1).astype(jnp.bfloat16)
        whh = jnp.zeros((2 * H, 8 * H), jnp.float32)
        whh = whh.at[0:H, 0:4 * H].set(whf).at[H:2 * H, 4 * H:8 * H].set(whb)
        flat_params += [wih, whh.astype(jnp.bfloat16),
                        jnp.concatenate([bf, bb], axis=1)]
    flat_params += [out_w.astype(jnp.bfloat16), out_b]

    kernel = functools.partial(
        _bilstm_fused_kernel, num_layers=L, seq_len=T, batch_pad=Bp, hidden=H,
        unroll=(max(1, min(unroll, T - 1)) if T > 1 else 1))

    n_inputs = 1 + len(flat_params)
    in_specs = [pl.BlockSpec(memory_space=pltpu.MemorySpace.VMEM)
                for _ in range(n_inputs)]
    out_spec = pl.BlockSpec(memory_space=pltpu.MemorySpace.VMEM)

    scratch = [
        pltpu.VMEM((T * Bp, H), jnp.float32),       # y_f (forward outputs)
        pltpu.VMEM((T * Bp, H), jnp.float32),       # y_b (backward outputs)
        pltpu.VMEM((T * Bp, 8 * H), jnp.float32),   # fused gate projection
    ]

    arg_bytes = sum(int(a.size) * a.dtype.itemsize for a in [x2d, *flat_params])
    scratch_bytes = T * Bp * (10 * H) * 4
    out_bytes = T * Bp * 2 * 4
    vmem_limit = int(min(64 * 1024 * 1024,
                         max(16 * 1024 * 1024,
                             2 * (arg_bytes + scratch_bytes + out_bytes))))

    out = pl.pallas_call(
        kernel,
        out_shape=jax.ShapeDtypeStruct((T * Bp, 2), jnp.float32),
        in_specs=in_specs,
        out_specs=out_spec,
        scratch_shapes=scratch,
        compiler_params=pltpu.CompilerParams(vmem_limit_bytes=vmem_limit),
    )(x2d, *flat_params)

    out = out.reshape(T, Bp, 2)[:, :B, :]
    return jnp.transpose(out, (1, 0, 2))            # back to (B, T, 2)


# ----------------------------------------------------------------------------
# Deterministic parameter init (matches PyTorch shapes / gate order)
# ----------------------------------------------------------------------------
def init_params(key, input_size, hidden_size, num_layers):
    H = hidden_size
    k_lstm = 1.0 / jnp.sqrt(jnp.float32(H))
    lstm_params = []
    for layer in range(num_layers):
        in_l = input_size if layer == 0 else 2 * H
        dir_params = []
        for _ in range(2):  # forward, backward
            key, k1, k2, k3, k4 = jax.random.split(key, 5)
            # stored pre-transposed: W_ih^T (in_l, 4H), W_hh^T (H, 4H)
            w_ih_t = jax.random.uniform(k1, (in_l, 4 * H), jnp.float32, -k_lstm, k_lstm)
            w_hh_t = jax.random.uniform(k2, (H, 4 * H), jnp.float32, -k_lstm, k_lstm)
            b_ih = jax.random.uniform(k3, (4 * H,), jnp.float32, -k_lstm, k_lstm)
            b_hh = jax.random.uniform(k4, (4 * H,), jnp.float32, -k_lstm, k_lstm)
            b = (b_ih + b_hh).reshape(1, 4 * H)
            dir_params.append((w_ih_t, w_hh_t, b))
        lstm_params.append(tuple(dir_params))

    k_lin = 1.0 / jnp.sqrt(jnp.float32(2 * H))
    key, k1, k2 = jax.random.split(key, 3)
    out_w = jax.random.uniform(k1, (2 * H, 2), jnp.float32, -k_lin, k_lin)  # W^T
    out_b = jax.random.uniform(k2, (1, 2), jnp.float32, -k_lin, k_lin)
    return lstm_params, out_w, out_b


# ----------------------------------------------------------------------------
# Pure-JAX reference (lax.scan, f32) for correctness checking
# ----------------------------------------------------------------------------
def _ref_lstm_dir(x_tm, w_ih_t, w_hh_t, b, H):
    B = x_tm.shape[1]

    def step(carry, x_t):
        h, c = carry
        gates = x_t @ w_ih_t + h @ w_hh_t + b
        i = jax.nn.sigmoid(gates[:, :H])
        f = jax.nn.sigmoid(gates[:, H:2 * H])
        g = jnp.tanh(gates[:, 2 * H:3 * H])
        o = jax.nn.sigmoid(gates[:, 3 * H:])
        c = f * c + i * g
        h = o * jnp.tanh(c)
        return (h, c), h

    init = (jnp.zeros((B, H), jnp.float32), jnp.zeros((B, H), jnp.float32))
    _, ys = lax.scan(step, init, x_tm)
    return ys


def bilstm_reference(x, lstm_params, out_w, out_b):
    x = x.astype(jnp.float32)
    h = jnp.transpose(x, (1, 0, 2))
    for (wif, whf, bf), (wib, whb, bb) in lstm_params:
        H = whf.shape[0]
        fwd = _ref_lstm_dir(h, wif, whf, bf, H)
        bwd = _ref_lstm_dir(h[::-1], wib, whb, bb, H)[::-1]
        h = jnp.concatenate([fwd, bwd], axis=-1)
    out = h @ out_w + out_b
    return jnp.transpose(out, (1, 0, 2))


# ----------------------------------------------------------------------------
if __name__ == "__main__":
    INPUT_SIZE = 16
    HIDDEN_SIZE = 32
    LAYER_NUM = 2
    BATCH = 2
    SEQ = 8

    key = jax.random.PRNGKey(0)
    key, k_x, k_p = jax.random.split(key, 3)
    x = jax.random.normal(k_x, (BATCH, SEQ, INPUT_SIZE), jnp.float32)

    lstm_params, out_w, out_b = init_params(k_p, INPUT_SIZE, HIDDEN_SIZE, LAYER_NUM)

    out = bilstm_forward(x, lstm_params, out_w, out_b)
    out = jax.block_until_ready(out)

    ref = jax.block_until_ready(bilstm_reference(x, lstm_params, out_w, out_b))

    assert out.shape == (BATCH, SEQ, 2), out.shape
    # bf16 MXU operands in the kernel -> loosened tolerances vs. the f32 reference.
    assert jnp.allclose(out, ref, rtol=1e-1, atol=2e-2), (
        float(jnp.max(jnp.abs(out - ref)))
    )
    print("KERNEL_OK")
</pallas_src>

<mosaic_0001>
module attributes {stable_mosaic.version = 11 : i64} {
  func.func @_bilstm_fused_kernel(%arg0: memref<64x16xf32, #tpu.memory_space<vmem>>, %arg1: memref<16x256xbf16, #tpu.memory_space<vmem>>, %arg2: memref<64x256xbf16, #tpu.memory_space<vmem>>, %arg3: memref<1x256xf32, #tpu.memory_space<vmem>>, %arg4: memref<64x256xbf16, #tpu.memory_space<vmem>>, %arg5: memref<64x256xbf16, #tpu.memory_space<vmem>>, %arg6: memref<1x256xf32, #tpu.memory_space<vmem>>, %arg7: memref<64x2xbf16, #tpu.memory_space<vmem>>, %arg8: memref<1x2xf32, #tpu.memory_space<vmem>>, %arg9: memref<64x2xf32, #tpu.memory_space<vmem>>, %arg10: memref<64x32xf32, #tpu.memory_space<vmem>>, %arg11: memref<64x32xf32, #tpu.memory_space<vmem>>, %arg12: memref<64x256xf32, #tpu.memory_space<vmem>>) attributes {dimension_semantics = [], scalar_prefetch = 0 : i64, scratch_operands = 3 : i64, tpu.core_type = #tpu.core_type<tc>} {
    %c0 = arith.constant 0 : index
    %c0_0 = arith.constant 0 : index
    %0 = vector.load %arg0[%c0, %c0_0] : memref<64x16xf32, #tpu.memory_space<vmem>>, vector<64x16xf32>
    %1 = arith.truncf %0 : vector<64x16xf32> to vector<64x16xbf16>
    %c0_1 = arith.constant 0 : index
    %c0_2 = arith.constant 0 : index
    %2 = vector.load %arg1[%c0_1, %c0_2] : memref<16x256xbf16, #tpu.memory_space<vmem>>, vector<16x256xbf16>
    %cst = arith.constant dense<0.000000e+00> : vector<64x256xf32>
    %3 = tpu.matmul %1, %2, %cst {dimension_numbers = #tpu.dot_dimension_numbers<[1], [0], [0], [1], [0, 0, 1, 1], [], []>} : vector<64x16xbf16>, vector<16x256xbf16>, vector<64x256xf32> -> vector<64x256xf32>
    %c0_3 = arith.constant 0 : index
    %c0_4 = arith.constant 0 : index
    %4 = vector.load %arg3[%c0_3, %c0_4] : memref<1x256xf32, #tpu.memory_space<vmem>>, vector<1x256xf32>
    %5 = vector.broadcast %4 : vector<1x256xf32> to vector<64x256xf32>
    %6 = arith.addf %3, %5 : vector<64x256xf32>
    %c0_5 = arith.constant 0 : index
    %c0_6 = arith.constant 0 : index
    %7 = vector.load %arg12[%c0_5, %c0_6] : memref<64x256xf32, #tpu.memory_space<vmem>>, vector<64x256xf32>
    tpu.vector_store %arg12[%c0_5, %c0_6], %6 {strides = array<i32>} : memref<64x256xf32, #tpu.memory_space<vmem>>, vector<64x256xf32>,
    %cst_7 = arith.constant 0.000000e+00 : f32
    %8 = vector.broadcast %cst_7 : f32 to vector<8x32xf32>
    %c0_8 = arith.constant 0 : index
    %c0_9 = arith.constant 0 : index
    %9 = vector.load %arg12[%c0_8, %c0_9] : memref<64x256xf32, #tpu.memory_space<vmem>>, vector<8x128xf32>
    %10 = vector.extract_strided_slice %9 {offsets = [0, 0], sizes = [8, 32], strides = [1, 1]} : vector<8x128xf32> to vector<8x32xf32>
    %11 = arith.negf %10 : vector<8x32xf32>
    %12 = math.exp %11 : vector<8x32xf32>
    %cst_10 = arith.constant 1.000000e+00 : f32
    %13 = vector.broadcast %cst_10 : f32 to vector<8x32xf32>
    %14 = arith.addf %13, %12 : vector<8x32xf32>
    %15 = arith.divf %13, %14 : vector<8x32xf32>
    %16 = vector.extract_strided_slice %9 {offsets = [0, 32], sizes = [8, 32], strides = [1, 1]} : vector<8x128xf32> to vector<8x32xf32>
    %17 = arith.negf %16 : vector<8x32xf32>
    %18 = math.exp %17 : vector<8x32xf32>
    %cst_11 = arith.constant 1.000000e+00 : f32
    %19 = vector.broadcast %cst_11 : f32 to vector<8x32xf32>
    %20 = arith.addf %19, %18 : vector<8x32xf32>
    %21 = arith.divf %19, %20 : vector<8x32xf32>
    %22 = vector.extract_strided_slice %9 {offsets = [0, 64], sizes = [8, 32], strides = [1, 1]} : vector<8x128xf32> to vector<8x32xf32>
    %23 = math.tanh %22 : vector<8x32xf32>
    %24 = vector.extract_strided_slice %9 {offsets = [0, 96], sizes = [8, 32], strides = [1, 1]} : vector<8x128xf32> to vector<8x32xf32>
    %25 = arith.negf %24 : vector<8x32xf32>
    %26 = math.exp %25 : vector<8x32xf32>
    %cst_12 = arith.constant 1.000000e+00 : f32
    %27 = vector.broadcast %cst_12 : f32 to vector<8x32xf32>
    %28 = arith.addf %27, %26 : vector<8x32xf32>
    %29 = arith.divf %27, %28 : vector<8x32xf32>
    %30 = arith.mulf %21, %8 : vector<8x32xf32>
    %31 = arith.mulf %15, %23 : vector<8x32xf32>
    %32 = arith.addf %30, %31 : vector<8x32xf32>
    %33 = math.tanh %32 : vector<8x32xf32>
    %34 = arith.mulf %29, %33 : vector<8x32xf32>
    %c56 = arith.constant 56 : index
    %c128 = arith.constant 128 : index
    %35 = vector.load %arg12[%c56, %c128] : memref<64x256xf32, #tpu.memory_space<vmem>>, vector<8x128xf32>
    %36 = vector.extract_strided_slice %35 {offsets = [0, 0], sizes = [8, 32], strides = [1, 1]} : vector<8x128xf32> to vector<8x32xf32>
    %37 = arith.negf %36 : vector<8x32xf32>
    %38 = math.exp %37 : vector<8x32xf32>
    %cst_13 = arith.constant 1.000000e+00 : f32
    %39 = vector.broadcast %cst_13 : f32 to vector<8x32xf32>
    %40 = arith.addf %39, %38 : vector<8x32xf32>
    %41 = arith.divf %39, %40 : vector<8x32xf32>
    %42 = vector.extract_strided_slice %35 {offsets = [0, 32], sizes = [8, 32], strides = [1, 1]} : vector<8x128xf32> to vector<8x32xf32>
    %43 = arith.negf %42 : vector<8x32xf32>
    %44 = math.exp %43 : vector<8x32xf32>
    %cst_14 = arith.constant 1.000000e+00 : f32
    %45 = vector.broadcast %cst_14 : f32 to vector<8x32xf32>
    %46 = arith.addf %45, %44 : vector<8x32xf32>
    %47 = arith.divf %45, %46 : vector<8x32xf32>
    %48 = vector.extract_strided_slice %35 {offsets = [0, 64], sizes = [8, 32], strides = [1, 1]} : vector<8x128xf32> to vector<8x32xf32>
    %49 = math.tanh %48 : vector<8x32xf32>
    %50 = vector.extract_strided_slice %35 {offsets = [0, 96], sizes = [8, 32], strides = [1, 1]} : vector<8x128xf32> to vector<8x32xf32>
    %51 = arith.negf %50 : vector<8x32xf32>
    %52 = math.exp %51 : vector<8x32xf32>
    %cst_15 = arith.constant 1.000000e+00 : f32
    %53 = vector.broadcast %cst_15 : f32 to vector<8x32xf32>
    %54 = arith.addf %53, %52 : vector<8x32xf32>
    %55 = arith.divf %53, %54 : vector<8x32xf32>
    %56 = arith.mulf %47, %8 : vector<8x32xf32>
    %57 = arith.mulf %41, %49 : vector<8x32xf32>
    %58 = arith.addf %56, %57 : vector<8x32xf32>
    %59 = math.tanh %58 : vector<8x32xf32>
    %60 = arith.mulf %55, %59 : vector<8x32xf32>
    %c0_16 = arith.constant 0 : index
    %c0_17 = arith.constant 0 : index
    %61 = vector.load %arg10[%c0_16, %c0_17] : memref<64x32xf32, #tpu.memory_space<vmem>>, vector<8x32xf32>
    tpu.vector_store %arg10[%c0_16, %c0_17], %34 {strides = array<i32>} : memref<64x32xf32, #tpu.memory_space<vmem>>, vector<8x32xf32>,
    %c56_18 = arith.constant 56 : index
    %c0_19 = arith.constant 0 : index
    %62 = vector.load %arg11[%c56_18, %c0_19] : memref<64x32xf32, #tpu.memory_space<vmem>>, vector<8x32xf32>
    tpu.vector_store %arg11[%c56_18, %c0_19], %60 {strides = array<i32>} : memref<64x32xf32, #tpu.memory_space<vmem>>, vector<8x32xf32>,
    %c1_i32 = arith.constant 1 : i32
    %c7_i32 = arith.constant 7 : i32
    %63 = arith.subi %c7_i32, %c1_i32 : i32
    %c8_i32 = arith.constant 8 : i32
    %64 = arith.muli %c1_i32, %c8_i32 : i32
    %65 = tpu.assume_multiple %64, 8 : i32
    %c8_i32_20 = arith.constant 8 : i32
    %66 = arith.muli %63, %c8_i32_20 : i32
    %67 = tpu.assume_multiple %66, 8 : i32
    %68 = tpu.concatenate %34, %60 in 1 : vector<8x32xf32>, vector<8x32xf32> -> vector<8x64xf32>
    %69 = arith.truncf %68 : vector<8x64xf32> to vector<8x64xbf16>
    %c0_21 = arith.constant 0 : index
    %c0_22 = arith.constant 0 : index
    %70 = vector.load %arg2[%c0_21, %c0_22] : memref<64x256xbf16, #tpu.memory_space<vmem>>, vector<64x256xbf16>
    %cst_23 = arith.constant dense<0.000000e+00> : vector<8x256xf32>
    %71 = tpu.matmul %69, %70, %cst_23 {dimension_numbers = #tpu.dot_dimension_numbers<[1], [0], [0], [1], [0, 0, 1, 1], [], []>} : vector<8x64xbf16>, vector<64x256xbf16>, vector<8x256xf32> -> vector<8x256xf32>
    %72 = arith.index_cast %65 : i32 to index
    %c0_24 = arith.constant 0 : index
    %73 = vector.load %arg12[%72, %c0_24] : memref<64x256xf32, #tpu.memory_space<vmem>>, vector<8x128xf32>
    %74 = vector.extract_strided_slice %71 {offsets = [0, 0], sizes = [8, 128], strides = [1, 1]} : vector<8x256xf32> to vector<8x128xf32>
    %75 = arith.addf %73, %74 : vector<8x128xf32>
    %76 = vector.extract_strided_slice %75 {offsets = [0, 0], sizes = [8, 32], strides = [1, 1]} : vector<8x128xf32> to vector<8x32xf32>
    %77 = arith.negf %76 : vector<8x32xf32>
    %78 = math.exp %77 : vector<8x32xf32>
    %cst_25 = arith.constant 1.000000e+00 : f32
    %79 = vector.broadcast %cst_25 : f32 to vector<8x32xf32>
    %80 = arith.addf %79, %78 : vector<8x32xf32>
    %81 = arith.divf %79, %80 : vector<8x32xf32>
    %82 = vector.extract_strided_slice %75 {offsets = [0, 32], sizes = [8, 32], strides = [1, 1]} : vector<8x128xf32> to vector<8x32xf32>
    %83 = arith.negf %82 : vector<8x32xf32>
    %84 = math.exp %83 : vector<8x32xf32>
    %cst_26 = arith.constant 1.000000e+00 : f32
    %85 = vector.broadcast %cst_26 : f32 to vector<8x32xf32>
    %86 = arith.addf %85, %84 : vector<8x32xf32>
    %87 = arith.divf %85, %86 : vector<8x32xf32>
    %88 = vector.extract_strided_slice %75 {offsets = [0, 64], sizes = [8, 32], strides = [1, 1]} : vector<8x128xf32> to vector<8x32xf32>
    %89 = math.tanh %88 : vector<8x32xf32>
    %90 = vector.extract_strided_slice %75 {offsets = [0, 96], sizes = [8, 32], strides = [1, 1]} : vector<8x128xf32> to vector<8x32xf32>
    %91 = arith.negf %90 : vector<8x32xf32>
    %92 = math.exp %91 : vector<8x32xf32>
    %cst_27 = arith.constant 1.000000e+00 : f32
    %93 = vector.broadcast %cst_27 : f32 to vector<8x32xf32>
    %94 = arith.addf %93, %92 : vector<8x32xf32>
    %95 = arith.divf %93, %94 : vector<8x32xf32>
    %96 = arith.mulf %87, %32 : vector<8x32xf32>
    %97 = arith.mulf %81, %89 : vector<8x32xf32>
    %98 = arith.addf %96, %97 : vector<8x32xf32>
    %99 = math.tanh %98 : vector<8x32xf32>
    %100 = arith.mulf %95, %99 : vector<8x32xf32>
    %101 = arith.index_cast %67 : i32 to index
    %c128_28 = arith.constant 128 : index
    %102 = vector.load %arg12[%101, %c128_28] : memref<64x256xf32, #tpu.memory_space<vmem>>, vector<8x128xf32>
    %103 = vector.extract_strided_slice %71 {offsets = [0, 128], sizes = [8, 128], strides = [1, 1]} : vector<8x256xf32> to vector<8x128xf32>
    %104 = arith.addf %102, %103 : vector<8x128xf32>
    %105 = vector.extract_strided_slice %104 {offsets = [0, 0], sizes = [8, 32], strides = [1, 1]} : vector<8x128xf32> to vector<8x32xf32>
    %106 = arith.negf %105 : vector<8x32xf32>
    %107 = math.exp %106 : vector<8x32xf32>
    %cst_29 = arith.constant 1.000000e+00 : f32
    %108 = vector.broadcast %cst_29 : f32 to vector<8x32xf32>
    %109 = arith.addf %108, %107 : vector<8x32xf32>
    %110 = arith.divf %108, %109 : vector<8x32xf32>
    %111 = vector.extract_strided_slice %104 {offsets = [0, 32], sizes = [8, 32], strides = [1, 1]} : vector<8x128xf32> to vector<8x32xf32>
    %112 = arith.negf %111 : vector<8x32xf32>
    %113 = math.exp %112 : vector<8x32xf32>
    %cst_30 = arith.constant 1.000000e+00 : f32
    %114 = vector.broadcast %cst_30 : f32 to vector<8x32xf32>
    %115 = arith.addf %114, %113 : vector<8x32xf32>
    %116 = arith.divf %114, %115 : vector<8x32xf32>
    %117 = vector.extract_strided_slice %104 {offsets = [0, 64], sizes = [8, 32], strides = [1, 1]} : vector<8x128xf32> to vector<8x32xf32>
    %118 = math.tanh %117 : vector<8x32xf32>
    %119 = vector.extract_strided_slice %104 {offsets = [0, 96], sizes = [8, 32], strides = [1, 1]} : vector<8x128xf32> to vector<8x32xf32>
    %120 = arith.negf %119 : vector<8x32xf32>
    %121 = math.exp %120 : vector<8x32xf32>
    %cst_31 = arith.constant 1.000000e+00 : f32
    %122 = vector.broadcast %cst_31 : f32 to vector<8x32xf32>
    %123 = arith.addf %122, %121 : vector<8x32xf32>
    %124 = arith.divf %122, %123 : vector<8x32xf32>
    %125 = arith.mulf %116, %58 : vector<8x32xf32>
    %126 = arith.mulf %110, %118 : vector<8x32xf32>
    %127 = arith.addf %125, %126 : vector<8x32xf32>
    %128 = math.tanh %127 : vector<8x32xf32>
    %129 = arith.mulf %124, %128 : vector<8x32xf32>
    %130 = arith.index_cast %65 : i32 to index
    %c0_32 = arith.constant 0 : index
    %131 = vector.load %arg10[%130, %c0_32] : memref<64x32xf32, #tpu.memory_space<vmem>>, vector<8x32xf32>
    tpu.vector_store %arg10[%130, %c0_32], %100 {strides = array<i32>} : memref<64x32xf32, #tpu.memory_space<vmem>>, vector<8x32xf32>,
    %132 = arith.index_cast %67 : i32 to index
    %c0_33 = arith.constant 0 : index
    %133 = vector.load %arg11[%132, %c0_33] : memref<64x32xf32, #tpu.memory_space<vmem>>, vector<8x32xf32>
    tpu.vector_store %arg11[%132, %c0_33], %129 {strides = array<i32>} : memref<64x32xf32, #tpu.memory_space<vmem>>, vector<8x32xf32>,
    %c2_i32 = arith.constant 2 : i32
    %c7_i32_34 = arith.constant 7 : i32
    %134 = arith.subi %c7_i32_34, %c2_i32 : i32
    %c8_i32_35 = arith.constant 8 : i32
    %135 = arith.muli %c2_i32, %c8_i32_35 : i32
    %136 = tpu.assume_multiple %135, 8 : i32
    %c8_i32_36 = arith.constant 8 : i32
    %137 = arith.muli %134, %c8_i32_36 : i32
    %138 = tpu.assume_multiple %137, 8 : i32
    %139 = tpu.concatenate %100, %129 in 1 : vector<8x32xf32>, vector<8x32xf32> -> vector<8x64xf32>
    %140 = arith.truncf %139 : vector<8x64xf32> to vector<8x64xbf16>
    %c0_37 = arith.constant 0 : index
    %c0_38 = arith.constant 0 : index
    %141 = vector.load %arg2[%c0_37, %c0_38] : memref<64x256xbf16, #tpu.memory_space<vmem>>, vector<64x256xbf16>
    %cst_39 = arith.constant dense<0.000000e+00> : vector<8x256xf32>
    %142 = tpu.matmul %140, %141, %cst_39 {dimension_numbers = #tpu.dot_dimension_numbers<[1], [0], [0], [1], [0, 0, 1, 1], [], []>} : vector<8x64xbf16>, vector<64x256xbf16>, vector<8x256xf32> -> vector<8x256xf32>
    %143 = arith.index_cast %136 : i32 to index
    %c0_40 = arith.constant 0 : index
    %144 = vector.load %arg12[%143, %c0_40] : memref<64x256xf32, #tpu.memory_space<vmem>>, vector<8x128xf32>
    %145 = vector.extract_strided_slice %142 {offsets = [0, 0], sizes = [8, 128], strides = [1, 1]} : vector<8x256xf32> to vector<8x128xf32>
    %146 = arith.addf %144, %145 : vector<8x128xf32>
    %147 = vector.extract_strided_slice %146 {offsets = [0, 0], sizes = [8, 32], strides = [1, 1]} : vector<8x128xf32> to vector<8x32xf32>
    %148 = arith.negf %147 : vector<8x32xf32>
    %149 = math.exp %148 : vector<8x32xf32>
    %cst_41 = arith.constant 1.000000e+00 : f32
    %150 = vector.broadcast %cst_41 : f32 to vector<8x32xf32>
    %151 = arith.addf %150, %149 : vector<8x32xf32>
    %152 = arith.divf %150, %151 : vector<8x32xf32>
    %153 = vector.extract_strided_slice %146 {offsets = [0, 32], sizes = [8, 32], strides = [1, 1]} : vector<8x128xf32> to vector<8x32xf32>
    %154 = arith.negf %153 : vector<8x32xf32>
    %155 = math.exp %154 : vector<8x32xf32>
    %cst_42 = arith.constant 1.000000e+00 : f32
    %156 = vector.broadcast %cst_42 : f32 to vector<8x32xf32>
    %157 = arith.addf %156, %155 : vector<8x32xf32>
    %158 = arith.divf %156, %157 : vector<8x32xf32>
    %159 = vector.extract_strided_slice %146 {offsets = [0, 64], sizes = [8, 32], strides = [1, 1]} : vector<8x128xf32> to vector<8x32xf32>
    %160 = math.tanh %159 : vector<8x32xf32>
    %161 = vector.extract_strided_slice %146 {offsets = [0, 96], sizes = [8, 32], strides = [1, 1]} : vector<8x128xf32> to vector<8x32xf32>
    %162 = arith.negf %161 : vector<8x32xf32>
    %163 = math.exp %162 : vector<8x32xf32>
    %cst_43 = arith.constant 1.000000e+00 : f32
    %164 = vector.broadcast %cst_43 : f32 to vector<8x32xf32>
    %165 = arith.addf %164, %163 : vector<8x32xf32>
    %166 = arith.divf %164, %165 : vector<8x32xf32>
    %167 = arith.mulf %158, %98 : vector<8x32xf32>
    %168 = arith.mulf %152, %160 : vector<8x32xf32>
    %169 = arith.addf %167, %168 : vector<8x32xf32>
    %170 = math.tanh %169 : vector<8x32xf32>
    %171 = arith.mulf %166, %170 : vector<8x32xf32>
    %172 = arith.index_cast %138 : i32 to index
    %c128_44 = arith.constant 128 : index
    %173 = vector.load %arg12[%172, %c128_44] : memref<64x256xf32, #tpu.memory_space<vmem>>, vector<8x128xf32>
    %174 = vector.extract_strided_slice %142 {offsets = [0, 128], sizes = [8, 128], strides = [1, 1]} : vector<8x256xf32> to vector<8x128xf32>
    %175 = arith.addf %173, %174 : vector<8x128xf32>
    %176 = vector.extract_strided_slice %175 {offsets = [0, 0], sizes = [8, 32], strides = [1, 1]} : vector<8x128xf32> to vector<8x32xf32>
    %177 = arith.negf %176 : vector<8x32xf32>
    %178 = math.exp %177 : vector<8x32xf32>
    %cst_45 = arith.constant 1.000000e+00 : f32
    %179 = vector.broadcast %cst_45 : f32 to vector<8x32xf32>
    %180 = arith.addf %179, %178 : vector<8x32xf32>
    %181 = arith.divf %179, %180 : vector<8x32xf32>
    %182 = vector.extract_strided_slice %175 {offsets = [0, 32], sizes = [8, 32], strides = [1, 1]} : vector<8x128xf32> to vector<8x32xf32>
    %183 = arith.negf %182 : vector<8x32xf32>
    %184 = math.exp %183 : vector<8x32xf32>
    %cst_46 = arith.constant 1.000000e+00 : f32
    %185 = vector.broadcast %cst_46 : f32 to vector<8x32xf32>
    %186 = arith.addf %185, %184 : vector<8x32xf32>
    %187 = arith.divf %185, %186 : vector<8x32xf32>
    %188 = vector.extract_strided_slice %175 {offsets = [0, 64], sizes = [8, 32], strides = [1, 1]} : vector<8x128xf32> to vector<8x32xf32>
    %189 = math.tanh %188 : vector<8x32xf32>
    %190 = vector.extract_strided_slice %175 {offsets = [0, 96], sizes = [8, 32], strides = [1, 1]} : vector<8x128xf32> to vector<8x32xf32>
    %191 = arith.negf %190 : vector<8x32xf32>
    %192 = math.exp %191 : vector<8x32xf32>
    %cst_47 = arith.constant 1.000000e+00 : f32
    %193 = vector.broadcast %cst_47 : f32 to vector<8x32xf32>
    %194 = arith.addf %193, %192 : vector<8x32xf32>
    %195 = arith.divf %193, %194 : vector<8x32xf32>
    %196 = arith.mulf %187, %127 : vector<8x32xf32>
    %197 = arith.mulf %181, %189 : vector<8x32xf32>
    %198 = arith.addf %196, %197 : vector<8x32xf32>
    %199 = math.tanh %198 : vector<8x32xf32>
    %200 = arith.mulf %195, %199 : vector<8x32xf32>
    %201 = arith.index_cast %136 : i32 to index
    %c0_48 = arith.constant 0 : index
    %202 = vector.load %arg10[%201, %c0_48] : memref<64x32xf32, #tpu.memory_space<vmem>>, vector<8x32xf32>
    tpu.vector_store %arg10[%201, %c0_48], %171 {strides = array<i32>} : memref<64x32xf32, #tpu.memory_space<vmem>>, vector<8x32xf32>,
    %203 = arith.index_cast %138 : i32 to index
    %c0_49 = arith.constant 0 : index
    %204 = vector.load %arg11[%203, %c0_49] : memref<64x32xf32, #tpu.memory_space<vmem>>, vector<8x32xf32>
    tpu.vector_store %arg11[%203, %c0_49], %200 {strides = array<i32>} : memref<64x32xf32, #tpu.memory_space<vmem>>, vector<8x32xf32>,
    %c3_i32 = arith.constant 3 : i32
    %c7_i32_50 = arith.constant 7 : i32
    %205 = arith.subi %c7_i32_50, %c3_i32 : i32
    %c8_i32_51 = arith.constant 8 : i32
    %206 = arith.muli %c3_i32, %c8_i32_51 : i32
    %207 = tpu.assume_multiple %206, 8 : i32
    %c8_i32_52 = arith.constant 8 : i32
    %208 = arith.muli %205, %c8_i32_52 : i32
    %209 = tpu.assume_multiple %208, 8 : i32
    %210 = tpu.concatenate %171, %200 in 1 : vector<8x32xf32>, vector<8x32xf32> -> vector<8x64xf32>
    %211 = arith.truncf %210 : vector<8x64xf32> to vector<8x64xbf16>
    %c0_53 = arith.constant 0 : index
    %c0_54 = arith.constant 0 : index
    %212 = vector.load %arg2[%c0_53, %c0_54] : memref<64x256xbf16, #tpu.memory_space<vmem>>, vector<64x256xbf16>
    %cst_55 = arith.constant dense<0.000000e+00> : vector<8x256xf32>
    %213 = tpu.matmul %211, %212, %cst_55 {dimension_numbers = #tpu.dot_dimension_numbers<[1], [0], [0], [1], [0, 0, 1, 1], [], []>} : vector<8x64xbf16>, vector<64x256xbf16>, vector<8x256xf32> -> vector<8x256xf32>
    %214 = arith.index_cast %207 : i32 to index
    %c0_56 = arith.constant 0 : index
    %215 = vector.load %arg12[%214, %c0_56] : memref<64x256xf32, #tpu.memory_space<vmem>>, vector<8x128xf32>
    %216 = vector.extract_strided_slice %213 {offsets = [0, 0], sizes = [8, 128], strides = [1, 1]} : vector<8x256xf32> to vector<8x128xf32>
    %217 = arith.addf %215, %216 : vector<8x128xf32>
    %218 = vector.extract_strided_slice %217 {offsets = [0, 0], sizes = [8, 32], strides = [1, 1]} : vector<8x128xf32> to vector<8x32xf32>
    %219 = arith.negf %218 : vector<8x32xf32>
    %220 = math.exp %219 : vector<8x32xf32>
    %cst_57 = arith.constant 1.000000e+00 : f32
    %221 = vector.broadcast %cst_57 : f32 to vector<8x32xf32>
    %222 = arith.addf %221, %220 : vector<8x32xf32>
    %223 = arith.divf %221, %222 : vector<8x32xf32>
    %224 = vector.extract_strided_slice %217 {offsets = [0, 32], sizes = [8, 32], strides = [1, 1]} : vector<8x128xf32> to vector<8x32xf32>
    %225 = arith.negf %224 : vector<8x32xf32>
    %226 = math.exp %225 : vector<8x32xf32>
    %cst_58 = arith.constant 1.000000e+00 : f32
    %227 = vector.broadcast %cst_58 : f32 to vector<8x32xf32>
    %228 = arith.addf %227, %226 : vector<8x32xf32>
    %229 = arith.divf %227, %228 : vector<8x32xf32>
    %230 = vector.extract_strided_slice %217 {offsets = [0, 64], sizes = [8, 32], strides = [1, 1]} : vector<8x128xf32> to vector<8x32xf32>
    %231 = math.tanh %230 : vector<8x32xf32>
    %232 = vector.extract_strided_slice %217 {offsets = [0, 96], sizes = [8, 32], strides = [1, 1]} : vector<8x128xf32> to vector<8x32xf32>
    %233 = arith.negf %232 : vector<8x32xf32>
    %234 = math.exp %233 : vector<8x32xf32>
    %cst_59 = arith.constant 1.000000e+00 : f32
    %235 = vector.broadcast %cst_59 : f32 to vector<8x32xf32>
    %236 = arith.addf %235, %234 : vector<8x32xf32>
    %237 = arith.divf %235, %236 : vector<8x32xf32>
    %238 = arith.mulf %229, %169 : vector<8x32xf32>
    %239 = arith.mulf %223, %231 : vector<8x32xf32>
    %240 = arith.addf %238, %239 : vector<8x32xf32>
    %241 = math.tanh %240 : vector<8x32xf32>
    %242 = arith.mulf %237, %241 : vector<8x32xf32>
    %243 = arith.index_cast %209 : i32 to index
    %c128_60 = arith.constant 128 : index
    %244 = vector.load %arg12[%243, %c128_60] : memref<64x256xf32, #tpu.memory_space<vmem>>, vector<8x128xf32>
    %245 = vector.extract_strided_slice %213 {offsets = [0, 128], sizes = [8, 128], strides = [1, 1]} : vector<8x256xf32> to vector<8x128xf32>
    %246 = arith.addf %244, %245 : vector<8x128xf32>
    %247 = vector.extract_strided_slice %246 {offsets = [0, 0], sizes = [8, 32], strides = [1, 1]} : vector<8x128xf32> to vector<8x32xf32>
    %248 = arith.negf %247 : vector<8x32xf32>
    %249 = math.exp %248 : vector<8x32xf32>
    %cst_61 = arith.constant 1.000000e+00 : f32
    %250 = vector.broadcast %cst_61 : f32 to vector<8x32xf32>
    %251 = arith.addf %250, %249 : vector<8x32xf32>
    %252 = arith.divf %250, %251 : vector<8x32xf32>
    %253 = vector.extract_strided_slice %246 {offsets = [0, 32], sizes = [8, 32], strides = [1, 1]} : vector<8x128xf32> to vector<8x32xf32>
    %254 = arith.negf %253 : vector<8x32xf32>
    %255 = math.exp %254 : vector<8x32xf32>
    %cst_62 = arith.constant 1.000000e+00 : f32
    %256 = vector.broadcast %cst_62 : f32 to vector<8x32xf32>
    %257 = arith.addf %256, %255 : vector<8x32xf32>
    %258 = arith.divf %256, %257 : vector<8x32xf32>
    %259 = vector.extract_strided_slice %246 {offsets = [0, 64], sizes = [8, 32], strides = [1, 1]} : vector<8x128xf32> to vector<8x32xf32>
    %260 = math.tanh %259 : vector<8x32xf32>
    %261 = vector.extract_strided_slice %246 {offsets = [0, 96], sizes = [8, 32], strides = [1, 1]} : vector<8x128xf32> to vector<8x32xf32>
    %262 = arith.negf %261 : vector<8x32xf32>
    %263 = math.exp %262 : vector<8x32xf32>
    %cst_63 = arith.constant 1.000000e+00 : f32
    %264 = vector.broadcast %cst_63 : f32 to vector<8x32xf32>
    %265 = arith.addf %264, %263 : vector<8x32xf32>
    %266 = arith.divf %264, %265 : vector<8x32xf32>
    %267 = arith.mulf %258, %198 : vector<8x32xf32>
    %268 = arith.mulf %252, %260 : vector<8x32xf32>
    %269 = arith.addf %267, %268 : vector<8x32xf32>
    %270 = math.tanh %269 : vector<8x32xf32>
    %271 = arith.mulf %266, %270 : vector<8x32xf32>
    %272 = arith.index_cast %207 : i32 to index
    %c0_64 = arith.constant 0 : index
    %273 = vector.load %arg10[%272, %c0_64] : memref<64x32xf32, #tpu.memory_space<vmem>>, vector<8x32xf32>
    tpu.vector_store %arg10[%272, %c0_64], %242 {strides = array<i32>} : memref<64x32xf32, #tpu.memory_space<vmem>>, vector<8x32xf32>,
    %274 = arith.index_cast %209 : i32 to index
    %c0_65 = arith.constant 0 : index
    %275 = vector.load %arg11[%274, %c0_65] : memref<64x32xf32, #tpu.memory_space<vmem>>, vector<8x32xf32>
    tpu.vector_store %arg11[%274, %c0_65], %271 {strides = array<i32>} : memref<64x32xf32, #tpu.memory_space<vmem>>, vector<8x32xf32>,
    %c4_i32 = arith.constant 4 : i32
    %c7_i32_66 = arith.constant 7 : i32
    %276 = arith.subi %c7_i32_66, %c4_i32 : i32
    %c8_i32_67 = arith.constant 8 : i32
    %277 = arith.muli %c4_i32, %c8_i32_67 : i32
    %278 = tpu.assume_multiple %277, 8 : i32
    %c8_i32_68 = arith.constant 8 : i32
    %279 = arith.muli %276, %c8_i32_68 : i32
    %280 = tpu.assume_multiple %279, 8 : i32
    %281 = tpu.concatenate %242, %271 in 1 : vector<8x32xf32>, vector<8x32xf32> -> vector<8x64xf32>
    %282 = arith.truncf %281 : vector<8x64xf32> to vector<8x64xbf16>
    %c0_69 = arith.constant 0 : index
    %c0_70 = arith.constant 0 : index
    %283 = vector.load %arg2[%c0_69, %c0_70] : memref<64x256xbf16, #tpu.memory_space<vmem>>, vector<64x256xbf16>
    %cst_71 = arith.constant dense<0.000000e+00> : vector<8x256xf32>
    %284 = tpu.matmul %282, %283, %cst_71 {dimension_numbers = #tpu.dot_dimension_numbers<[1], [0], [0], [1], [0, 0, 1, 1], [], []>} : vector<8x64xbf16>, vector<64x256xbf16>, vector<8x256xf32> -> vector<8x256xf32>
    %285 = arith.index_cast %278 : i32 to index
    %c0_72 = arith.constant 0 : index
    %286 = vector.load %arg12[%285, %c0_72] : memref<64x256xf32, #tpu.memory_space<vmem>>, vector<8x128xf32>
    %287 = vector.extract_strided_slice %284 {offsets = [0, 0], sizes = [8, 128], strides = [1, 1]} : vector<8x256xf32> to vector<8x128xf32>
    %288 = arith.addf %286, %287 : vector<8x128xf32>
    %289 = vector.extract_strided_slice %288 {offsets = [0, 0], sizes = [8, 32], strides = [1, 1]} : vector<8x128xf32> to vector<8x32xf32>
    %290 = arith.negf %289 : vector<8x32xf32>
    %291 = math.exp %290 : vector<8x32xf32>
    %cst_73 = arith.constant 1.000000e+00 : f32
    %292 = vector.broadcast %cst_73 : f32 to vector<8x32xf32>
    %293 = arith.addf %292, %291 : vector<8x32xf32>
    %294 = arith.divf %292, %293 : vector<8x32xf32>
    %295 = vector.extract_strided_slice %288 {offsets = [0, 32], sizes = [8, 32], strides = [1, 1]} : vector<8x128xf32> to vector<8x32xf32>
    %296 = arith.negf %295 : vector<8x32xf32>
    %297 = math.exp %296 : vector<8x32xf32>
    %cst_74 = arith.constant 1.000000e+00 : f32
    %298 = vector.broadcast %cst_74 : f32 to vector<8x32xf32>
    %299 = arith.addf %298, %297 : vector<8x32xf32>
    %300 = arith.divf %298, %299 : vector<8x32xf32>
    %301 = vector.extract_strided_slice %288 {offsets = [0, 64], sizes = [8, 32], strides = [1, 1]} : vector<8x128xf32> to vector<8x32xf32>
    %302 = math.tanh %301 : vector<8x32xf32>
    %303 = vector.extract_strided_slice %288 {offsets = [0, 96], sizes = [8, 32], strides = [1, 1]} : vector<8x128xf32> to vector<8x32xf32>
    %304 = arith.negf %303 : vector<8x32xf32>
    %305 = math.exp %304 : vector<8x32xf32>
    %cst_75 = arith.constant 1.000000e+00 : f32
    %306 = vector.broadcast %cst_75 : f32 to vector<8x32xf32>
    %307 = arith.addf %306, %305 : vector<8x32xf32>
    %308 = arith.divf %306, %307 : vector<8x32xf32>
    %309 = arith.mulf %300, %240 : vector<8x32xf32>
    %310 = arith.mulf %294, %302 : vector<8x32xf32>
    %311 = arith.addf %309, %310 : vector<8x32xf32>
    %312 = math.tanh %311 : vector<8x32xf32>
    %313 = arith.mulf %308, %312 : vector<8x32xf32>
    %314 = arith.index_cast %280 : i32 to index
    %c128_76 = arith.constant 128 : index
    %315 = vector.load %arg12[%314, %c128_76] : memref<64x256xf32, #tpu.memory_space<vmem>>, vector<8x128xf32>
    %316 = vector.extract_strided_slice %284 {offsets = [0, 128], sizes = [8, 128], strides = [1, 1]} : vector<8x256xf32> to vector<8x128xf32>
    %317 = arith.addf %315, %316 : vector<8x128xf32>
    %318 = vector.extract_strided_slice %317 {offsets = [0, 0], sizes = [8, 32], strides = [1, 1]} : vector<8x128xf32> to vector<8x32xf32>
    %319 = arith.negf %318 : vector<8x32xf32>
    %320 = math.exp %319 : vector<8x32xf32>
    %cst_77 = arith.constant 1.000000e+00 : f32
    %321 = vector.broadcast %cst_77 : f32 to vector<8x32xf32>
    %322 = arith.addf %321, %320 : vector<8x32xf32>
    %323 = arith.divf %321, %322 : vector<8x32xf32>
    %324 = vector.extract_strided_slice %317 {offsets = [0, 32], sizes = [8, 32], strides = [1, 1]} : vector<8x128xf32> to vector<8x32xf32>
    %325 = arith.negf %324 : vector<8x32xf32>
    %326 = math.exp %325 : vector<8x32xf32>
    %cst_78 = arith.constant 1.000000e+00 : f32
    %327 = vector.broadcast %cst_78 : f32 to vector<8x32xf32>
    %328 = arith.addf %327, %326 : vector<8x32xf32>
    %329 = arith.divf %327, %328 : vector<8x32xf32>
    %330 = vector.extract_strided_slice %317 {offsets = [0, 64], sizes = [8, 32], strides = [1, 1]} : vector<8x128xf32> to vector<8x32xf32>
    %331 = math.tanh %330 : vector<8x32xf32>
    %332 = vector.extract_strided_slice %317 {offsets = [0, 96], sizes = [8, 32], strides = [1, 1]} : vector<8x128xf32> to vector<8x32xf32>
    %333 = arith.negf %332 : vector<8x32xf32>
    %334 = math.exp %333 : vector<8x32xf32>
    %cst_79 = arith.constant 1.000000e+00 : f32
    %335 = vector.broadcast %cst_79 : f32 to vector<8x32xf32>
    %336 = arith.addf %335, %334 : vector<8x32xf32>
    %337 = arith.divf %335, %336 : vector<8x32xf32>
    %338 = arith.mulf %329, %269 : vector<8x32xf32>
    %339 = arith.mulf %323, %331 : vector<8x32xf32>
    %340 = arith.addf %338, %339 : vector<8x32xf32>
    %341 = math.tanh %340 : vector<8x32xf32>
    %342 = arith.mulf %337, %341 : vector<8x32xf32>
    %343 = arith.index_cast %278 : i32 to index
    %c0_80 = arith.constant 0 : index
    %344 = vector.load %arg10[%343, %c0_80] : memref<64x32xf32, #tpu.memory_space<vmem>>, vector<8x32xf32>
    tpu.vector_store %arg10[%343, %c0_80], %313 {strides = array<i32>} : memref<64x32xf32, #tpu.memory_space<vmem>>, vector<8x32xf32>,
    %345 = arith.index_cast %280 : i32 to index
    %c0_81 = arith.constant 0 : index
    %346 = vector.load %arg11[%345, %c0_81] : memref<64x32xf32, #tpu.memory_space<vmem>>, vector<8x32xf32>
    tpu.vector_store %arg11[%345, %c0_81], %342 {strides = array<i32>} : memref<64x32xf32, #tpu.memory_space<vmem>>, vector<8x32xf32>,
    %c5_i32 = arith.constant 5 : i32
    %c7_i32_82 = arith.constant 7 : i32
    %347 = arith.subi %c7_i32_82, %c5_i32 : i32
    %c8_i32_83 = arith.constant 8 : i32
    %348 = arith.muli %c5_i32, %c8_i32_83 : i32
    %349 = tpu.assume_multiple %348, 8 : i32
    %c8_i32_84 = arith.constant 8 : i32
    %350 = arith.muli %347, %c8_i32_84 : i32
    %351 = tpu.assume_multiple %350, 8 : i32
    %352 = tpu.concatenate %313, %342 in 1 : vector<8x32xf32>, vector<8x32xf32> -> vector<8x64xf32>
    %353 = arith.truncf %352 : vector<8x64xf32> to vector<8x64xbf16>
    %c0_85 = arith.constant 0 : index
    %c0_86 = arith.constant 0 : index
    %354 = vector.load %arg2[%c0_85, %c0_86] : memref<64x256xbf16, #tpu.memory_space<vmem>>, vector<64x256xbf16>
    %cst_87 = arith.constant dense<0.000000e+00> : vector<8x256xf32>
    %355 = tpu.matmul %353, %354, %cst_87 {dimension_numbers = #tpu.dot_dimension_numbers<[1], [0], [0], [1], [0, 0, 1, 1], [], []>} : vector<8x64xbf16>, vector<64x256xbf16>, vector<8x256xf32> -> vector<8x256xf32>
    %356 = arith.index_cast %349 : i32 to index
    %c0_88 = arith.constant 0 : index
    %357 = vector.load %arg12[%356, %c0_88] : memref<64x256xf32, #tpu.memory_space<vmem>>, vector<8x128xf32>
    %358 = vector.extract_strided_slice %355 {offsets = [0, 0], sizes = [8, 128], strides = [1, 1]} : vector<8x256xf32> to vector<8x128xf32>
    %359 = arith.addf %357, %358 : vector<8x128xf32>
    %360 = vector.extract_strided_slice %359 {offsets = [0, 0], sizes = [8, 32], strides = [1, 1]} : vector<8x128xf32> to vector<8x32xf32>
    %361 = arith.negf %360 : vector<8x32xf32>
    %362 = math.exp %361 : vector<8x32xf32>
    %cst_89 = arith.constant 1.000000e+00 : f32
    %363 = vector.broadcast %cst_89 : f32 to vector<8x32xf32>
    %364 = arith.addf %363, %362 : vector<8x32xf32>
    %365 = arith.divf %363, %364 : vector<8x32xf32>
    %366 = vector.extract_strided_slice %359 {offsets = [0, 32], sizes = [8, 32], strides = [1, 1]} : vector<8x128xf32> to vector<8x32xf32>
    %367 = arith.negf %366 : vector<8x32xf32>
    %368 = math.exp %367 : vector<8x32xf32>
    %cst_90 = arith.constant 1.000000e+00 : f32
    %369 = vector.broadcast %cst_90 : f32 to vector<8x32xf32>
    %370 = arith.addf %369, %368 : vector<8x32xf32>
    %371 = arith.divf %369, %370 : vector<8x32xf32>
    %372 = vector.extract_strided_slice %359 {offsets = [0, 64], sizes = [8, 32], strides = [1, 1]} : vector<8x128xf32> to vector<8x32xf32>
    %373 = math.tanh %372 : vector<8x32xf32>
    %374 = vector.extract_strided_slice %359 {offsets = [0, 96], sizes = [8, 32], strides = [1, 1]} : vector<8x128xf32> to vector<8x32xf32>
    %375 = arith.negf %374 : vector<8x32xf32>
    %376 = math.exp %375 : vector<8x32xf32>
    %cst_91 = arith.constant 1.000000e+00 : f32
    %377 = vector.broadcast %cst_91 : f32 to vector<8x32xf32>
    %378 = arith.addf %377, %376 : vector<8x32xf32>
    %379 = arith.divf %377, %378 : vector<8x32xf32>
    %380 = arith.mulf %371, %311 : vector<8x32xf32>
    %381 = arith.mulf %365, %373 : vector<8x32xf32>
    %382 = arith.addf %380, %381 : vector<8x32xf32>
    %383 = math.tanh %382 : vector<8x32xf32>
    %384 = arith.mulf %379, %383 : vector<8x32xf32>
    %385 = arith.index_cast %351 : i32 to index
    %c128_92 = arith.constant 128 : index
    %386 = vector.load %arg12[%385, %c128_92] : memref<64x256xf32, #tpu.memory_space<vmem>>, vector<8x128xf32>
    %387 = vector.extract_strided_slice %355 {offsets = [0, 128], sizes = [8, 128], strides = [1, 1]} : vector<8x256xf32> to vector<8x128xf32>
    %388 = arith.addf %386, %387 : vector<8x128xf32>
    %389 = vector.extract_strided_slice %388 {offsets = [0, 0], sizes = [8, 32], strides = [1, 1]} : vector<8x128xf32> to vector<8x32xf32>
    %390 = arith.negf %389 : vector<8x32xf32>
    %391 = math.exp %390 : vector<8x32xf32>
    %cst_93 = arith.constant 1.000000e+00 : f32
    %392 = vector.broadcast %cst_93 : f32 to vector<8x32xf32>
    %393 = arith.addf %392, %391 : vector<8x32xf32>
    %394 = arith.divf %392, %393 : vector<8x32xf32>
    %395 = vector.extract_strided_slice %388 {offsets = [0, 32], sizes = [8, 32], strides = [1, 1]} : vector<8x128xf32> to vector<8x32xf32>
    %396 = arith.negf %395 : vector<8x32xf32>
    %397 = math.exp %396 : vector<8x32xf32>
    %cst_94 = arith.constant 1.000000e+00 : f32
    %398 = vector.broadcast %cst_94 : f32 to vector<8x32xf32>
    %399 = arith.addf %398, %397 : vector<8x32xf32>
    %400 = arith.divf %398, %399 : vector<8x32xf32>
    %401 = vector.extract_strided_slice %388 {offsets = [0, 64], sizes = [8, 32], strides = [1, 1]} : vector<8x128xf32> to vector<8x32xf32>
    %402 = math.tanh %401 : vector<8x32xf32>
    %403 = vector.extract_strided_slice %388 {offsets = [0, 96], sizes = [8, 32], strides = [1, 1]} : vector<8x128xf32> to vector<8x32xf32>
    %404 = arith.negf %403 : vector<8x32xf32>
    %405 = math.exp %404 : vector<8x32xf32>
    %cst_95 = arith.constant 1.000000e+00 : f32
    %406 = vector.broadcast %cst_95 : f32 to vector<8x32xf32>
    %407 = arith.addf %406, %405 : vector<8x32xf32>
    %408 = arith.divf %406, %407 : vector<8x32xf32>
    %409 = arith.mulf %400, %340 : vector<8x32xf32>
    %410 = arith.mulf %394, %402 : vector<8x32xf32>
    %411 = arith.addf %409, %410 : vector<8x32xf32>
    %412 = math.tanh %411 : vector<8x32xf32>
    %413 = arith.mulf %408, %412 : vector<8x32xf32>
    %414 = arith.index_cast %349 : i32 to index
    %c0_96 = arith.constant 0 : index
    %415 = vector.load %arg10[%414, %c0_96] : memref<64x32xf32, #tpu.memory_space<vmem>>, vector<8x32xf32>
    tpu.vector_store %arg10[%414, %c0_96], %384 {strides = array<i32>} : memref<64x32xf32, #tpu.memory_space<vmem>>, vector<8x32xf32>,
    %416 = arith.index_cast %351 : i32 to index
    %c0_97 = arith.constant 0 : index
    %417 = vector.load %arg11[%416, %c0_97] : memref<64x32xf32, #tpu.memory_space<vmem>>, vector<8x32xf32>
    tpu.vector_store %arg11[%416, %c0_97], %413 {strides = array<i32>} : memref<64x32xf32, #tpu.memory_space<vmem>>, vector<8x32xf32>,
    %c6_i32 = arith.constant 6 : i32
    %c7_i32_98 = arith.constant 7 : i32
    %418 = arith.subi %c7_i32_98, %c6_i32 : i32
    %c8_i32_99 = arith.constant 8 : i32
    %419 = arith.muli %c6_i32, %c8_i32_99 : i32
    %420 = tpu.assume_multiple %419, 8 : i32
    %c8_i32_100 = arith.constant 8 : i32
    %421 = arith.muli %418, %c8_i32_100 : i32
    %422 = tpu.assume_multiple %421, 8 : i32
    %423 = tpu.concatenate %384, %413 in 1 : vector<8x32xf32>, vector<8x32xf32> -> vector<8x64xf32>
    %424 = arith.truncf %423 : vector<8x64xf32> to vector<8x64xbf16>
    %c0_101 = arith.constant 0 : index
    %c0_102 = arith.constant 0 : index
    %425 = vector.load %arg2[%c0_101, %c0_102] : memref<64x256xbf16, #tpu.memory_space<vmem>>, vector<64x256xbf16>
    %cst_103 = arith.constant dense<0.000000e+00> : vector<8x256xf32>
    %426 = tpu.matmul %424, %425, %cst_103 {dimension_numbers = #tpu.dot_dimension_numbers<[1], [0], [0], [1], [0, 0, 1, 1], [], []>} : vector<8x64xbf16>, vector<64x256xbf16>, vector<8x256xf32> -> vector<8x256xf32>
    %427 = arith.index_cast %420 : i32 to index
    %c0_104 = arith.constant 0 : index
    %428 = vector.load %arg12[%427, %c0_104] : memref<64x256xf32, #tpu.memory_space<vmem>>, vector<8x128xf32>
    %429 = vector.extract_strided_slice %426 {offsets = [0, 0], sizes = [8, 128], strides = [1, 1]} : vector<8x256xf32> to vector<8x128xf32>
    %430 = arith.addf %428, %429 : vector<8x128xf32>
    %431 = vector.extract_strided_slice %430 {offsets = [0, 0], sizes = [8, 32], strides = [1, 1]} : vector<8x128xf32> to vector<8x32xf32>
    %432 = arith.negf %431 : vector<8x32xf32>
    %433 = math.exp %432 : vector<8x32xf32>
    %cst_105 = arith.constant 1.000000e+00 : f32
    %434 = vector.broadcast %cst_105 : f32 to vector<8x32xf32>
    %435 = arith.addf %434, %433 : vector<8x32xf32>
    %436 = arith.divf %434, %435 : vector<8x32xf32>
    %437 = vector.extract_strided_slice %430 {offsets = [0, 32], sizes = [8, 32], strides = [1, 1]} : vector<8x128xf32> to vector<8x32xf32>
    %438 = arith.negf %437 : vector<8x32xf32>
    %439 = math.exp %438 : vector<8x32xf32>
    %cst_106 = arith.constant 1.000000e+00 : f32
    %440 = vector.broadcast %cst_106 : f32 to vector<8x32xf32>
    %441 = arith.addf %440, %439 : vector<8x32xf32>
    %442 = arith.divf %440, %441 : vector<8x32xf32>
    %443 = vector.extract_strided_slice %430 {offsets = [0, 64], sizes = [8, 32], strides = [1, 1]} : vector<8x128xf32> to vector<8x32xf32>
    %444 = math.tanh %443 : vector<8x32xf32>
    %445 = vector.extract_strided_slice %430 {offsets = [0, 96], sizes = [8, 32], strides = [1, 1]} : vector<8x128xf32> to vector<8x32xf32>
    %446 = arith.negf %445 : vector<8x32xf32>
    %447 = math.exp %446 : vector<8x32xf32>
    %cst_107 = arith.constant 1.000000e+00 : f32
    %448 = vector.broadcast %cst_107 : f32 to vector<8x32xf32>
    %449 = arith.addf %448, %447 : vector<8x32xf32>
    %450 = arith.divf %448, %449 : vector<8x32xf32>
    %451 = arith.mulf %442, %382 : vector<8x32xf32>
    %452 = arith.mulf %436, %444 : vector<8x32xf32>
    %453 = arith.addf %451, %452 : vector<8x32xf32>
    %454 = math.tanh %453 : vector<8x32xf32>
    %455 = arith.mulf %450, %454 : vector<8x32xf32>
    %456 = arith.index_cast %422 : i32 to index
    %c128_108 = arith.constant 128 : index
    %457 = vector.load %arg12[%456, %c128_108] : memref<64x256xf32, #tpu.memory_space<vmem>>, vector<8x128xf32>
    %458 = vector.extract_strided_slice %426 {offsets = [0, 128], sizes = [8, 128], strides = [1, 1]} : vector<8x256xf32> to vector<8x128xf32>
    %459 = arith.addf %457, %458 : vector<8x128xf32>
    %460 = vector.extract_strided_slice %459 {offsets = [0, 0], sizes = [8, 32], strides = [1, 1]} : vector<8x128xf32> to vector<8x32xf32>
    %461 = arith.negf %460 : vector<8x32xf32>
    %462 = math.exp %461 : vector<8x32xf32>
    %cst_109 = arith.constant 1.000000e+00 : f32
    %463 = vector.broadcast %cst_109 : f32 to vector<8x32xf32>
    %464 = arith.addf %463, %462 : vector<8x32xf32>
    %465 = arith.divf %463, %464 : vector<8x32xf32>
    %466 = vector.extract_strided_slice %459 {offsets = [0, 32], sizes = [8, 32], strides = [1, 1]} : vector<8x128xf32> to vector<8x32xf32>
    %467 = arith.negf %466 : vector<8x32xf32>
    %468 = math.exp %467 : vector<8x32xf32>
    %cst_110 = arith.constant 1.000000e+00 : f32
    %469 = vector.broadcast %cst_110 : f32 to vector<8x32xf32>
    %470 = arith.addf %469, %468 : vector<8x32xf32>
    %471 = arith.divf %469, %470 : vector<8x32xf32>
    %472 = vector.extract_strided_slice %459 {offsets = [0, 64], sizes = [8, 32], strides = [1, 1]} : vector<8x128xf32> to vector<8x32xf32>
    %473 = math.tanh %472 : vector<8x32xf32>
    %474 = vector.extract_strided_slice %459 {offsets = [0, 96], sizes = [8, 32], strides = [1, 1]} : vector<8x128xf32> to vector<8x32xf32>
    %475 = arith.negf %474 : vector<8x32xf32>
    %476 = math.exp %475 : vector<8x32xf32>
    %cst_111 = arith.constant 1.000000e+00 : f32
    %477 = vector.broadcast %cst_111 : f32 to vector<8x32xf32>
    %478 = arith.addf %477, %476 : vector<8x32xf32>
    %479 = arith.divf %477, %478 : vector<8x32xf32>
    %480 = arith.mulf %471, %411 : vector<8x32xf32>
    %481 = arith.mulf %465, %473 : vector<8x32xf32>
    %482 = arith.addf %480, %481 : vector<8x32xf32>
    %483 = math.tanh %482 : vector<8x32xf32>
    %484 = arith.mulf %479, %483 : vector<8x32xf32>
    %485 = arith.index_cast %420 : i32 to index
    %c0_112 = arith.constant 0 : index
    %486 = vector.load %arg10[%485, %c0_112] : memref<64x32xf32, #tpu.memory_space<vmem>>, vector<8x32xf32>
    tpu.vector_store %arg10[%485, %c0_112], %455 {strides = array<i32>} : memref<64x32xf32, #tpu.memory_space<vmem>>, vector<8x32xf32>,
    %487 = arith.index_cast %422 : i32 to index
    %c0_113 = arith.constant 0 : index
    %488 = vector.load %arg11[%487, %c0_113] : memref<64x32xf32, #tpu.memory_space<vmem>>, vector<8x32xf32>
    tpu.vector_store %arg11[%487, %c0_113], %484 {strides = array<i32>} : memref<64x32xf32, #tpu.memory_space<vmem>>, vector<8x32xf32>,
    %c7_i32_114 = arith.constant 7 : i32
    %c7_i32_115 = arith.constant 7 : i32
    %489 = arith.subi %c7_i32_115, %c7_i32_114 : i32
    %c8_i32_116 = arith.constant 8 : i32
    %490 = arith.muli %c7_i32_114, %c8_i32_116 : i32
    %491 = tpu.assume_multiple %490, 8 : i32
    %c8_i32_117 = arith.constant 8 : i32
    %492 = arith.muli %489, %c8_i32_117 : i32
    %493 = tpu.assume_multiple %492, 8 : i32
    %494 = tpu.concatenate %455, %484 in 1 : vector<8x32xf32>, vector<8x32xf32> -> vector<8x64xf32>
    %495 = arith.truncf %494 : vector<8x64xf32> to vector<8x64xbf16>
    %c0_118 = arith.constant 0 : index
    %c0_119 = arith.constant 0 : index
    %496 = vector.load %arg2[%c0_118, %c0_119] : memref<64x256xbf16, #tpu.memory_space<vmem>>, vector<64x256xbf16>
    %cst_120 = arith.constant dense<0.000000e+00> : vector<8x256xf32>
    %497 = tpu.matmul %495, %496, %cst_120 {dimension_numbers = #tpu.dot_dimension_numbers<[1], [0], [0], [1], [0, 0, 1, 1], [], []>} : vector<8x64xbf16>, vector<64x256xbf16>, vector<8x256xf32> -> vector<8x256xf32>
    %498 = arith.index_cast %491 : i32 to index
    %c0_121 = arith.constant 0 : index
    %499 = vector.load %arg12[%498, %c0_121] : memref<64x256xf32, #tpu.memory_space<vmem>>, vector<8x128xf32>
    %500 = vector.extract_strided_slice %497 {offsets = [0, 0], sizes = [8, 128], strides = [1, 1]} : vector<8x256xf32> to vector<8x128xf32>
    %501 = arith.addf %499, %500 : vector<8x128xf32>
    %502 = vector.extract_strided_slice %501 {offsets = [0, 0], sizes = [8, 32], strides = [1, 1]} : vector<8x128xf32> to vector<8x32xf32>
    %503 = arith.negf %502 : vector<8x32xf32>
    %504 = math.exp %503 : vector<8x32xf32>
    %cst_122 = arith.constant 1.000000e+00 : f32
    %505 = vector.broadcast %cst_122 : f32 to vector<8x32xf32>
    %506 = arith.addf %505, %504 : vector<8x32xf32>
    %507 = arith.divf %505, %506 : vector<8x32xf32>
    %508 = vector.extract_strided_slice %501 {offsets = [0, 32], sizes = [8, 32], strides = [1, 1]} : vector<8x128xf32> to vector<8x32xf32>
    %509 = arith.negf %508 : vector<8x32xf32>
    %510 = math.exp %509 : vector<8x32xf32>
    %cst_123 = arith.constant 1.000000e+00 : f32
    %511 = vector.broadcast %cst_123 : f32 to vector<8x32xf32>
    %512 = arith.addf %511, %510 : vector<8x32xf32>
    %513 = arith.divf %511, %512 : vector<8x32xf32>
    %514 = vector.extract_strided_slice %501 {offsets = [0, 64], sizes = [8, 32], strides = [1, 1]} : vector<8x128xf32> to vector<8x32xf32>
    %515 = math.tanh %514 : vector<8x32xf32>
    %516 = vector.extract_strided_slice %501 {offsets = [0, 96], sizes = [8, 32], strides = [1, 1]} : vector<8x128xf32> to vector<8x32xf32>
    %517 = arith.negf %516 : vector<8x32xf32>
    %518 = math.exp %517 : vector<8x32xf32>
    %cst_124 = arith.constant 1.000000e+00 : f32
    %519 = vector.broadcast %cst_124 : f32 to vector<8x32xf32>
    %520 = arith.addf %519, %518 : vector<8x32xf32>
    %521 = arith.divf %519, %520 : vector<8x32xf32>
    %522 = arith.mulf %513, %453 : vector<8x32xf32>
    %523 = arith.mulf %507, %515 : vector<8x32xf32>
    %524 = arith.addf %522, %523 : vector<8x32xf32>
    %525 = math.tanh %524 : vector<8x32xf32>
    %526 = arith.mulf %521, %525 : vector<8x32xf32>
    %527 = arith.index_cast %493 : i32 to index
    %c128_125 = arith.constant 128 : index
    %528 = vector.load %arg12[%527, %c128_125] : memref<64x256xf32, #tpu.memory_space<vmem>>, vector<8x128xf32>
    %529 = vector.extract_strided_slice %497 {offsets = [0, 128], sizes = [8, 128], strides = [1, 1]} : vector<8x256xf32> to vector<8x128xf32>
    %530 = arith.addf %528, %529 : vector<8x128xf32>
    %531 = vector.extract_strided_slice %530 {offsets = [0, 0], sizes = [8, 32], strides = [1, 1]} : vector<8x128xf32> to vector<8x32xf32>
    %532 = arith.negf %531 : vector<8x32xf32>
    %533 = math.exp %532 : vector<8x32xf32>
    %cst_126 = arith.constant 1.000000e+00 : f32
    %534 = vector.broadcast %cst_126 : f32 to vector<8x32xf32>
    %535 = arith.addf %534, %533 : vector<8x32xf32>
    %536 = arith.divf %534, %535 : vector<8x32xf32>
    %537 = vector.extract_strided_slice %530 {offsets = [0, 32], sizes = [8, 32], strides = [1, 1]} : vector<8x128xf32> to vector<8x32xf32>
    %538 = arith.negf %537 : vector<8x32xf32>
    %539 = math.exp %538 : vector<8x32xf32>
    %cst_127 = arith.constant 1.000000e+00 : f32
    %540 = vector.broadcast %cst_127 : f32 to vector<8x32xf32>
    %541 = arith.addf %540, %539 : vector<8x32xf32>
    %542 = arith.divf %540, %541 : vector<8x32xf32>
    %543 = vector.extract_strided_slice %530 {offsets = [0, 64], sizes = [8, 32], strides = [1, 1]} : vector<8x128xf32> to vector<8x32xf32>
    %544 = math.tanh %543 : vector<8x32xf32>
    %545 = vector.extract_strided_slice %530 {offsets = [0, 96], sizes = [8, 32], strides = [1, 1]} : vector<8x128xf32> to vector<8x32xf32>
    %546 = arith.negf %545 : vector<8x32xf32>
    %547 = math.exp %546 : vector<8x32xf32>
    %cst_128 = arith.constant 1.000000e+00 : f32
    %548 = vector.broadcast %cst_128 : f32 to vector<8x32xf32>
    %549 = arith.addf %548, %547 : vector<8x32xf32>
    %550 = arith.divf %548, %549 : vector<8x32xf32>
    %551 = arith.mulf %542, %482 : vector<8x32xf32>
    %552 = arith.mulf %536, %544 : vector<8x32xf32>
    %553 = arith.addf %551, %552 : vector<8x32xf32>
    %554 = math.tanh %553 : vector<8x32xf32>
    %555 = arith.mulf %550, %554 : vector<8x32xf32>
    %556 = arith.index_cast %491 : i32 to index
    %c0_129 = arith.constant 0 : index
    %557 = vector.load %arg10[%556, %c0_129] : memref<64x32xf32, #tpu.memory_space<vmem>>, vector<8x32xf32>
    tpu.vector_store %arg10[%556, %c0_129], %526 {strides = array<i32>} : memref<64x32xf32, #tpu.memory_space<vmem>>, vector<8x32xf32>,
    %558 = arith.index_cast %493 : i32 to index
    %c0_130 = arith.constant 0 : index
    %559 = vector.load %arg11[%558, %c0_130] : memref<64x32xf32, #tpu.memory_space<vmem>>, vector<8x32xf32>
    tpu.vector_store %arg11[%558, %c0_130], %555 {strides = array<i32>} : memref<64x32xf32, #tpu.memory_space<vmem>>, vector<8x32xf32>,
    %c7_i32_131 = arith.constant 7 : i32
    %c0_132 = arith.constant 0 : index
    %c0_133 = arith.constant 0 : index
    %560 = vector.load %arg10[%c0_132, %c0_133] : memref<64x32xf32, #tpu.memory_space<vmem>>, vector<64x32xf32>
    %561 = arith.truncf %560 : vector<64x32xf32> to vector<64x32xbf16>
    %c0_134 = arith.constant 0 : index
    %c0_135 = arith.constant 0 : index
    %562 = vector.load %arg4[%c0_134, %c0_135] : memref<64x256xbf16, #tpu.memory_space<vmem>>, vector<32x256xbf16>
    %cst_136 = arith.constant dense<0.000000e+00> : vector<64x256xf32>
    %563 = tpu.matmul %561, %562, %cst_136 {dimension_numbers = #tpu.dot_dimension_numbers<[1], [0], [0], [1], [0, 0, 1, 1], [], []>} : vector<64x32xbf16>, vector<32x256xbf16>, vector<64x256xf32> -> vector<64x256xf32>
    %c0_137 = arith.constant 0 : index
    %c0_138 = arith.constant 0 : index
    %564 = vector.load %arg11[%c0_137, %c0_138] : memref<64x32xf32, #tpu.memory_space<vmem>>, vector<64x32xf32>
    %565 = arith.truncf %564 : vector<64x32xf32> to vector<64x32xbf16>
    %c32 = arith.constant 32 : index
    %c0_139 = arith.constant 0 : index
    %566 = vector.load %arg4[%c32, %c0_139] : memref<64x256xbf16, #tpu.memory_space<vmem>>, vector<32x256xbf16>
    %cst_140 = arith.constant dense<0.000000e+00> : vector<64x256xf32>
    %567 = tpu.matmul %565, %566, %cst_140 {dimension_numbers = #tpu.dot_dimension_numbers<[1], [0], [0], [1], [0, 0, 1, 1], [], []>} : vector<64x32xbf16>, vector<32x256xbf16>, vector<64x256xf32> -> vector<64x256xf32>
    %568 = arith.addf %563, %567 : vector<64x256xf32>
    %c0_141 = arith.constant 0 : index
    %c0_142 = arith.constant 0 : index
    %569 = vector.load %arg6[%c0_141, %c0_142] : memref<1x256xf32, #tpu.memory_space<vmem>>, vector<1x256xf32>
    %570 = vector.broadcast %569 : vector<1x256xf32> to vector<64x256xf32>
    %571 = arith.addf %568, %570 : vector<64x256xf32>
    %c0_143 = arith.constant 0 : index
    %c0_144 = arith.constant 0 : index
    %572 = vector.load %arg12[%c0_143, %c0_144] : memref<64x256xf32, #tpu.memory_space<vmem>>, vector<64x256xf32>
    tpu.vector_store %arg12[%c0_143, %c0_144], %571 {strides = array<i32>} : memref<64x256xf32, #tpu.memory_space<vmem>>, vector<64x256xf32>,
    %cst_145 = arith.constant 0.000000e+00 : f32
    %573 = vector.broadcast %cst_145 : f32 to vector<8x32xf32>
    %c0_146 = arith.constant 0 : index
    %c0_147 = arith.constant 0 : index
    %574 = vector.load %arg12[%c0_146, %c0_147] : memref<64x256xf32, #tpu.memory_space<vmem>>, vector<8x128xf32>
    %575 = vector.extract_strided_slice %574 {offsets = [0, 0], sizes = [8, 32], strides = [1, 1]} : vector<8x128xf32> to vector<8x32xf32>
    %576 = arith.negf %575 : vector<8x32xf32>
    %577 = math.exp %576 : vector<8x32xf32>
    %cst_148 = arith.constant 1.000000e+00 : f32
    %578 = vector.broadcast %cst_148 : f32 to vector<8x32xf32>
    %579 = arith.addf %578, %577 : vector<8x32xf32>
    %580 = arith.divf %578, %579 : vector<8x32xf32>
    %581 = vector.extract_strided_slice %574 {offsets = [0, 32], sizes = [8, 32], strides = [1, 1]} : vector<8x128xf32> to vector<8x32xf32>
    %582 = arith.negf %581 : vector<8x32xf32>
    %583 = math.exp %582 : vector<8x32xf32>
    %cst_149 = arith.constant 1.000000e+00 : f32
    %584 = vector.broadcast %cst_149 : f32 to vector<8x32xf32>
    %585 = arith.addf %584, %583 : vector<8x32xf32>
    %586 = arith.divf %584, %585 : vector<8x32xf32>
    %587 = vector.extract_strided_slice %574 {offsets = [0, 64], sizes = [8, 32], strides = [1, 1]} : vector<8x128xf32> to vector<8x32xf32>
    %588 = math.tanh %587 : vector<8x32xf32>
    %589 = vector.extract_strided_slice %574 {offsets = [0, 96], sizes = [8, 32], strides = [1, 1]} : vector<8x128xf32> to vector<8x32xf32>
    %590 = arith.negf %589 : vector<8x32xf32>
    %591 = math.exp %590 : vector<8x32xf32>
    %cst_150 = arith.constant 1.000000e+00 : f32
    %592 = vector.broadcast %cst_150 : f32 to vector<8x32xf32>
    %593 = arith.addf %592, %591 : vector<8x32xf32>
    %594 = arith.divf %592, %593 : vector<8x32xf32>
    %595 = arith.mulf %586, %573 : vector<8x32xf32>
    %596 = arith.mulf %580, %588 : vector<8x32xf32>
    %597 = arith.addf %595, %596 : vector<8x32xf32>
    %598 = math.tanh %597 : vector<8x32xf32>
    %599 = arith.mulf %594, %598 : vector<8x32xf32>
    %c56_151 = arith.constant 56 : index
    %c128_152 = arith.constant 128 : index
    %600 = vector.load %arg12[%c56_151, %c128_152] : memref<64x256xf32, #tpu.memory_space<vmem>>, vector<8x128xf32>
    %601 = vector.extract_strided_slice %600 {offsets = [0, 0], sizes = [8, 32], strides = [1, 1]} : vector<8x128xf32> to vector<8x32xf32>
    %602 = arith.negf %601 : vector<8x32xf32>
    %603 = math.exp %602 : vector<8x32xf32>
    %cst_153 = arith.constant 1.000000e+00 : f32
    %604 = vector.broadcast %cst_153 : f32 to vector<8x32xf32>
    %605 = arith.addf %604, %603 : vector<8x32xf32>
    %606 = arith.divf %604, %605 : vector<8x32xf32>
    %607 = vector.extract_strided_slice %600 {offsets = [0, 32], sizes = [8, 32], strides = [1, 1]} : vector<8x128xf32> to vector<8x32xf32>
    %608 = arith.negf %607 : vector<8x32xf32>
    %609 = math.exp %608 : vector<8x32xf32>
    %cst_154 = arith.constant 1.000000e+00 : f32
    %610 = vector.broadcast %cst_154 : f32 to vector<8x32xf32>
    %611 = arith.addf %610, %609 : vector<8x32xf32>
    %612 = arith.divf %610, %611 : vector<8x32xf32>
    %613 = vector.extract_strided_slice %600 {offsets = [0, 64], sizes = [8, 32], strides = [1, 1]} : vector<8x128xf32> to vector<8x32xf32>
    %614 = math.tanh %613 : vector<8x32xf32>
    %615 = vector.extract_strided_slice %600 {offsets = [0, 96], sizes = [8, 32], strides = [1, 1]} : vector<8x128xf32> to vector<8x32xf32>
    %616 = arith.negf %615 : vector<8x32xf32>
    %617 = math.exp %616 : vector<8x32xf32>
    %cst_155 = arith.constant 1.000000e+00 : f32
    %618 = vector.broadcast %cst_155 : f32 to vector<8x32xf32>
    %619 = arith.addf %618, %617 : vector<8x32xf32>
    %620 = arith.divf %618, %619 : vector<8x32xf32>
    %621 = arith.mulf %612, %573 : vector<8x32xf32>
    %622 = arith.mulf %606, %614 : vector<8x32xf32>
    %623 = arith.addf %621, %622 : vector<8x32xf32>
    %624 = math.tanh %623 : vector<8x32xf32>
    %625 = arith.mulf %620, %624 : vector<8x32xf32>
    %c0_156 = arith.constant 0 : index
    %c0_157 = arith.constant 0 : index
    %626 = vector.load %arg10[%c0_156, %c0_157] : memref<64x32xf32, #tpu.memory_space<vmem>>, vector<8x32xf32>
    tpu.vector_store %arg10[%c0_156, %c0_157], %599 {strides = array<i32>} : memref<64x32xf32, #tpu.memory_space<vmem>>, vector<8x32xf32>,
    %c56_158 = arith.constant 56 : index
    %c0_159 = arith.constant 0 : index
    %627 = vector.load %arg11[%c56_158, %c0_159] : memref<64x32xf32, #tpu.memory_space<vmem>>, vector<8x32xf32>
    tpu.vector_store %arg11[%c56_158, %c0_159], %625 {strides = array<i32>} : memref<64x32xf32, #tpu.memory_space<vmem>>, vector<8x32xf32>,
    %c1_i32_160 = arith.constant 1 : i32
    %c7_i32_161 = arith.constant 7 : i32
    %628 = arith.subi %c7_i32_161, %c1_i32_160 : i32
    %c8_i32_162 = arith.constant 8 : i32
    %629 = arith.muli %c1_i32_160, %c8_i32_162 : i32
    %630 = tpu.assume_multiple %629, 8 : i32
    %c8_i32_163 = arith.constant 8 : i32
    %631 = arith.muli %628, %c8_i32_163 : i32
    %632 = tpu.assume_multiple %631, 8 : i32
    %633 = tpu.concatenate %599, %625 in 1 : vector<8x32xf32>, vector<8x32xf32> -> vector<8x64xf32>
    %634 = arith.truncf %633 : vector<8x64xf32> to vector<8x64xbf16>
    %c0_164 = arith.constant 0 : index
    %c0_165 = arith.constant 0 : index
    %635 = vector.load %arg5[%c0_164, %c0_165] : memref<64x256xbf16, #tpu.memory_space<vmem>>, vector<64x256xbf16>
    %cst_166 = arith.constant dense<0.000000e+00> : vector<8x256xf32>
    %636 = tpu.matmul %634, %635, %cst_166 {dimension_numbers = #tpu.dot_dimension_numbers<[1], [0], [0], [1], [0, 0, 1, 1], [], []>} : vector<8x64xbf16>, vector<64x256xbf16>, vector<8x256xf32> -> vector<8x256xf32>
    %637 = arith.index_cast %630 : i32 to index
    %c0_167 = arith.constant 0 : index
    %638 = vector.load %arg12[%637, %c0_167] : memref<64x256xf32, #tpu.memory_space<vmem>>, vector<8x128xf32>
    %639 = vector.extract_strided_slice %636 {offsets = [0, 0], sizes = [8, 128], strides = [1, 1]} : vector<8x256xf32> to vector<8x128xf32>
    %640 = arith.addf %638, %639 : vector<8x128xf32>
    %641 = vector.extract_strided_slice %640 {offsets = [0, 0], sizes = [8, 32], strides = [1, 1]} : vector<8x128xf32> to vector<8x32xf32>
    %642 = arith.negf %641 : vector<8x32xf32>
    %643 = math.exp %642 : vector<8x32xf32>
    %cst_168 = arith.constant 1.000000e+00 : f32
    %644 = vector.broadcast %cst_168 : f32 to vector<8x32xf32>
    %645 = arith.addf %644, %643 : vector<8x32xf32>
    %646 = arith.divf %644, %645 : vector<8x32xf32>
    %647 = vector.extract_strided_slice %640 {offsets = [0, 32], sizes = [8, 32], strides = [1, 1]} : vector<8x128xf32> to vector<8x32xf32>
    %648 = arith.negf %647 : vector<8x32xf32>
    %649 = math.exp %648 : vector<8x32xf32>
    %cst_169 = arith.constant 1.000000e+00 : f32
    %650 = vector.broadcast %cst_169 : f32 to vector<8x32xf32>
    %651 = arith.addf %650, %649 : vector<8x32xf32>
    %652 = arith.divf %650, %651 : vector<8x32xf32>
    %653 = vector.extract_strided_slice %640 {offsets = [0, 64], sizes = [8, 32], strides = [1, 1]} : vector<8x128xf32> to vector<8x32xf32>
    %654 = math.tanh %653 : vector<8x32xf32>
    %655 = vector.extract_strided_slice %640 {offsets = [0, 96], sizes = [8, 32], strides = [1, 1]} : vector<8x128xf32> to vector<8x32xf32>
    %656 = arith.negf %655 : vector<8x32xf32>
    %657 = math.exp %656 : vector<8x32xf32>
    %cst_170 = arith.constant 1.000000e+00 : f32
    %658 = vector.broadcast %cst_170 : f32 to vector<8x32xf32>
    %659 = arith.addf %658, %657 : vector<8x32xf32>
    %660 = arith.divf %658, %659 : vector<8x32xf32>
    %661 = arith.mulf %652, %597 : vector<8x32xf32>
    %662 = arith.mulf %646, %654 : vector<8x32xf32>
    %663 = arith.addf %661, %662 : vector<8x32xf32>
    %664 = math.tanh %663 : vector<8x32xf32>
    %665 = arith.mulf %660, %664 : vector<8x32xf32>
    %666 = arith.index_cast %632 : i32 to index
    %c128_171 = arith.constant 128 : index
    %667 = vector.load %arg12[%666, %c128_171] : memref<64x256xf32, #tpu.memory_space<vmem>>, vector<8x128xf32>
    %668 = vector.extract_strided_slice %636 {offsets = [0, 128], sizes = [8, 128], strides = [1, 1]} : vector<8x256xf32> to vector<8x128xf32>
    %669 = arith.addf %667, %668 : vector<8x128xf32>
    %670 = vector.extract_strided_slice %669 {offsets = [0, 0], sizes = [8, 32], strides = [1, 1]} : vector<8x128xf32> to vector<8x32xf32>
    %671 = arith.negf %670 : vector<8x32xf32>
    %672 = math.exp %671 : vector<8x32xf32>
    %cst_172 = arith.constant 1.000000e+00 : f32
    %673 = vector.broadcast %cst_172 : f32 to vector<8x32xf32>
    %674 = arith.addf %673, %672 : vector<8x32xf32>
    %675 = arith.divf %673, %674 : vector<8x32xf32>
    %676 = vector.extract_strided_slice %669 {offsets = [0, 32], sizes = [8, 32], strides = [1, 1]} : vector<8x128xf32> to vector<8x32xf32>
    %677 = arith.negf %676 : vector<8x32xf32>
    %678 = math.exp %677 : vector<8x32xf32>
    %cst_173 = arith.constant 1.000000e+00 : f32
    %679 = vector.broadcast %cst_173 : f32 to vector<8x32xf32>
    %680 = arith.addf %679, %678 : vector<8x32xf32>
    %681 = arith.divf %679, %680 : vector<8x32xf32>
    %682 = vector.extract_strided_slice %669 {offsets = [0, 64], sizes = [8, 32], strides = [1, 1]} : vector<8x128xf32> to vector<8x32xf32>
    %683 = math.tanh %682 : vector<8x32xf32>
    %684 = vector.extract_strided_slice %669 {offsets = [0, 96], sizes = [8, 32], strides = [1, 1]} : vector<8x128xf32> to vector<8x32xf32>
    %685 = arith.negf %684 : vector<8x32xf32>
    %686 = math.exp %685 : vector<8x32xf32>
    %cst_174 = arith.constant 1.000000e+00 : f32
    %687 = vector.broadcast %cst_174 : f32 to vector<8x32xf32>
    %688 = arith.addf %687, %686 : vector<8x32xf32>
    %689 = arith.divf %687, %688 : vector<8x32xf32>
    %690 = arith.mulf %681, %623 : vector<8x32xf32>
    %691 = arith.mulf %675, %683 : vector<8x32xf32>
    %692 = arith.addf %690, %691 : vector<8x32xf32>
    %693 = math.tanh %692 : vector<8x32xf32>
    %694 = arith.mulf %689, %693 : vector<8x32xf32>
    %695 = arith.index_cast %630 : i32 to index
    %c0_175 = arith.constant 0 : index
    %696 = vector.load %arg10[%695, %c0_175] : memref<64x32xf32, #tpu.memory_space<vmem>>, vector<8x32xf32>
    tpu.vector_store %arg10[%695, %c0_175], %665 {strides = array<i32>} : memref<64x32xf32, #tpu.memory_space<vmem>>, vector<8x32xf32>,
    %697 = arith.index_cast %632 : i32 to index
    %c0_176 = arith.constant 0 : index
    %698 = vector.load %arg11[%697, %c0_176] : memref<64x32xf32, #tpu.memory_space<vmem>>, vector<8x32xf32>
    tpu.vector_store %arg11[%697, %c0_176], %694 {strides = array<i32>} : memref<64x32xf32, #tpu.memory_space<vmem>>, vector<8x32xf32>,
    %c2_i32_177 = arith.constant 2 : i32
    %c7_i32_178 = arith.constant 7 : i32
    %699 = arith.subi %c7_i32_178, %c2_i32_177 : i32
    %c8_i32_179 = arith.constant 8 : i32
    %700 = arith.muli %c2_i32_177, %c8_i32_179 : i32
    %701 = tpu.assume_multiple %700, 8 : i32
    %c8_i32_180 = arith.constant 8 : i32
    %702 = arith.muli %699, %c8_i32_180 : i32
    %703 = tpu.assume_multiple %702, 8 : i32
    %704 = tpu.concatenate %665, %694 in 1 : vector<8x32xf32>, vector<8x32xf32> -> vector<8x64xf32>
    %705 = arith.truncf %704 : vector<8x64xf32> to vector<8x64xbf16>
    %c0_181 = arith.constant 0 : index
    %c0_182 = arith.constant 0 : index
    %706 = vector.load %arg5[%c0_181, %c0_182] : memref<64x256xbf16, #tpu.memory_space<vmem>>, vector<64x256xbf16>
    %cst_183 = arith.constant dense<0.000000e+00> : vector<8x256xf32>
    %707 = tpu.matmul %705, %706, %cst_183 {dimension_numbers = #tpu.dot_dimension_numbers<[1], [0], [0], [1], [0, 0, 1, 1], [], []>} : vector<8x64xbf16>, vector<64x256xbf16>, vector<8x256xf32> -> vector<8x256xf32>
    %708 = arith.index_cast %701 : i32 to index
    %c0_184 = arith.constant 0 : index
    %709 = vector.load %arg12[%708, %c0_184] : memref<64x256xf32, #tpu.memory_space<vmem>>, vector<8x128xf32>
    %710 = vector.extract_strided_slice %707 {offsets = [0, 0], sizes = [8, 128], strides = [1, 1]} : vector<8x256xf32> to vector<8x128xf32>
    %711 = arith.addf %709, %710 : vector<8x128xf32>
    %712 = vector.extract_strided_slice %711 {offsets = [0, 0], sizes = [8, 32], strides = [1, 1]} : vector<8x128xf32> to vector<8x32xf32>
    %713 = arith.negf %712 : vector<8x32xf32>
    %714 = math.exp %713 : vector<8x32xf32>
    %cst_185 = arith.constant 1.000000e+00 : f32
    %715 = vector.broadcast %cst_185 : f32 to vector<8x32xf32>
    %716 = arith.addf %715, %714 : vector<8x32xf32>
    %717 = arith.divf %715, %716 : vector<8x32xf32>
    %718 = vector.extract_strided_slice %711 {offsets = [0, 32], sizes = [8, 32], strides = [1, 1]} : vector<8x128xf32> to vector<8x32xf32>
    %719 = arith.negf %718 : vector<8x32xf32>
    %720 = math.exp %719 : vector<8x32xf32>
    %cst_186 = arith.constant 1.000000e+00 : f32
    %721 = vector.broadcast %cst_186 : f32 to vector<8x32xf32>
    %722 = arith.addf %721, %720 : vector<8x32xf32>
    %723 = arith.divf %721, %722 : vector<8x32xf32>
    %724 = vector.extract_strided_slice %711 {offsets = [0, 64], sizes = [8, 32], strides = [1, 1]} : vector<8x128xf32> to vector<8x32xf32>
    %725 = math.tanh %724 : vector<8x32xf32>
    %726 = vector.extract_strided_slice %711 {offsets = [0, 96], sizes = [8, 32], strides = [1, 1]} : vector<8x128xf32> to vector<8x32xf32>
    %727 = arith.negf %726 : vector<8x32xf32>
    %728 = math.exp %727 : vector<8x32xf32>
    %cst_187 = arith.constant 1.000000e+00 : f32
    %729 = vector.broadcast %cst_187 : f32 to vector<8x32xf32>
    %730 = arith.addf %729, %728 : vector<8x32xf32>
    %731 = arith.divf %729, %730 : vector<8x32xf32>
    %732 = arith.mulf %723, %663 : vector<8x32xf32>
    %733 = arith.mulf %717, %725 : vector<8x32xf32>
    %734 = arith.addf %732, %733 : vector<8x32xf32>
    %735 = math.tanh %734 : vector<8x32xf32>
    %736 = arith.mulf %731, %735 : vector<8x32xf32>
    %737 = arith.index_cast %703 : i32 to index
    %c128_188 = arith.constant 128 : index
    %738 = vector.load %arg12[%737, %c128_188] : memref<64x256xf32, #tpu.memory_space<vmem>>, vector<8x128xf32>
    %739 = vector.extract_strided_slice %707 {offsets = [0, 128], sizes = [8, 128], strides = [1, 1]} : vector<8x256xf32> to vector<8x128xf32>
    %740 = arith.addf %738, %739 : vector<8x128xf32>
    %741 = vector.extract_strided_slice %740 {offsets = [0, 0], sizes = [8, 32], strides = [1, 1]} : vector<8x128xf32> to vector<8x32xf32>
    %742 = arith.negf %741 : vector<8x32xf32>
    %743 = math.exp %742 : vector<8x32xf32>
    %cst_189 = arith.constant 1.000000e+00 : f32
    %744 = vector.broadcast %cst_189 : f32 to vector<8x32xf32>
    %745 = arith.addf %744, %743 : vector<8x32xf32>
    %746 = arith.divf %744, %745 : vector<8x32xf32>
    %747 = vector.extract_strided_slice %740 {offsets = [0, 32], sizes = [8, 32], strides = [1, 1]} : vector<8x128xf32> to vector<8x32xf32>
    %748 = arith.negf %747 : vector<8x32xf32>
    %749 = math.exp %748 : vector<8x32xf32>
    %cst_190 = arith.constant 1.000000e+00 : f32
    %750 = vector.broadcast %cst_190 : f32 to vector<8x32xf32>
    %751 = arith.addf %750, %749 : vector<8x32xf32>
    %752 = arith.divf %750, %751 : vector<8x32xf32>
    %753 = vector.extract_strided_slice %740 {offsets = [0, 64], sizes = [8, 32], strides = [1, 1]} : vector<8x128xf32> to vector<8x32xf32>
    %754 = math.tanh %753 : vector<8x32xf32>
    %755 = vector.extract_strided_slice %740 {offsets = [0, 96], sizes = [8, 32], strides = [1, 1]} : vector<8x128xf32> to vector<8x32xf32>
    %756 = arith.negf %755 : vector<8x32xf32>
    %757 = math.exp %756 : vector<8x32xf32>
    %cst_191 = arith.constant 1.000000e+00 : f32
    %758 = vector.broadcast %cst_191 : f32 to vector<8x32xf32>
    %759 = arith.addf %758, %757 : vector<8x32xf32>
    %760 = arith.divf %758, %759 : vector<8x32xf32>
    %761 = arith.mulf %752, %692 : vector<8x32xf32>
    %762 = arith.mulf %746, %754 : vector<8x32xf32>
    %763 = arith.addf %761, %762 : vector<8x32xf32>
    %764 = math.tanh %763 : vector<8x32xf32>
    %765 = arith.mulf %760, %764 : vector<8x32xf32>
    %766 = arith.index_cast %701 : i32 to index
    %c0_192 = arith.constant 0 : index
    %767 = vector.load %arg10[%766, %c0_192] : memref<64x32xf32, #tpu.memory_space<vmem>>, vector<8x32xf32>
    tpu.vector_store %arg10[%766, %c0_192], %736 {strides = array<i32>} : memref<64x32xf32, #tpu.memory_space<vmem>>, vector<8x32xf32>,
    %768 = arith.index_cast %703 : i32 to index
    %c0_193 = arith.constant 0 : index
    %769 = vector.load %arg11[%768, %c0_193] : memref<64x32xf32, #tpu.memory_space<vmem>>, vector<8x32xf32>
    tpu.vector_store %arg11[%768, %c0_193], %765 {strides = array<i32>} : memref<64x32xf32, #tpu.memory_space<vmem>>, vector<8x32xf32>,
    %c3_i32_194 = arith.constant 3 : i32
    %c7_i32_195 = arith.constant 7 : i32
    %770 = arith.subi %c7_i32_195, %c3_i32_194 : i32
    %c8_i32_196 = arith.constant 8 : i32
    %771 = arith.muli %c3_i32_194, %c8_i32_196 : i32
    %772 = tpu.assume_multiple %771, 8 : i32
    %c8_i32_197 = arith.constant 8 : i32
    %773 = arith.muli %770, %c8_i32_197 : i32
    %774 = tpu.assume_multiple %773, 8 : i32
    %775 = tpu.concatenate %736, %765 in 1 : vector<8x32xf32>, vector<8x32xf32> -> vector<8x64xf32>
    %776 = arith.truncf %775 : vector<8x64xf32> to vector<8x64xbf16>
    %c0_198 = arith.constant 0 : index
    %c0_199 = arith.constant 0 : index
    %777 = vector.load %arg5[%c0_198, %c0_199] : memref<64x256xbf16, #tpu.memory_space<vmem>>, vector<64x256xbf16>
    %cst_200 = arith.constant dense<0.000000e+00> : vector<8x256xf32>
    %778 = tpu.matmul %776, %777, %cst_200 {dimension_numbers = #tpu.dot_dimension_numbers<[1], [0], [0], [1], [0, 0, 1, 1], [], []>} : vector<8x64xbf16>, vector<64x256xbf16>, vector<8x256xf32> -> vector<8x256xf32>
    %779 = arith.index_cast %772 : i32 to index
    %c0_201 = arith.constant 0 : index
    %780 = vector.load %arg12[%779, %c0_201] : memref<64x256xf32, #tpu.memory_space<vmem>>, vector<8x128xf32>
    %781 = vector.extract_strided_slice %778 {offsets = [0, 0], sizes = [8, 128], strides = [1, 1]} : vector<8x256xf32> to vector<8x128xf32>
    %782 = arith.addf %780, %781 : vector<8x128xf32>
    %783 = vector.extract_strided_slice %782 {offsets = [0, 0], sizes = [8, 32], strides = [1, 1]} : vector<8x128xf32> to vector<8x32xf32>
    %784 = arith.negf %783 : vector<8x32xf32>
    %785 = math.exp %784 : vector<8x32xf32>
    %cst_202 = arith.constant 1.000000e+00 : f32
    %786 = vector.broadcast %cst_202 : f32 to vector<8x32xf32>
    %787 = arith.addf %786, %785 : vector<8x32xf32>
    %788 = arith.divf %786, %787 : vector<8x32xf32>
    %789 = vector.extract_strided_slice %782 {offsets = [0, 32], sizes = [8, 32], strides = [1, 1]} : vector<8x128xf32> to vector<8x32xf32>
    %790 = arith.negf %789 : vector<8x32xf32>
    %791 = math.exp %790 : vector<8x32xf32>
    %cst_203 = arith.constant 1.000000e+00 : f32
    %792 = vector.broadcast %cst_203 : f32 to vector<8x32xf32>
    %793 = arith.addf %792, %791 : vector<8x32xf32>
    %794 = arith.divf %792, %793 : vector<8x32xf32>
    %795 = vector.extract_strided_slice %782 {offsets = [0, 64], sizes = [8, 32], strides = [1, 1]} : vector<8x128xf32> to vector<8x32xf32>
    %796 = math.tanh %795 : vector<8x32xf32>
    %797 = vector.extract_strided_slice %782 {offsets = [0, 96], sizes = [8, 32], strides = [1, 1]} : vector<8x128xf32> to vector<8x32xf32>
    %798 = arith.negf %797 : vector<8x32xf32>
    %799 = math.exp %798 : vector<8x32xf32>
    %cst_204 = arith.constant 1.000000e+00 : f32
    %800 = vector.broadcast %cst_204 : f32 to vector<8x32xf32>
    %801 = arith.addf %800, %799 : vector<8x32xf32>
    %802 = arith.divf %800, %801 : vector<8x32xf32>
    %803 = arith.mulf %794, %734 : vector<8x32xf32>
    %804 = arith.mulf %788, %796 : vector<8x32xf32>
    %805 = arith.addf %803, %804 : vector<8x32xf32>
    %806 = math.tanh %805 : vector<8x32xf32>
    %807 = arith.mulf %802, %806 : vector<8x32xf32>
    %808 = arith.index_cast %774 : i32 to index
    %c128_205 = arith.constant 128 : index
    %809 = vector.load %arg12[%808, %c128_205] : memref<64x256xf32, #tpu.memory_space<vmem>>, vector<8x128xf32>
    %810 = vector.extract_strided_slice %778 {offsets = [0, 128], sizes = [8, 128], strides = [1, 1]} : vector<8x256xf32> to vector<8x128xf32>
    %811 = arith.addf %809, %810 : vector<8x128xf32>
    %812 = vector.extract_strided_slice %811 {offsets = [0, 0], sizes = [8, 32], strides = [1, 1]} : vector<8x128xf32> to vector<8x32xf32>
    %813 = arith.negf %812 : vector<8x32xf32>
    %814 = math.exp %813 : vector<8x32xf32>
    %cst_206 = arith.constant 1.000000e+00 : f32
    %815 = vector.broadcast %cst_206 : f32 to vector<8x32xf32>
    %816 = arith.addf %815, %814 : vector<8x32xf32>
    %817 = arith.divf %815, %816 : vector<8x32xf32>
    %818 = vector.extract_strided_slice %811 {offsets = [0, 32], sizes = [8, 32], strides = [1, 1]} : vector<8x128xf32> to vector<8x32xf32>
    %819 = arith.negf %818 : vector<8x32xf32>
    %820 = math.exp %819 : vector<8x32xf32>
    %cst_207 = arith.constant 1.000000e+00 : f32
    %821 = vector.broadcast %cst_207 : f32 to vector<8x32xf32>
    %822 = arith.addf %821, %820 : vector<8x32xf32>
    %823 = arith.divf %821, %822 : vector<8x32xf32>
    %824 = vector.extract_strided_slice %811 {offsets = [0, 64], sizes = [8, 32], strides = [1, 1]} : vector<8x128xf32> to vector<8x32xf32>
    %825 = math.tanh %824 : vector<8x32xf32>
    %826 = vector.extract_strided_slice %811 {offsets = [0, 96], sizes = [8, 32], strides = [1, 1]} : vector<8x128xf32> to vector<8x32xf32>
    %827 = arith.negf %826 : vector<8x32xf32>
    %828 = math.exp %827 : vector<8x32xf32>
    %cst_208 = arith.constant 1.000000e+00 : f32
    %829 = vector.broadcast %cst_208 : f32 to vector<8x32xf32>
    %830 = arith.addf %829, %828 : vector<8x32xf32>
    %831 = arith.divf %829, %830 : vector<8x32xf32>
    %832 = arith.mulf %823, %763 : vector<8x32xf32>
    %833 = arith.mulf %817, %825 : vector<8x32xf32>
    %834 = arith.addf %832, %833 : vector<8x32xf32>
    %835 = math.tanh %834 : vector<8x32xf32>
    %836 = arith.mulf %831, %835 : vector<8x32xf32>
    %837 = arith.index_cast %772 : i32 to index
    %c0_209 = arith.constant 0 : index
    %838 = vector.load %arg10[%837, %c0_209] : memref<64x32xf32, #tpu.memory_space<vmem>>, vector<8x32xf32>
    tpu.vector_store %arg10[%837, %c0_209], %807 {strides = array<i32>} : memref<64x32xf32, #tpu.memory_space<vmem>>, vector<8x32xf32>,
    %839 = arith.index_cast %774 : i32 to index
    %c0_210 = arith.constant 0 : index
    %840 = vector.load %arg11[%839, %c0_210] : memref<64x32xf32, #tpu.memory_space<vmem>>, vector<8x32xf32>
    tpu.vector_store %arg11[%839, %c0_210], %836 {strides = array<i32>} : memref<64x32xf32, #tpu.memory_space<vmem>>, vector<8x32xf32>,
    %c4_i32_211 = arith.constant 4 : i32
    %c7_i32_212 = arith.constant 7 : i32
    %841 = arith.subi %c7_i32_212, %c4_i32_211 : i32
    %c8_i32_213 = arith.constant 8 : i32
    %842 = arith.muli %c4_i32_211, %c8_i32_213 : i32
    %843 = tpu.assume_multiple %842, 8 : i32
    %c8_i32_214 = arith.constant 8 : i32
    %844 = arith.muli %841, %c8_i32_214 : i32
    %845 = tpu.assume_multiple %844, 8 : i32
    %846 = tpu.concatenate %807, %836 in 1 : vector<8x32xf32>, vector<8x32xf32> -> vector<8x64xf32>
    %847 = arith.truncf %846 : vector<8x64xf32> to vector<8x64xbf16>
    %c0_215 = arith.constant 0 : index
    %c0_216 = arith.constant 0 : index
    %848 = vector.load %arg5[%c0_215, %c0_216] : memref<64x256xbf16, #tpu.memory_space<vmem>>, vector<64x256xbf16>
    %cst_217 = arith.constant dense<0.000000e+00> : vector<8x256xf32>
    %849 = tpu.matmul %847, %848, %cst_217 {dimension_numbers = #tpu.dot_dimension_numbers<[1], [0], [0], [1], [0, 0, 1, 1], [], []>} : vector<8x64xbf16>, vector<64x256xbf16>, vector<8x256xf32> -> vector<8x256xf32>
    %850 = arith.index_cast %843 : i32 to index
    %c0_218 = arith.constant 0 : index
    %851 = vector.load %arg12[%850, %c0_218] : memref<64x256xf32, #tpu.memory_space<vmem>>, vector<8x128xf32>
    %852 = vector.extract_strided_slice %849 {offsets = [0, 0], sizes = [8, 128], strides = [1, 1]} : vector<8x256xf32> to vector<8x128xf32>
    %853 = arith.addf %851, %852 : vector<8x128xf32>
    %854 = vector.extract_strided_slice %853 {offsets = [0, 0], sizes = [8, 32], strides = [1, 1]} : vector<8x128xf32> to vector<8x32xf32>
    %855 = arith.negf %854 : vector<8x32xf32>
    %856 = math.exp %855 : vector<8x32xf32>
    %cst_219 = arith.constant 1.000000e+00 : f32
    %857 = vector.broadcast %cst_219 : f32 to vector<8x32xf32>
    %858 = arith.addf %857, %856 : vector<8x32xf32>
    %859 = arith.divf %857, %858 : vector<8x32xf32>
    %860 = vector.extract_strided_slice %853 {offsets = [0, 32], sizes = [8, 32], strides = [1, 1]} : vector<8x128xf32> to vector<8x32xf32>
    %861 = arith.negf %860 : vector<8x32xf32>
    %862 = math.exp %861 : vector<8x32xf32>
    %cst_220 = arith.constant 1.000000e+00 : f32
    %863 = vector.broadcast %cst_220 : f32 to vector<8x32xf32>
    %864 = arith.addf %863, %862 : vector<8x32xf32>
    %865 = arith.divf %863, %864 : vector<8x32xf32>
    %866 = vector.extract_strided_slice %853 {offsets = [0, 64], sizes = [8, 32], strides = [1, 1]} : vector<8x128xf32> to vector<8x32xf32>
    %867 = math.tanh %866 : vector<8x32xf32>
    %868 = vector.extract_strided_slice %853 {offsets = [0, 96], sizes = [8, 32], strides = [1, 1]} : vector<8x128xf32> to vector<8x32xf32>
    %869 = arith.negf %868 : vector<8x32xf32>
    %870 = math.exp %869 : vector<8x32xf32>
    %cst_221 = arith.constant 1.000000e+00 : f32
    %871 = vector.broadcast %cst_221 : f32 to vector<8x32xf32>
    %872 = arith.addf %871, %870 : vector<8x32xf32>
    %873 = arith.divf %871, %872 : vector<8x32xf32>
    %874 = arith.mulf %865, %805 : vector<8x32xf32>
    %875 = arith.mulf %859, %867 : vector<8x32xf32>
    %876 = arith.addf %874, %875 : vector<8x32xf32>
    %877 = math.tanh %876 : vector<8x32xf32>
    %878 = arith.mulf %873, %877 : vector<8x32xf32>
    %879 = arith.index_cast %845 : i32 to index
    %c128_222 = arith.constant 128 : index
    %880 = vector.load %arg12[%879, %c128_222] : memref<64x256xf32, #tpu.memory_space<vmem>>, vector<8x128xf32>
    %881 = vector.extract_strided_slice %849 {offsets = [0, 128], sizes = [8, 128], strides = [1, 1]} : vector<8x256xf32> to vector<8x128xf32>
    %882 = arith.addf %880, %881 : vector<8x128xf32>
    %883 = vector.extract_strided_slice %882 {offsets = [0, 0], sizes = [8, 32], strides = [1, 1]} : vector<8x128xf32> to vector<8x32xf32>
    %884 = arith.negf %883 : vector<8x32xf32>
    %885 = math.exp %884 : vector<8x32xf32>
    %cst_223 = arith.constant 1.000000e+00 : f32
    %886 = vector.broadcast %cst_223 : f32 to vector<8x32xf32>
    %887 = arith.addf %886, %885 : vector<8x32xf32>
    %888 = arith.divf %886, %887 : vector<8x32xf32>
    %889 = vector.extract_strided_slice %882 {offsets = [0, 32], sizes = [8, 32], strides = [1, 1]} : vector<8x128xf32> to vector<8x32xf32>
    %890 = arith.negf %889 : vector<8x32xf32>
    %891 = math.exp %890 : vector<8x32xf32>
    %cst_224 = arith.constant 1.000000e+00 : f32
    %892 = vector.broadcast %cst_224 : f32 to vector<8x32xf32>
    %893 = arith.addf %892, %891 : vector<8x32xf32>
    %894 = arith.divf %892, %893 : vector<8x32xf32>
    %895 = vector.extract_strided_slice %882 {offsets = [0, 64], sizes = [8, 32], strides = [1, 1]} : vector<8x128xf32> to vector<8x32xf32>
    %896 = math.tanh %895 : vector<8x32xf32>
    %897 = vector.extract_strided_slice %882 {offsets = [0, 96], sizes = [8, 32], strides = [1, 1]} : vector<8x128xf32> to vector<8x32xf32>
    %898 = arith.negf %897 : vector<8x32xf32>
    %899 = math.exp %898 : vector<8x32xf32>
    %cst_225 = arith.constant 1.000000e+00 : f32
    %900 = vector.broadcast %cst_225 : f32 to vector<8x32xf32>
    %901 = arith.addf %900, %899 : vector<8x32xf32>
    %902 = arith.divf %900, %901 : vector<8x32xf32>
    %903 = arith.mulf %894, %834 : vector<8x32xf32>
    %904 = arith.mulf %888, %896 : vector<8x32xf32>
    %905 = arith.addf %903, %904 : vector<8x32xf32>
    %906 = math.tanh %905 : vector<8x32xf32>
    %907 = arith.mulf %902, %906 : vector<8x32xf32>
    %908 = arith.index_cast %843 : i32 to index
    %c0_226 = arith.constant 0 : index
    %909 = vector.load %arg10[%908, %c0_226] : memref<64x32xf32, #tpu.memory_space<vmem>>, vector<8x32xf32>
    tpu.vector_store %arg10[%908, %c0_226], %878 {strides = array<i32>} : memref<64x32xf32, #tpu.memory_space<vmem>>, vector<8x32xf32>,
    %910 = arith.index_cast %845 : i32 to index
    %c0_227 = arith.constant 0 : index
    %911 = vector.load %arg11[%910, %c0_227] : memref<64x32xf32, #tpu.memory_space<vmem>>, vector<8x32xf32>
    tpu.vector_store %arg11[%910, %c0_227], %907 {strides = array<i32>} : memref<64x32xf32, #tpu.memory_space<vmem>>, vector<8x32xf32>,
    %c5_i32_228 = arith.constant 5 : i32
    %c7_i32_229 = arith.constant 7 : i32
    %912 = arith.subi %c7_i32_229, %c5_i32_228 : i32
    %c8_i32_230 = arith.constant 8 : i32
    %913 = arith.muli %c5_i32_228, %c8_i32_230 : i32
    %914 = tpu.assume_multiple %913, 8 : i32
    %c8_i32_231 = arith.constant 8 : i32
    %915 = arith.muli %912, %c8_i32_231 : i32
    %916 = tpu.assume_multiple %915, 8 : i32
    %917 = tpu.concatenate %878, %907 in 1 : vector<8x32xf32>, vector<8x32xf32> -> vector<8x64xf32>
    %918 = arith.truncf %917 : vector<8x64xf32> to vector<8x64xbf16>
    %c0_232 = arith.constant 0 : index
    %c0_233 = arith.constant 0 : index
    %919 = vector.load %arg5[%c0_232, %c0_233] : memref<64x256xbf16, #tpu.memory_space<vmem>>, vector<64x256xbf16>
    %cst_234 = arith.constant dense<0.000000e+00> : vector<8x256xf32>
    %920 = tpu.matmul %918, %919, %cst_234 {dimension_numbers = #tpu.dot_dimension_numbers<[1], [0], [0], [1], [0, 0, 1, 1], [], []>} : vector<8x64xbf16>, vector<64x256xbf16>, vector<8x256xf32> -> vector<8x256xf32>
    %921 = arith.index_cast %914 : i32 to index
    %c0_235 = arith.constant 0 : index
    %922 = vector.load %arg12[%921, %c0_235] : memref<64x256xf32, #tpu.memory_space<vmem>>, vector<8x128xf32>
    %923 = vector.extract_strided_slice %920 {offsets = [0, 0], sizes = [8, 128], strides = [1, 1]} : vector<8x256xf32> to vector<8x128xf32>
    %924 = arith.addf %922, %923 : vector<8x128xf32>
    %925 = vector.extract_strided_slice %924 {offsets = [0, 0], sizes = [8, 32], strides = [1, 1]} : vector<8x128xf32> to vector<8x32xf32>
    %926 = arith.negf %925 : vector<8x32xf32>
    %927 = math.exp %926 : vector<8x32xf32>
    %cst_236 = arith.constant 1.000000e+00 : f32
    %928 = vector.broadcast %cst_236 : f32 to vector<8x32xf32>
    %929 = arith.addf %928, %927 : vector<8x32xf32>
    %930 = arith.divf %928, %929 : vector<8x32xf32>
    %931 = vector.extract_strided_slice %924 {offsets = [0, 32], sizes = [8, 32], strides = [1, 1]} : vector<8x128xf32> to vector<8x32xf32>
    %932 = arith.negf %931 : vector<8x32xf32>
    %933 = math.exp %932 : vector<8x32xf32>
    %cst_237 = arith.constant 1.000000e+00 : f32
    %934 = vector.broadcast %cst_237 : f32 to vector<8x32xf32>
    %935 = arith.addf %934, %933 : vector<8x32xf32>
    %936 = arith.divf %934, %935 : vector<8x32xf32>
    %937 = vector.extract_strided_slice %924 {offsets = [0, 64], sizes = [8, 32], strides = [1, 1]} : vector<8x128xf32> to vector<8x32xf32>
    %938 = math.tanh %937 : vector<8x32xf32>
    %939 = vector.extract_strided_slice %924 {offsets = [0, 96], sizes = [8, 32], strides = [1, 1]} : vector<8x128xf32> to vector<8x32xf32>
    %940 = arith.negf %939 : vector<8x32xf32>
    %941 = math.exp %940 : vector<8x32xf32>
    %cst_238 = arith.constant 1.000000e+00 : f32
    %942 = vector.broadcast %cst_238 : f32 to vector<8x32xf32>
    %943 = arith.addf %942, %941 : vector<8x32xf32>
    %944 = arith.divf %942, %943 : vector<8x32xf32>
    %945 = arith.mulf %936, %876 : vector<8x32xf32>
    %946 = arith.mulf %930, %938 : vector<8x32xf32>
    %947 = arith.addf %945, %946 : vector<8x32xf32>
    %948 = math.tanh %947 : vector<8x32xf32>
    %949 = arith.mulf %944, %948 : vector<8x32xf32>
    %950 = arith.index_cast %916 : i32 to index
    %c128_239 = arith.constant 128 : index
    %951 = vector.load %arg12[%950, %c128_239] : memref<64x256xf32, #tpu.memory_space<vmem>>, vector<8x128xf32>
    %952 = vector.extract_strided_slice %920 {offsets = [0, 128], sizes = [8, 128], strides = [1, 1]} : vector<8x256xf32> to vector<8x128xf32>
    %953 = arith.addf %951, %952 : vector<8x128xf32>
    %954 = vector.extract_strided_slice %953 {offsets = [0, 0], sizes = [8, 32], strides = [1, 1]} : vector<8x128xf32> to vector<8x32xf32>
    %955 = arith.negf %954 : vector<8x32xf32>
    %956 = math.exp %955 : vector<8x32xf32>
    %cst_240 = arith.constant 1.000000e+00 : f32
    %957 = vector.broadcast %cst_240 : f32 to vector<8x32xf32>
    %958 = arith.addf %957, %956 : vector<8x32xf32>
    %959 = arith.divf %957, %958 : vector<8x32xf32>
    %960 = vector.extract_strided_slice %953 {offsets = [0, 32], sizes = [8, 32], strides = [1, 1]} : vector<8x128xf32> to vector<8x32xf32>
    %961 = arith.negf %960 : vector<8x32xf32>
    %962 = math.exp %961 : vector<8x32xf32>
    %cst_241 = arith.constant 1.000000e+00 : f32
    %963 = vector.broadcast %cst_241 : f32 to vector<8x32xf32>
    %964 = arith.addf %963, %962 : vector<8x32xf32>
    %965 = arith.divf %963, %964 : vector<8x32xf32>
    %966 = vector.extract_strided_slice %953 {offsets = [0, 64], sizes = [8, 32], strides = [1, 1]} : vector<8x128xf32> to vector<8x32xf32>
    %967 = math.tanh %966 : vector<8x32xf32>
    %968 = vector.extract_strided_slice %953 {offsets = [0, 96], sizes = [8, 32], strides = [1, 1]} : vector<8x128xf32> to vector<8x32xf32>
    %969 = arith.negf %968 : vector<8x32xf32>
    %970 = math.exp %969 : vector<8x32xf32>
    %cst_242 = arith.constant 1.000000e+00 : f32
    %971 = vector.broadcast %cst_242 : f32 to vector<8x32xf32>
    %972 = arith.addf %971, %970 : vector<8x32xf32>
    %973 = arith.divf %971, %972 : vector<8x32xf32>
    %974 = arith.mulf %965, %905 : vector<8x32xf32>
    %975 = arith.mulf %959, %967 : vector<8x32xf32>
    %976 = arith.addf %974, %975 : vector<8x32xf32>
    %977 = math.tanh %976 : vector<8x32xf32>
    %978 = arith.mulf %973, %977 : vector<8x32xf32>
    %979 = arith.index_cast %914 : i32 to index
    %c0_243 = arith.constant 0 : index
    %980 = vector.load %arg10[%979, %c0_243] : memref<64x32xf32, #tpu.memory_space<vmem>>, vector<8x32xf32>
    tpu.vector_store %arg10[%979, %c0_243], %949 {strides = array<i32>} : memref<64x32xf32, #tpu.memory_space<vmem>>, vector<8x32xf32>,
    %981 = arith.index_cast %916 : i32 to index
    %c0_244 = arith.constant 0 : index
    %982 = vector.load %arg11[%981, %c0_244] : memref<64x32xf32, #tpu.memory_space<vmem>>, vector<8x32xf32>
    tpu.vector_store %arg11[%981, %c0_244], %978 {strides = array<i32>} : memref<64x32xf32, #tpu.memory_space<vmem>>, vector<8x32xf32>,
    %c6_i32_245 = arith.constant 6 : i32
    %c7_i32_246 = arith.constant 7 : i32
    %983 = arith.subi %c7_i32_246, %c6_i32_245 : i32
    %c8_i32_247 = arith.constant 8 : i32
    %984 = arith.muli %c6_i32_245, %c8_i32_247 : i32
    %985 = tpu.assume_multiple %984, 8 : i32
    %c8_i32_248 = arith.constant 8 : i32
    %986 = arith.muli %983, %c8_i32_248 : i32
    %987 = tpu.assume_multiple %986, 8 : i32
    %988 = tpu.concatenate %949, %978 in 1 : vector<8x32xf32>, vector<8x32xf32> -> vector<8x64xf32>
    %989 = arith.truncf %988 : vector<8x64xf32> to vector<8x64xbf16>
    %c0_249 = arith.constant 0 : index
    %c0_250 = arith.constant 0 : index
    %990 = vector.load %arg5[%c0_249, %c0_250] : memref<64x256xbf16, #tpu.memory_space<vmem>>, vector<64x256xbf16>
    %cst_251 = arith.constant dense<0.000000e+00> : vector<8x256xf32>
    %991 = tpu.matmul %989, %990, %cst_251 {dimension_numbers = #tpu.dot_dimension_numbers<[1], [0], [0], [1], [0, 0, 1, 1], [], []>} : vector<8x64xbf16>, vector<64x256xbf16>, vector<8x256xf32> -> vector<8x256xf32>
    %992 = arith.index_cast %985 : i32 to index
    %c0_252 = arith.constant 0 : index
    %993 = vector.load %arg12[%992, %c0_252] : memref<64x256xf32, #tpu.memory_space<vmem>>, vector<8x128xf32>
    %994 = vector.extract_strided_slice %991 {offsets = [0, 0], sizes = [8, 128], strides = [1, 1]} : vector<8x256xf32> to vector<8x128xf32>
    %995 = arith.addf %993, %994 : vector<8x128xf32>
    %996 = vector.extract_strided_slice %995 {offsets = [0, 0], sizes = [8, 32], strides = [1, 1]} : vector<8x128xf32> to vector<8x32xf32>
    %997 = arith.negf %996 : vector<8x32xf32>
    %998 = math.exp %997 : vector<8x32xf32>
    %cst_253 = arith.constant 1.000000e+00 : f32
    %999 = vector.broadcast %cst_253 : f32 to vector<8x32xf32>
    %1000 = arith.addf %999, %998 : vector<8x32xf32>
    %1001 = arith.divf %999, %1000 : vector<8x32xf32>
    %1002 = vector.extract_strided_slice %995 {offsets = [0, 32], sizes = [8, 32], strides = [1, 1]} : vector<8x128xf32> to vector<8x32xf32>
    %1003 = arith.negf %1002 : vector<8x32xf32>
    %1004 = math.exp %1003 : vector<8x32xf32>
    %cst_254 = arith.constant 1.000000e+00 : f32
    %1005 = vector.broadcast %cst_254 : f32 to vector<8x32xf32>
    %1006 = arith.addf %1005, %1004 : vector<8x32xf32>
    %1007 = arith.divf %1005, %1006 : vector<8x32xf32>
    %1008 = vector.extract_strided_slice %995 {offsets = [0, 64], sizes = [8, 32], strides = [1, 1]} : vector<8x128xf32> to vector<8x32xf32>
    %1009 = math.tanh %1008 : vector<8x32xf32>
    %1010 = vector.extract_strided_slice %995 {offsets = [0, 96], sizes = [8, 32], strides = [1, 1]} : vector<8x128xf32> to vector<8x32xf32>
    %1011 = arith.negf %1010 : vector<8x32xf32>
    %1012 = math.exp %1011 : vector<8x32xf32>
    %cst_255 = arith.constant 1.000000e+00 : f32
    %1013 = vector.broadcast %cst_255 : f32 to vector<8x32xf32>
    %1014 = arith.addf %1013, %1012 : vector<8x32xf32>
    %1015 = arith.divf %1013, %1014 : vector<8x32xf32>
    %1016 = arith.mulf %1007, %947 : vector<8x32xf32>
    %1017 = arith.mulf %1001, %1009 : vector<8x32xf32>
    %1018 = arith.addf %1016, %1017 : vector<8x32xf32>
    %1019 = math.tanh %1018 : vector<8x32xf32>
    %1020 = arith.mulf %1015, %1019 : vector<8x32xf32>
    %1021 = arith.index_cast %987 : i32 to index
    %c128_256 = arith.constant 128 : index
    %1022 = vector.load %arg12[%1021, %c128_256] : memref<64x256xf32, #tpu.memory_space<vmem>>, vector<8x128xf32>
    %1023 = vector.extract_strided_slice %991 {offsets = [0, 128], sizes = [8, 128], strides = [1, 1]} : vector<8x256xf32> to vector<8x128xf32>
    %1024 = arith.addf %1022, %1023 : vector<8x128xf32>
    %1025 = vector.extract_strided_slice %1024 {offsets = [0, 0], sizes = [8, 32], strides = [1, 1]} : vector<8x128xf32> to vector<8x32xf32>
    %1026 = arith.negf %1025 : vector<8x32xf32>
    %1027 = math.exp %1026 : vector<8x32xf32>
    %cst_257 = arith.constant 1.000000e+00 : f32
    %1028 = vector.broadcast %cst_257 : f32 to vector<8x32xf32>
    %1029 = arith.addf %1028, %1027 : vector<8x32xf32>
    %1030 = arith.divf %1028, %1029 : vector<8x32xf32>
    %1031 = vector.extract_strided_slice %1024 {offsets = [0, 32], sizes = [8, 32], strides = [1, 1]} : vector<8x128xf32> to vector<8x32xf32>
    %1032 = arith.negf %1031 : vector<8x32xf32>
    %1033 = math.exp %1032 : vector<8x32xf32>
    %cst_258 = arith.constant 1.000000e+00 : f32
    %1034 = vector.broadcast %cst_258 : f32 to vector<8x32xf32>
    %1035 = arith.addf %1034, %1033 : vector<8x32xf32>
    %1036 = arith.divf %1034, %1035 : vector<8x32xf32>
    %1037 = vector.extract_strided_slice %1024 {offsets = [0, 64], sizes = [8, 32], strides = [1, 1]} : vector<8x128xf32> to vector<8x32xf32>
    %1038 = math.tanh %1037 : vector<8x32xf32>
    %1039 = vector.extract_strided_slice %1024 {offsets = [0, 96], sizes = [8, 32], strides = [1, 1]} : vector<8x128xf32> to vector<8x32xf32>
    %1040 = arith.negf %1039 : vector<8x32xf32>
    %1041 = math.exp %1040 : vector<8x32xf32>
    %cst_259 = arith.constant 1.000000e+00 : f32
    %1042 = vector.broadcast %cst_259 : f32 to vector<8x32xf32>
    %1043 = arith.addf %1042, %1041 : vector<8x32xf32>
    %1044 = arith.divf %1042, %1043 : vector<8x32xf32>
    %1045 = arith.mulf %1036, %976 : vector<8x32xf32>
    %1046 = arith.mulf %1030, %1038 : vector<8x32xf32>
    %1047 = arith.addf %1045, %1046 : vector<8x32xf32>
    %1048 = math.tanh %1047 : vector<8x32xf32>
    %1049 = arith.mulf %1044, %1048 : vector<8x32xf32>
    %1050 = arith.index_cast %985 : i32 to index
    %c0_260 = arith.constant 0 : index
    %1051 = vector.load %arg10[%1050, %c0_260] : memref<64x32xf32, #tpu.memory_space<vmem>>, vector<8x32xf32>
    tpu.vector_store %arg10[%1050, %c0_260], %1020 {strides = array<i32>} : memref<64x32xf32, #tpu.memory_space<vmem>>, vector<8x32xf32>,
    %1052 = arith.index_cast %987 : i32 to index
    %c0_261 = arith.constant 0 : index
    %1053 = vector.load %arg11[%1052, %c0_261] : memref<64x32xf32, #tpu.memory_space<vmem>>, vector<8x32xf32>
    tpu.vector_store %arg11[%1052, %c0_261], %1049 {strides = array<i32>} : memref<64x32xf32, #tpu.memory_space<vmem>>, vector<8x32xf32>,
    %c7_i32_262 = arith.constant 7 : i32
    %c7_i32_263 = arith.constant 7 : i32
    %1054 = arith.subi %c7_i32_263, %c7_i32_262 : i32
    %c8_i32_264 = arith.constant 8 : i32
    %1055 = arith.muli %c7_i32_262, %c8_i32_264 : i32
    %1056 = tpu.assume_multiple %1055, 8 : i32
    %c8_i32_265 = arith.constant 8 : i32
    %1057 = arith.muli %1054, %c8_i32_265 : i32
    %1058 = tpu.assume_multiple %1057, 8 : i32
    %1059 = tpu.concatenate %1020, %1049 in 1 : vector<8x32xf32>, vector<8x32xf32> -> vector<8x64xf32>
    %1060 = arith.truncf %1059 : vector<8x64xf32> to vector<8x64xbf16>
    %c0_266 = arith.constant 0 : index
    %c0_267 = arith.constant 0 : index
    %1061 = vector.load %arg5[%c0_266, %c0_267] : memref<64x256xbf16, #tpu.memory_space<vmem>>, vector<64x256xbf16>
    %cst_268 = arith.constant dense<0.000000e+00> : vector<8x256xf32>
    %1062 = tpu.matmul %1060, %1061, %cst_268 {dimension_numbers = #tpu.dot_dimension_numbers<[1], [0], [0], [1], [0, 0, 1, 1], [], []>} : vector<8x64xbf16>, vector<64x256xbf16>, vector<8x256xf32> -> vector<8x256xf32>
    %1063 = arith.index_cast %1056 : i32 to index
    %c0_269 = arith.constant 0 : index
    %1064 = vector.load %arg12[%1063, %c0_269] : memref<64x256xf32, #tpu.memory_space<vmem>>, vector<8x128xf32>
    %1065 = vector.extract_strided_slice %1062 {offsets = [0, 0], sizes = [8, 128], strides = [1, 1]} : vector<8x256xf32> to vector<8x128xf32>
    %1066 = arith.addf %1064, %1065 : vector<8x128xf32>
    %1067 = vector.extract_strided_slice %1066 {offsets = [0, 0], sizes = [8, 32], strides = [1, 1]} : vector<8x128xf32> to vector<8x32xf32>
    %1068 = arith.negf %1067 : vector<8x32xf32>
    %1069 = math.exp %1068 : vector<8x32xf32>
    %cst_270 = arith.constant 1.000000e+00 : f32
    %1070 = vector.broadcast %cst_270 : f32 to vector<8x32xf32>
    %1071 = arith.addf %1070, %1069 : vector<8x32xf32>
    %1072 = arith.divf %1070, %1071 : vector<8x32xf32>
    %1073 = vector.extract_strided_slice %1066 {offsets = [0, 32], sizes = [8, 32], strides = [1, 1]} : vector<8x128xf32> to vector<8x32xf32>
    %1074 = arith.negf %1073 : vector<8x32xf32>
    %1075 = math.exp %1074 : vector<8x32xf32>
    %cst_271 = arith.constant 1.000000e+00 : f32
    %1076 = vector.broadcast %cst_271 : f32 to vector<8x32xf32>
    %1077 = arith.addf %1076, %1075 : vector<8x32xf32>
    %1078 = arith.divf %1076, %1077 : vector<8x32xf32>
    %1079 = vector.extract_strided_slice %1066 {offsets = [0, 64], sizes = [8, 32], strides = [1, 1]} : vector<8x128xf32> to vector<8x32xf32>
    %1080 = math.tanh %1079 : vector<8x32xf32>
    %1081 = vector.extract_strided_slice %1066 {offsets = [0, 96], sizes = [8, 32], strides = [1, 1]} : vector<8x128xf32> to vector<8x32xf32>
    %1082 = arith.negf %1081 : vector<8x32xf32>
    %1083 = math.exp %1082 : vector<8x32xf32>
    %cst_272 = arith.constant 1.000000e+00 : f32
    %1084 = vector.broadcast %cst_272 : f32 to vector<8x32xf32>
    %1085 = arith.addf %1084, %1083 : vector<8x32xf32>
    %1086 = arith.divf %1084, %1085 : vector<8x32xf32>
    %1087 = arith.mulf %1078, %1018 : vector<8x32xf32>
    %1088 = arith.mulf %1072, %1080 : vector<8x32xf32>
    %1089 = arith.addf %1087, %1088 : vector<8x32xf32>
    %1090 = math.tanh %1089 : vector<8x32xf32>
    %1091 = arith.mulf %1086, %1090 : vector<8x32xf32>
    %1092 = arith.index_cast %1058 : i32 to index
    %c128_273 = arith.constant 128 : index
    %1093 = vector.load %arg12[%1092, %c128_273] : memref<64x256xf32, #tpu.memory_space<vmem>>, vector<8x128xf32>
    %1094 = vector.extract_strided_slice %1062 {offsets = [0, 128], sizes = [8, 128], strides = [1, 1]} : vector<8x256xf32> to vector<8x128xf32>
    %1095 = arith.addf %1093, %1094 : vector<8x128xf32>
    %1096 = vector.extract_strided_slice %1095 {offsets = [0, 0], sizes = [8, 32], strides = [1, 1]} : vector<8x128xf32> to vector<8x32xf32>
    %1097 = arith.negf %1096 : vector<8x32xf32>
    %1098 = math.exp %1097 : vector<8x32xf32>
    %cst_274 = arith.constant 1.000000e+00 : f32
    %1099 = vector.broadcast %cst_274 : f32 to vector<8x32xf32>
    %1100 = arith.addf %1099, %1098 : vector<8x32xf32>
    %1101 = arith.divf %1099, %1100 : vector<8x32xf32>
    %1102 = vector.extract_strided_slice %1095 {offsets = [0, 32], sizes = [8, 32], strides = [1, 1]} : vector<8x128xf32> to vector<8x32xf32>
    %1103 = arith.negf %1102 : vector<8x32xf32>
    %1104 = math.exp %1103 : vector<8x32xf32>
    %cst_275 = arith.constant 1.000000e+00 : f32
    %1105 = vector.broadcast %cst_275 : f32 to vector<8x32xf32>
    %1106 = arith.addf %1105, %1104 : vector<8x32xf32>
    %1107 = arith.divf %1105, %1106 : vector<8x32xf32>
    %1108 = vector.extract_strided_slice %1095 {offsets = [0, 64], sizes = [8, 32], strides = [1, 1]} : vector<8x128xf32> to vector<8x32xf32>
    %1109 = math.tanh %1108 : vector<8x32xf32>
    %1110 = vector.extract_strided_slice %1095 {offsets = [0, 96], sizes = [8, 32], strides = [1, 1]} : vector<8x128xf32> to vector<8x32xf32>
    %1111 = arith.negf %1110 : vector<8x32xf32>
    %1112 = math.exp %1111 : vector<8x32xf32>
    %cst_276 = arith.constant 1.000000e+00 : f32
    %1113 = vector.broadcast %cst_276 : f32 to vector<8x32xf32>
    %1114 = arith.addf %1113, %1112 : vector<8x32xf32>
    %1115 = arith.divf %1113, %1114 : vector<8x32xf32>
    %1116 = arith.mulf %1107, %1047 : vector<8x32xf32>
    %1117 = arith.mulf %1101, %1109 : vector<8x32xf32>
    %1118 = arith.addf %1116, %1117 : vector<8x32xf32>
    %1119 = math.tanh %1118 : vector<8x32xf32>
    %1120 = arith.mulf %1115, %1119 : vector<8x32xf32>
    %1121 = arith.index_cast %1056 : i32 to index
    %c0_277 = arith.constant 0 : index
    %1122 = vector.load %arg10[%1121, %c0_277] : memref<64x32xf32, #tpu.memory_space<vmem>>, vector<8x32xf32>
    tpu.vector_store %arg10[%1121, %c0_277], %1091 {strides = array<i32>} : memref<64x32xf32, #tpu.memory_space<vmem>>, vector<8x32xf32>,
    %1123 = arith.index_cast %1058 : i32 to index
    %c0_278 = arith.constant 0 : index
    %1124 = vector.load %arg11[%1123, %c0_278] : memref<64x32xf32, #tpu.memory_space<vmem>>, vector<8x32xf32>
    tpu.vector_store %arg11[%1123, %c0_278], %1120 {strides = array<i32>} : memref<64x32xf32, #tpu.memory_space<vmem>>, vector<8x32xf32>,
    %c7_i32_279 = arith.constant 7 : i32
    %c0_280 = arith.constant 0 : index
    %c0_281 = arith.constant 0 : index
    %1125 = vector.load %arg10[%c0_280, %c0_281] : memref<64x32xf32, #tpu.memory_space<vmem>>, vector<64x32xf32>
    %1126 = arith.truncf %1125 : vector<64x32xf32> to vector<64x32xbf16>
    %c0_282 = arith.constant 0 : index
    %c0_283 = arith.constant 0 : index
    %1127 = vector.load %arg7[%c0_282, %c0_283] : memref<64x2xbf16, #tpu.memory_space<vmem>>, vector<32x2xbf16>
    %cst_284 = arith.constant dense<0.000000e+00> : vector<64x2xf32>
    %1128 = tpu.matmul %1126, %1127, %cst_284 {dimension_numbers = #tpu.dot_dimension_numbers<[1], [0], [0], [1], [0, 0, 1, 1], [], []>} : vector<64x32xbf16>, vector<32x2xbf16>, vector<64x2xf32> -> vector<64x2xf32>
    %c0_285 = arith.constant 0 : index
    %c0_286 = arith.constant 0 : index
    %1129 = vector.load %arg11[%c0_285, %c0_286] : memref<64x32xf32, #tpu.memory_space<vmem>>, vector<64x32xf32>
    %1130 = arith.truncf %1129 : vector<64x32xf32> to vector<64x32xbf16>
    %c32_287 = arith.constant 32 : index
    %c0_288 = arith.constant 0 : index
    %1131 = vector.load %arg7[%c32_287, %c0_288] : memref<64x2xbf16, #tpu.memory_space<vmem>>, vector<32x2xbf16>
    %cst_289 = arith.constant dense<0.000000e+00> : vector<64x2xf32>
    %1132 = tpu.matmul %1130, %1131, %cst_289 {dimension_numbers = #tpu.dot_dimension_numbers<[1], [0], [0], [1], [0, 0, 1, 1], [], []>} : vector<64x32xbf16>, vector<32x2xbf16>, vector<64x2xf32> -> vector<64x2xf32>
    %1133 = arith.addf %1128, %1132 : vector<64x2xf32>
    %c0_290 = arith.constant 0 : index
    %c0_291 = arith.constant 0 : index
    %1134 = vector.load %arg8[%c0_290, %c0_291] : memref<1x2xf32, #tpu.memory_space<vmem>>, vector<1x2xf32>
    %1135 = vector.broadcast %1134 : vector<1x2xf32> to vector<64x2xf32>
    %1136 = arith.addf %1133, %1135 : vector<64x2xf32>
    %c0_292 = arith.constant 0 : index
    %c0_293 = arith.constant 0 : index
    %1137 = vector.load %arg9[%c0_292, %c0_293] : memref<64x2xf32, #tpu.memory_space<vmem>>, vector<64x2xf32>
    tpu.vector_store %arg9[%c0_292, %c0_293], %1136 {strides = array<i32>} : memref<64x2xf32, #tpu.memory_space<vmem>>, vector<64x2xf32>,
    return
  }
}

</mosaic_0001>

<llo_original>
// kernel: tpu_custom_call.1
$region0: #{tpu_custom_call.1}
  #allocation0 [shape = 'u32[]', space=smem, size = 0x4, offset = 0x4, fixed_abs, tag = 'smem constant byte address 0x4 - core index']
  #allocation1 [shape = 'u32[144,128]{1,0:T(1,128)}', space=vmem, size = 0x12000, scoped, tag = 'internal scratch']
  #allocation2 [shape = 'f32[64,32]{1,0:T(8,128)}', space=vmem, size = 0x8000, scoped, tag = 'scratch operand']
  #allocation3 [shape = 'f32[64,32]{1,0:T(8,128)}', space=vmem, size = 0x8000, scoped, tag = 'scratch operand']
  #allocation4 [shape = 'f32[64,256]{1,0:T(8,128)}', space=vmem, size = 0x10000, scoped, tag = 'scratch operand']
  %s0 = inlined_call_operand.vmem [shape: f32[64,16], index: 0, kind: input, shape index: {}]
  %s1 = inlined_call_operand.hbm [shape: bf16[16,256], index: 1, kind: input, shape index: {}]
  %s2 = inlined_call_operand.vmem [shape: bf16[64,256], index: 2, kind: input, shape index: {}]
  %s3 = inlined_call_operand.hbm [shape: f32[1,256], index: 3, kind: input, shape index: {}]
  %s4 = inlined_call_operand.vmem [shape: bf16[64,256], index: 4, kind: input, shape index: {}]
  %s5 = inlined_call_operand.hbm [shape: bf16[64,256], index: 5, kind: input, shape index: {}]
  %s6 = inlined_call_operand.vmem [shape: f32[1,256], index: 6, kind: input, shape index: {}]
  %s7 = inlined_call_operand.vmem [shape: bf16[64,2], index: 7, kind: input, shape index: {}]
  %s8 = inlined_call_operand.vmem [shape: f32[1,2], index: 8, kind: input, shape index: {}]
  %s9 = inlined_call_operand.vmem [shape: f32[64,2], index: 9, kind: output, shape index: {}]
  %s10 = sld [smem:[#allocation0]]
  $region58: #{tpu_custom_call.1} parent=0
    _
  %s12 = ssub.s32 1, %s10
  %s13 = scalar_select 0, %s12, %s10
  $region1: #{tpu_custom_call.1} parent=0
    #allocation5 [shape = 'u8[8192]{0}', space=vmem, size = 0x2000, scoped, tag = 'input window, operand 1, single buffered']
    #allocation6 [shape = 's32[1]{0}', space=sflag, size = 0x4, scoped, tag = 'scoped memory for tpu_custom_call.1']
    #allocation7 [shape = 'u8[1024]{0}', space=vmem, size = 0x400, scoped, tag = 'input window, operand 3, single buffered']
    #allocation8 [shape = 's32[1]{0}', space=sflag, size = 0x4, scoped, tag = 'scoped memory for tpu_custom_call.1']
    #allocation9 [shape = 'u8[32768]{0}', space=vmem, size = 0x8000, scoped, tag = 'input window, operand 5, single buffered']
    %14 = vsyncpa [#allocation6], 0
    %15 = vsyncpa [#allocation8], 0
    // Predicated region
    $region2: #{tpu_custom_call.1} parent=1 // pred_check
      _
    $region3: #{tpu_custom_call.1} parent=1 // pred_check_branch
      %17 = sbr.rel (0) target = $region5
    $region4: #{tpu_custom_call.1} parent=1 // pred_region
      _
    $region5: #{tpu_custom_call.1} parent=1 // pred_fallthru
      _
    // Predicated region
    $region6: #{tpu_custom_call.1} parent=1 // pred_check
      _
    $region7: #{tpu_custom_call.1} parent=1 // pred_check_branch
      %19 = sbr.rel (0) target = $region9
    $region8: #{tpu_custom_call.1} parent=1 // pred_region
      %s21 = ssub.s32 256, 256
      %22 = vsyncadd [#allocation6], %s21
      %s23 = sshll.u32 [#allocation5], 4
      %s24 = int_to_ptr.vmem [resolvable:$true] %s23
      %29 = dma.hbm_to_vmem [thread:$0]  %s1, 256, %s24, [#allocation6], 128, 128, 8
    $region9: #{tpu_custom_call.1} parent=1 // pred_fallthru
      _
    // Predicated region
    $region10: #{tpu_custom_call.1} parent=1 // pred_check
      _
    $region11: #{tpu_custom_call.1} parent=1 // pred_check_branch
      %31 = sbr.rel (0) target = $region13
    $region12: #{tpu_custom_call.1} parent=1 // pred_region
      _
    $region13: #{tpu_custom_call.1} parent=1 // pred_fallthru
      _
    // Predicated region
    $region14: #{tpu_custom_call.1} parent=1 // pred_check
      _
    $region15: #{tpu_custom_call.1} parent=1 // pred_check_branch
      %33 = sbr.rel (0) target = $region17
    $region16: #{tpu_custom_call.1} parent=1 // pred_region
      %s35 = ssub.s32 32, 32
      %36 = vsyncadd [#allocation8], %s35
      %s38 = sshll.u32 [#allocation7], 4
      %s39 = int_to_ptr.vmem [resolvable:$true] %s38
      %41 = dma.hbm_to_vmem [thread:$0]  %s3, 32, %s39, [#allocation8]
    $region17: #{tpu_custom_call.1} parent=1 // pred_fallthru
      _
    // Predicated region
    $region18: #{tpu_custom_call.1} parent=1 // pred_check
      _
    $region19: #{tpu_custom_call.1} parent=1 // pred_check_branch
      %43 = sbr.rel (0) target = $region21
    $region20: #{tpu_custom_call.1} parent=1 // pred_region
      _
    $region21: #{tpu_custom_call.1} parent=1 // pred_fallthru
      _
    // Predicated region
    $region22: #{tpu_custom_call.1} parent=1 // pred_check
      _
    $region23: #{tpu_custom_call.1} parent=1 // pred_check_branch
      %45 = sbr.rel (0) target = $region25
    $region24: #{tpu_custom_call.1} parent=1 // pred_region
      %s47 = ssub.s32 1024, 1024
      %48 = vsyncadd [#allocation8], %s47
      %s49 = sshll.u32 [#allocation9], 4
      %s50 = int_to_ptr.vmem [resolvable:$true] %s49
      %55 = dma.hbm_to_vmem [thread:$0]  %s5, 1024, %s50, [#allocation8], 128, 128, 8
    $region25: #{tpu_custom_call.1} parent=1 // pred_fallthru
      _
    // Predicated region
    $region26: #{tpu_custom_call.1} parent=1 // pred_check
      _
    $region27: #{tpu_custom_call.1} parent=1 // pred_check_branch
      %57 = sbr.rel (0) target = $region29
    $region28: #{tpu_custom_call.1} parent=1 // pred_region
      _
    $region29: #{tpu_custom_call.1} parent=1 // pred_fallthru
      _
    // Predicated region
    $region30: #{tpu_custom_call.1} parent=1 // pred_check
      _
    $region31: #{tpu_custom_call.1} parent=1 // pred_check_branch
      %59 = sbr.rel (0) target = $region33
    $region32: #{tpu_custom_call.1} parent=1 // pred_region
      _
    $region33: #{tpu_custom_call.1} parent=1 // pred_fallthru
      _
    // Predicated region
    $region34: #{tpu_custom_call.1} parent=1 // pred_check
      _
    $region35: #{tpu_custom_call.1} parent=1 // pred_check_branch
      %61 = sbr.rel (0) target = $region37
    $region36: #{tpu_custom_call.1} parent=1 // pred_region
      _
    $region37: #{tpu_custom_call.1} parent=1 // pred_fallthru
      _
    // Predicated region
    $region38: #{tpu_custom_call.1} parent=1 // pred_check
      _
    $region39: #{tpu_custom_call.1} parent=1 // pred_check_branch
      %63 = sbr.rel (0) target = $region41
    $region40: #{tpu_custom_call.1} parent=1 // pred_region
      %64 = dma.done [#allocation6], 256
    $region41: #{tpu_custom_call.1} parent=1 // pred_fallthru
      _
    // Predicated region
    $region42: #{tpu_custom_call.1} parent=1 // pred_check
      _
    $region43: #{tpu_custom_call.1} parent=1 // pred_check_branch
      %66 = sbr.rel (0) target = $region45
    $region44: #{tpu_custom_call.1} parent=1 // pred_region
      %67 = dma.done [#allocation8], 32
    $region45: #{tpu_custom_call.1} parent=1 // pred_fallthru
      _
    // Predicated region
    $region46: #{tpu_custom_call.1} parent=1 // pred_check
      _
    $region47: #{tpu_custom_call.1} parent=1 // pred_check_branch
      %69 = sbr.rel (0) target = $region49
    $region48: #{tpu_custom_call.1} parent=1 // pred_region
      %70 = dma.done [#allocation8], 1024
    $region49: #{tpu_custom_call.1} parent=1 // pred_fallthru
      _
    %v72 = vld [vmem:[%s0] sm:$0xff]
    %v73 = vld [vmem:[%s0 + $0x8] sm:$0xff]
    %v74 = vld [vmem:[%s0 + $0x10] sm:$0xff]
    %v75 = vld [vmem:[%s0 + $0x18] sm:$0xff]
    %v76 = vld [vmem:[%s0 + $0x20] sm:$0xff]
    %v77 = vld [vmem:[%s0 + $0x28] sm:$0xff]
    %v78 = vld [vmem:[%s0 + $0x30] sm:$0xff]
    %v79 = vld [vmem:[%s0 + $0x38] sm:$0xff]
    %v80 = vpack.c.bf16 %v73, %v72
    %v81 = vpack.c.bf16 %v75, %v74
    %v82 = vpack.c.bf16 %v77, %v76
    %v83 = vpack.c.bf16 %v79, %v78
    %v84 = vld [vmem:[#allocation5] sm:$0xff]
    %v85 = vld [vmem:[#allocation5 + $0x8] sm:$0xff]
    %v86 = vld [vmem:[#allocation7] sm:$0x3]
    %v88 = vlaneseq
    %v89 = vshrl.u32 %v88, 7
    %v90 = vsub.s32 0, %v89
    %v91 = vrot.slane %v86, %v90
    %v92 = vlaneseq
    %v93 = vshrl.u32 %v92, 7
    %v94 = vsub.s32 1, %v93
    %v95 = vrot.slane %v86, %v94
    %v100 = vunpack.c.l.b16 %v84
    %v101 = vunpack.c.h.b16 %v84
    %v102 = vunpack.c.l.b16 %v85
    %v103 = vunpack.c.h.b16 %v85
    %v104 = vpack.c.b16 %v102, %v100
    %v105 = vpack.c.b16 %v103, %v101
    %vm108 = vcmask 130048
    %v110 = vsel %vm108, %v80, 0
    %v113 = vsel %vm108, %v81, 0
    %v116 = vsel %vm108, %v82, 0
    %v119 = vsel %vm108, %v83, 0
    %121 = vmatprep.subr.bf16.mxu0 %v105
    %122 = vmatpush1.bf16.msra.mxu0 %v104
    %123 = vmatprep.subr.bf16.mxu0 0
    %124 = vmatpush1.bf16.msra.mxu0 0
    %125 = vmatprep.subr.bf16.mxu0 0
    %126 = vmatpush1.bf16.msra.mxu0 0
    %127 = vmatprep.subr.bf16.mxu0 0
    %128 = vmatpush1.bf16.msra.mxu0 0
    %129 = vmatprep.subr.bf16.mxu0 0
    %130 = vmatpush1.bf16.msra.mxu0 0
    %131 = vmatprep.subr.bf16.mxu0 0
    %132 = vmatpush1.bf16.msra.mxu0 0
    %133 = vmatprep.subr.bf16.mxu0 0
    %134 = vmatpush1.bf16.msra.mxu0 0
    %135 = vmatprep.subr.bf16.mxu0 0
    %136 = vmatpush1.bf16.msra.mxu0 0
    %137 = vmatprep.subr.bf16.mxu0 0
    %138 = vmatpush1.bf16.msra.mxu0 0
    %139 = vmatprep.subr.bf16.mxu0 0
    %140 = vmatpush1.bf16.msra.mxu0 0
    %141 = vmatprep.subr.bf16.mxu0 0
    %142 = vmatpush1.bf16.msra.mxu0 0
    %143 = vmatprep.subr.bf16.mxu0 0
    %144 = vmatpush1.bf16.msra.mxu0 0
    %145 = vmatprep.subr.bf16.mxu0 0
    %146 = vmatpush1.bf16.msra.mxu0 0
    %147 = vmatprep.subr.bf16.mxu0 0
    %148 = vmatpush1.bf16.msra.mxu0 0
    %149 = vmatprep.subr.bf16.mxu0 0
    %150 = vmatpush1.bf16.msra.mxu0 0
    %151 = vmatprep.subr.bf16.mxu0 0
    %152 = vmatpush1.bf16.msra.mxu0 0
    %153 = vmatprep.mubr.bf16.mxu0 0
    %154 = vmatmul.mubr.bf16.gmra.mrb[0].mxu0 %v110
    %v155 = vpop.f32.mrb[0].mxu0
    %v156 = vadd.f32 %v91, %v155
    %v157 = vpop.f32.mrb[0].mxu0
    %v158 = vadd.f32 %v95, %v157
    %v159 = vpop.f32.mrb[0].mxu0
    %v160 = vadd.f32 %v91, %v159
    %v161 = vpop.f32.mrb[0].mxu0
    %v162 = vadd.f32 %v95, %v161
    %163 = vmatprep.mubr.bf16.mxu0 0
    %164 = vmatmul.mubr.bf16.gmra.mrb[0].mxu0 %v113
    %v165 = vpop.f32.mrb[0].mxu0
    %v166 = vadd.f32 %v91, %v165
    %v167 = vpop.f32.mrb[0].mxu0
    %v168 = vadd.f32 %v95, %v167
    %v169 = vpop.f32.mrb[0].mxu0
    %v170 = vadd.f32 %v91, %v169
    %v171 = vpop.f32.mrb[0].mxu0
    %v172 = vadd.f32 %v95, %v171
    %173 = vmatprep.mubr.bf16.mxu0 0
    %174 = vmatmul.mubr.bf16.gmra.mrb[0].mxu0 %v116
    %v175 = vpop.f32.mrb[0].mxu0
    %v176 = vadd.f32 %v91, %v175
    %v177 = vpop.f32.mrb[0].mxu0
    %v178 = vadd.f32 %v95, %v177
    %v179 = vpop.f32.mrb[0].mxu0
    %v180 = vadd.f32 %v91, %v179
    %v181 = vpop.f32.mrb[0].mxu0
    %v182 = vadd.f32 %v95, %v181
    %183 = vmatprep.mubr.bf16.mxu0 0
    %184 = vmatmul.mubr.bf16.gmra.mrb[0].mxu0 %v119
    %v185 = vpop.f32.mrb[0].mxu0
    %v186 = vadd.f32 %v91, %v185
    %v187 = vpop.f32.mrb[0].mxu0
    %v188 = vadd.f32 %v95, %v187
    %v189 = vpop.f32.mrb[0].mxu0
    %v190 = vadd.f32 %v91, %v189
    %v191 = vpop.f32.mrb[0].mxu0
    %v192 = vadd.f32 %v95, %v191
    %193 = vdwg.mxu0
    %194 = vst [vmem:[#allocation4] sm:$0xff] %v156
    %195 = vst [vmem:[#allocation4 + $0x8] sm:$0xff] %v158
    %196 = vst [vmem:[#allocation4 + $0x10] sm:$0xff] %v160
    %197 = vst [vmem:[#allocation4 + $0x18] sm:$0xff] %v162
    %198 = vst [vmem:[#allocation4 + $0x20] sm:$0xff] %v166
    %199 = vst [vmem:[#allocation4 + $0x28] sm:$0xff] %v168
    %200 = vst [vmem:[#allocation4 + $0x30] sm:$0xff] %v170
    %201 = vst [vmem:[#allocation4 + $0x38] sm:$0xff] %v172
    %202 = vst [vmem:[#allocation4 + $0x40] sm:$0xff] %v176
    %203 = vst [vmem:[#allocation4 + $0x48] sm:$0xff] %v178
    %204 = vst [vmem:[#allocation4 + $0x50] sm:$0xff] %v180
    %205 = vst [vmem:[#allocation4 + $0x58] sm:$0xff] %v182
    %206 = vst [vmem:[#allocation4 + $0x60] sm:$0xff] %v186
    %207 = vst [vmem:[#allocation4 + $0x68] sm:$0xff] %v188
    %208 = vst [vmem:[#allocation4 + $0x70] sm:$0xff] %v190
    %209 = vst [vmem:[#allocation4 + $0x78] sm:$0xff] %v192
    %v210 = vld [vmem:[#allocation4] sm:$0xff]
    %v211 = vxor.u32 %v210, 2147483648
    %v212 = vmul.f32 %v211, 1.442695
    %v213 = vpow.pop %v212
    %v214 = vadd.f32 %v213, 1.0
    %v215 = vrcp.pop %v214
    %v216 = vmul.f32 1.0, %v215
    %v217 = vtanh.pop %v210
    %v218 = vmul.f32 %v216, 0.0
    %220 = vrot.lane.b32.xlu0 %v217, 64
    %v221 = vpop.permute.xlu0 %220
    %v223 = vmul.f32 %v216, %v221
    %225 = vrot.lane.b32.xlu0 %v223, 32
    %v226 = vpop.permute.xlu0 %225
    %v228 = vadd.f32 %v218, %v226
    %v229 = vtanh.pop %v228
    %231 = vrot.lane.b32.xlu0 %v229, 64
    %v232 = vpop.permute.xlu0 %231
    %v234 = vmul.f32 %v216, %v232
    %v235 = vld [vmem:[#allocation4 + $0x78] sm:$0xff]
    %v236 = vxor.u32 %v235, 2147483648
    %v237 = vmul.f32 %v236, 1.442695
    %v238 = vpow.pop %v237
    %v239 = vadd.f32 %v238, 1.0
    %v240 = vrcp.pop %v239
    %v241 = vmul.f32 1.0, %v240
    %v242 = vtanh.pop %v235
    %v243 = vmul.f32 %v241, 0.0
    %245 = vrot.lane.b32.xlu0 %v242, 64
    %v246 = vpop.permute.xlu0 %245
    %v248 = vmul.f32 %v241, %v246
    %250 = vrot.lane.b32.xlu0 %v248, 32
    %v251 = vpop.permute.xlu0 %250
    %v253 = vadd.f32 %v243, %v251
    %v254 = vtanh.pop %v253
    %256 = vrot.lane.b32.xlu0 %v254, 64
    %v257 = vpop.permute.xlu0 %256
    %v259 = vmul.f32 %v241, %v257
    %261 = vrot.lane.b32.xlu0 %v234, 32
    %v262 = vpop.permute.xlu0 %261
    %vm264 = vcmask 261120
    %265 = vst.msk [vmem:[#allocation2] sm:$0xff] %vm264, %v262
    %267 = vrot.lane.b32.xlu0 %v259, 32
    %v268 = vpop.permute.xlu0 %267
    %270 = vst.msk [vmem:[#allocation3 + $0x38] sm:$0xff] %vm264, %v268
    %271 = vrot.lane.b32.xlu0 %v259, 64
    %v272 = vpop.permute.xlu0 %271
    %v274 = vsel %vm264, %v262, %v272
    %v275 = vpack.c.bf16 %v274, %v274
    %v276 = vld [vmem:[%s2] sm:$0xff]
    %v277 = vld [vmem:[%s2 + $0x8] sm:$0xff]
    %v278 = vld [vmem:[%s2 + $0x10] sm:$0xff]
    %v279 = vld [vmem:[%s2 + $0x18] sm:$0xff]
    %v280 = vld [vmem:[%s2 + $0x20] sm:$0xff]
    %v281 = vld [vmem:[%s2 + $0x28] sm:$0xff]
    %v282 = vld [vmem:[%s2 + $0x30] sm:$0xff]
    %v283 = vld [vmem:[%s2 + $0x38] sm:$0xff]
    %v292 = vunpack.c.l.b16 %v276
    %v293 = vunpack.c.h.b16 %v276
    %v294 = vunpack.c.l.b16 %v277
    %v295 = vunpack.c.h.b16 %v277
    %v296 = vunpack.c.l.b16 %v278
    %v297 = vunpack.c.h.b16 %v278
    %v298 = vunpack.c.l.b16 %v279
    %v299 = vunpack.c.h.b16 %v279
    %v300 = vunpack.c.l.b16 %v280
    %v301 = vunpack.c.h.b16 %v280
    %v302 = vunpack.c.l.b16 %v281
    %v303 = vunpack.c.h.b16 %v281
    %v304 = vunpack.c.l.b16 %v282
    %v305 = vunpack.c.h.b16 %v282
    %v306 = vunpack.c.l.b16 %v283
    %v307 = vunpack.c.h.b16 %v283
    %v308 = vpack.c.b16 %v294, %v292
    %v309 = vpack.c.b16 %v295, %v293
    %v310 = vpack.c.b16 %v298, %v296
    %v311 = vpack.c.b16 %v299, %v297
    %v312 = vpack.c.b16 %v302, %v300
    %v313 = vpack.c.b16 %v303, %v301
    %v314 = vpack.c.b16 %v306, %v304
    %v315 = vpack.c.b16 %v307, %v305
    %vm324 = vcmask 523264
    %v326 = vsel %vm324, %v275, 0
    %328 = vmatprep.subr.bf16.mxu0 %v309
    %329 = vmatpush1.bf16.msra.mxu0 %v308
    %330 = vmatprep.subr.bf16.mxu0 %v311
    %331 = vmatpush1.bf16.msra.mxu0 %v310
    %332 = vmatprep.subr.bf16.mxu0 %v313
    %333 = vmatpush1.bf16.msra.mxu0 %v312
    %334 = vmatprep.subr.bf16.mxu0 %v315
    %335 = vmatpush1.bf16.msra.mxu0 %v314
    %336 = vmatprep.subr.bf16.mxu0 0
    %337 = vmatpush1.bf16.msra.mxu0 0
    %338 = vmatprep.subr.bf16.mxu0 0
    %339 = vmatpush1.bf16.msra.mxu0 0
    %340 = vmatprep.subr.bf16.mxu0 0
    %341 = vmatpush1.bf16.msra.mxu0 0
    %342 = vmatprep.subr.bf16.mxu0 0
    %343 = vmatpush1.bf16.msra.mxu0 0
    %344 = vmatprep.subr.bf16.mxu0 0
    %345 = vmatpush1.bf16.msra.mxu0 0
    %346 = vmatprep.subr.bf16.mxu0 0
    %347 = vmatpush1.bf16.msra.mxu0 0
    %348 = vmatprep.subr.bf16.mxu0 0
    %349 = vmatpush1.bf16.msra.mxu0 0
    %350 = vmatprep.subr.bf16.mxu0 0
    %351 = vmatpush1.bf16.msra.mxu0 0
    %352 = vmatprep.subr.bf16.mxu0 0
    %353 = vmatpush1.bf16.msra.mxu0 0
    %354 = vmatprep.subr.bf16.mxu0 0
    %355 = vmatpush1.bf16.msra.mxu0 0
    %356 = vmatprep.subr.bf16.mxu0 0
    %357 = vmatpush1.bf16.msra.mxu0 0
    %358 = vmatprep.subr.bf16.mxu0 0
    %359 = vmatpush1.bf16.msra.mxu0 0
    %360 = vmatprep.mubr.bf16.mxu0 0
    %361 = vmatmul.mubr.bf16.gmra.mrb[0].mxu0 %v326
    %v362 = vpop.f32.mrb[0].mxu0
    %v363 = vadd.f32 0.0, %v362
    %v364 = vpop.f32.mrb[0].mxu0
    %v365 = vadd.f32 0.0, %v364
    %v366 = vpop.f32.mrb[0].mxu0
    %v367 = vpop.f32.mrb[0].mxu0
    %368 = vdwg.mxu0
    %s369 = smul.u32 1, 2
    %s370 = smul.addr %s369, 8
    %s371 = scalar_lea.vmem [#allocation4], %s370
    %v372 = vld [vmem:[%s371] sm:$0xff]
    %v373 = vadd.f32 %v372, %v363
    %v374 = vxor.u32 %v373, 2147483648
    %v375 = vmul.f32 %v374, 1.442695
    %v376 = vpow.pop %v375
    %v377 = vadd.f32 %v376, 1.0
    %v378 = vrcp.pop %v377
    %v379 = vmul.f32 1.0, %v378
    %v380 = vtanh.pop %v373
    %v381 = vmul.f32 %v379, %v228
    %383 = vrot.lane.b32.xlu0 %v380, 64
    %v384 = vpop.permute.xlu0 %383
    %v386 = vmul.f32 %v379, %v384
    %388 = vrot.lane.b32.xlu0 %v386, 32
    %v389 = vpop.permute.xlu0 %388
    %v391 = vadd.f32 %v381, %v389
    %v392 = vtanh.pop %v391
    %394 = vrot.lane.b32.xlu0 %v392, 64
    %v395 = vpop.permute.xlu0 %394
    %v397 = vmul.f32 %v379, %v395
    %s398 = smul.u32 6, 2
    %s399 = smul.addr %s398, 8
    %s400 = scalar_lea.vmem [#allocation4], %s399
    %v401 = vld [vmem:[%s400 + $0x8] sm:$0xff]
    %v402 = vadd.f32 %v401, %v365
    %v403 = vxor.u32 %v402, 2147483648
    %v404 = vmul.f32 %v403, 1.442695
    %v405 = vpow.pop %v404
    %v406 = vadd.f32 %v405, 1.0
    %v407 = vrcp.pop %v406
    %v408 = vmul.f32 1.0, %v407
    %v409 = vtanh.pop %v402
    %v410 = vmul.f32 %v408, %v253
    %412 = vrot.lane.b32.xlu0 %v409, 64
    %v413 = vpop.permute.xlu0 %412
    %v415 = vmul.f32 %v408, %v413
    %417 = vrot.lane.b32.xlu0 %v415, 32
    %v418 = vpop.permute.xlu0 %417
    %v420 = vadd.f32 %v410, %v418
    %v421 = vtanh.pop %v420
    %423 = vrot.lane.b32.xlu0 %v421, 64
    %v424 = vpop.permute.xlu0 %423
    %v426 = vmul.f32 %v408, %v424
    %428 = vrot.lane.b32.xlu0 %v397, 32
    %v429 = vpop.permute.xlu0 %428
    %s431 = scalar_lea.vmem [#allocation2], 8
    %432 = vst.msk [vmem:[%s431] sm:$0xff] %vm264, %v429
    %434 = vrot.lane.b32.xlu0 %v426, 32
    %v435 = vpop.permute.xlu0 %434
    %s437 = scalar_lea.vmem [#allocation3], 48
    %438 = vst.msk [vmem:[%s437] sm:$0xff] %vm264, %v435
    %439 = vrot.lane.b32.xlu0 %v426, 64
    %v440 = vpop.permute.xlu0 %439
    %v442 = vsel %vm264, %v429, %v440
    %v443 = vpack.c.bf16 %v442, %v442
    %v444 = vld [vmem:[%s2] sm:$0xff]
    %v445 = vld [vmem:[%s2 + $0x8] sm:$0xff]
    %v446 = vld [vmem:[%s2 + $0x10] sm:$0xff]
    %v447 = vld [vmem:[%s2 + $0x18] sm:$0xff]
    %v448 = vld [vmem:[%s2 + $0x20] sm:$0xff]
    %v449 = vld [vmem:[%s2 + $0x28] sm:$0xff]
    %v450 = vld [vmem:[%s2 + $0x30] sm:$0xff]
    %v451 = vld [vmem:[%s2 + $0x38] sm:$0xff]
    %v460 = vunpack.c.l.b16 %v444
    %v461 = vunpack.c.h.b16 %v444
    %v462 = vunpack.c.l.b16 %v445
    %v463 = vunpack.c.h.b16 %v445
    %v464 = vunpack.c.l.b16 %v446
    %v465 = vunpack.c.h.b16 %v446
    %v466 = vunpack.c.l.b16 %v447
    %v467 = vunpack.c.h.b16 %v447
    %v468 = vunpack.c.l.b16 %v448
    %v469 = vunpack.c.h.b16 %v448
    %v470 = vunpack.c.l.b16 %v449
    %v471 = vunpack.c.h.b16 %v449
    %v472 = vunpack.c.l.b16 %v450
    %v473 = vunpack.c.h.b16 %v450
    %v474 = vunpack.c.l.b16 %v451
    %v475 = vunpack.c.h.b16 %v451
    %v476 = vpack.c.b16 %v462, %v460
    %v477 = vpack.c.b16 %v463, %v461
    %v478 = vpack.c.b16 %v466, %v464
    %v479 = vpack.c.b16 %v467, %v465
    %v480 = vpack.c.b16 %v470, %v468
    %v481 = vpack.c.b16 %v471, %v469
    %v482 = vpack.c.b16 %v474, %v472
    %v483 = vpack.c.b16 %v475, %v473
    %v493 = vsel %vm324, %v443, 0
    %495 = vmatprep.subr.bf16.mxu0 %v477
    %496 = vmatpush1.bf16.msra.mxu0 %v476
    %497 = vmatprep.subr.bf16.mxu0 %v479
    %498 = vmatpush1.bf16.msra.mxu0 %v478
    %499 = vmatprep.subr.bf16.mxu0 %v481
    %500 = vmatpush1.bf16.msra.mxu0 %v480
    %501 = vmatprep.subr.bf16.mxu0 %v483
    %502 = vmatpush1.bf16.msra.mxu0 %v482
    %503 = vmatprep.subr.bf16.mxu0 0
    %504 = vmatpush1.bf16.msra.mxu0 0
    %505 = vmatprep.subr.bf16.mxu0 0
    %506 = vmatpush1.bf16.msra.mxu0 0
    %507 = vmatprep.subr.bf16.mxu0 0
    %508 = vmatpush1.bf16.msra.mxu0 0
    %509 = vmatprep.subr.bf16.mxu0 0
    %510 = vmatpush1.bf16.msra.mxu0 0
    %511 = vmatprep.subr.bf16.mxu0 0
    %512 = vmatpush1.bf16.msra.mxu0 0
    %513 = vmatprep.subr.bf16.mxu0 0
    %514 = vmatpush1.bf16.msra.mxu0 0
    %515 = vmatprep.subr.bf16.mxu0 0
    %516 = vmatpush1.bf16.msra.mxu0 0
    %517 = vmatprep.subr.bf16.mxu0 0
    %518 = vmatpush1.bf16.msra.mxu0 0
    %519 = vmatprep.subr.bf16.mxu0 0
    %520 = vmatpush1.bf16.msra.mxu0 0
    %521 = vmatprep.subr.bf16.mxu0 0
    %522 = vmatpush1.bf16.msra.mxu0 0
    %523 = vmatprep.subr.bf16.mxu0 0
    %524 = vmatpush1.bf16.msra.mxu0 0
    %525 = vmatprep.subr.bf16.mxu0 0
    %526 = vmatpush1.bf16.msra.mxu0 0
    %527 = vmatprep.mubr.bf16.mxu0 0
    %528 = vmatmul.mubr.bf16.gmra.mrb[0].mxu0 %v493
    %v529 = vpop.f32.mrb[0].mxu0
    %v530 = vadd.f32 0.0, %v529
    %v531 = vpop.f32.mrb[0].mxu0
    %v532 = vadd.f32 0.0, %v531
    %v533 = vpop.f32.mrb[0].mxu0
    %v534 = vpop.f32.mrb[0].mxu0
    %535 = vdwg.mxu0
    %s536 = smul.u32 2, 2
    %s537 = smul.addr %s536, 8
    %s538 = scalar_lea.vmem [#allocation4], %s537
    %v539 = vld [vmem:[%s538] sm:$0xff]
    %v540 = vadd.f32 %v539, %v530
    %v541 = vxor.u32 %v540, 2147483648
    %v542 = vmul.f32 %v541, 1.442695
    %v543 = vpow.pop %v542
    %v544 = vadd.f32 %v543, 1.0
    %v545 = vrcp.pop %v544
    %v546 = vmul.f32 1.0, %v545
    %v547 = vtanh.pop %v540
    %v548 = vmul.f32 %v546, %v391
    %550 = vrot.lane.b32.xlu0 %v547, 64
    %v551 = vpop.permute.xlu0 %550
    %v553 = vmul.f32 %v546, %v551
    %555 = vrot.lane.b32.xlu0 %v553, 32
    %v556 = vpop.permute.xlu0 %555
    %v558 = vadd.f32 %v548, %v556
    %v559 = vtanh.pop %v558
    %561 = vrot.lane.b32.xlu0 %v559, 64
    %v562 = vpop.permute.xlu0 %561
    %v564 = vmul.f32 %v546, %v562
    %s565 = smul.u32 5, 2
    %s566 = smul.addr %s565, 8
    %s567 = scalar_lea.vmem [#allocation4], %s566
    %v568 = vld [vmem:[%s567 + $0x8] sm:$0xff]
    %v569 = vadd.f32 %v568, %v532
    %v570 = vxor.u32 %v569, 2147483648
    %v571 = vmul.f32 %v570, 1.442695
    %v572 = vpow.pop %v571
    %v573 = vadd.f32 %v572, 1.0
    %v574 = vrcp.pop %v573
    %v575 = vmul.f32 1.0, %v574
    %v576 = vtanh.pop %v569
    %v577 = vmul.f32 %v575, %v420
    %579 = vrot.lane.b32.xlu0 %v576, 64
    %v580 = vpop.permute.xlu0 %579
    %v582 = vmul.f32 %v575, %v580
    %584 = vrot.lane.b32.xlu0 %v582, 32
    %v585 = vpop.permute.xlu0 %584
    %v587 = vadd.f32 %v577, %v585
    %v588 = vtanh.pop %v587
    %590 = vrot.lane.b32.xlu0 %v588, 64
    %v591 = vpop.permute.xlu0 %590
    %v593 = vmul.f32 %v575, %v591
    %595 = vrot.lane.b32.xlu0 %v564, 32
    %v596 = vpop.permute.xlu0 %595
    %s598 = scalar_lea.vmem [#allocation2], 16
    %599 = vst.msk [vmem:[%s598] sm:$0xff] %vm264, %v596
    %601 = vrot.lane.b32.xlu0 %v593, 32
    %v602 = vpop.permute.xlu0 %601
    %s604 = scalar_lea.vmem [#allocation3], 40
    %605 = vst.msk [vmem:[%s604] sm:$0xff] %vm264, %v602
    %606 = vrot.lane.b32.xlu0 %v593, 64
    %v607 = vpop.permute.xlu0 %606
    %v609 = vsel %vm264, %v596, %v607
    %v610 = vpack.c.bf16 %v609, %v609
    %v611 = vld [vmem:[%s2] sm:$0xff]
    %v612 = vld [vmem:[%s2 + $0x8] sm:$0xff]
    %v613 = vld [vmem:[%s2 + $0x10] sm:$0xff]
    %v614 = vld [vmem:[%s2 + $0x18] sm:$0xff]
    %v615 = vld [vmem:[%s2 + $0x20] sm:$0xff]
    %v616 = vld [vmem:[%s2 + $0x28] sm:$0xff]
    %v617 = vld [vmem:[%s2 + $0x30] sm:$0xff]
    %v618 = vld [vmem:[%s2 + $0x38] sm:$0xff]
    %v627 = vunpack.c.l.b16 %v611
    %v628 = vunpack.c.h.b16 %v611
    %v629 = vunpack.c.l.b16 %v612
    %v630 = vunpack.c.h.b16 %v612
    %v631 = vunpack.c.l.b16 %v613
    %v632 = vunpack.c.h.b16 %v613
    %v633 = vunpack.c.l.b16 %v614
    %v634 = vunpack.c.h.b16 %v614
    %v635 = vunpack.c.l.b16 %v615
    %v636 = vunpack.c.h.b16 %v615
    %v637 = vunpack.c.l.b16 %v616
    %v638 = vunpack.c.h.b16 %v616
    %v639 = vunpack.c.l.b16 %v617
    %v640 = vunpack.c.h.b16 %v617
    %v641 = vunpack.c.l.b16 %v618
    %v642 = vunpack.c.h.b16 %v618
    %v643 = vpack.c.b16 %v629, %v627
    %v644 = vpack.c.b16 %v630, %v628
    %v645 = vpack.c.b16 %v633, %v631
    %v646 = vpack.c.b16 %v634, %v632
    %v647 = vpack.c.b16 %v637, %v635
    %v648 = vpack.c.b16 %v638, %v636
    %v649 = vpack.c.b16 %v641, %v639
    %v650 = vpack.c.b16 %v642, %v640
    %v660 = vsel %vm324, %v610, 0
    %662 = vmatprep.subr.bf16.mxu0 %v644
    %663 = vmatpush1.bf16.msra.mxu0 %v643
    %664 = vmatprep.subr.bf16.mxu0 %v646
    %665 = vmatpush1.bf16.msra.mxu0 %v645
    %666 = vmatprep.subr.bf16.mxu0 %v648
    %667 = vmatpush1.bf16.msra.mxu0 %v647
    %668 = vmatprep.subr.bf16.mxu0 %v650
    %669 = vmatpush1.bf16.msra.mxu0 %v649
    %670 = vmatprep.subr.bf16.mxu0 0
    %671 = vmatpush1.bf16.msra.mxu0 0
    %672 = vmatprep.subr.bf16.mxu0 0
    %673 = vmatpush1.bf16.msra.mxu0 0
    %674 = vmatprep.subr.bf16.mxu0 0
    %675 = vmatpush1.bf16.msra.mxu0 0
    %676 = vmatprep.subr.bf16.mxu0 0
    %677 = vmatpush1.bf16.msra.mxu0 0
    %678 = vmatprep.subr.bf16.mxu0 0
    %679 = vmatpush1.bf16.msra.mxu0 0
    %680 = vmatprep.subr.bf16.mxu0 0
    %681 = vmatpush1.bf16.msra.mxu0 0
    %682 = vmatprep.subr.bf16.mxu0 0
    %683 = vmatpush1.bf16.msra.mxu0 0
    %684 = vmatprep.subr.bf16.mxu0 0
    %685 = vmatpush1.bf16.msra.mxu0 0
    %686 = vmatprep.subr.bf16.mxu0 0
    %687 = vmatpush1.bf16.msra.mxu0 0
    %688 = vmatprep.subr.bf16.mxu0 0
    %689 = vmatpush1.bf16.msra.mxu0 0
    %690 = vmatprep.subr.bf16.mxu0 0
    %691 = vmatpush1.bf16.msra.mxu0 0
    %692 = vmatprep.subr.bf16.mxu0 0
    %693 = vmatpush1.bf16.msra.mxu0 0
    %694 = vmatprep.mubr.bf16.mxu0 0
    %695 = vmatmul.mubr.bf16.gmra.mrb[0].mxu0 %v660
    %v696 = vpop.f32.mrb[0].mxu0
    %v697 = vadd.f32 0.0, %v696
    %v698 = vpop.f32.mrb[0].mxu0
    %v699 = vadd.f32 0.0, %v698
    %v700 = vpop.f32.mrb[0].mxu0
    %v701 = vpop.f32.mrb[0].mxu0
    %702 = vdwg.mxu0
    %s703 = smul.u32 3, 2
    %s704 = smul.addr %s703, 8
    %s705 = scalar_lea.vmem [#allocation4], %s704
    %v706 = vld [vmem:[%s705] sm:$0xff]
    %v707 = vadd.f32 %v706, %v697
    %v708 = vxor.u32 %v707, 2147483648
    %v709 = vmul.f32 %v708, 1.442695
    %v710 = vpow.pop %v709
    %v711 = vadd.f32 %v710, 1.0
    %v712 = vrcp.pop %v711
    %v713 = vmul.f32 1.0, %v712
    %v714 = vtanh.pop %v707
    %v715 = vmul.f32 %v713, %v558
    %717 = vrot.lane.b32.xlu0 %v714, 64
    %v718 = vpop.permute.xlu0 %717
    %v720 = vmul.f32 %v713, %v718
    %722 = vrot.lane.b32.xlu0 %v720, 32
    %v723 = vpop.permute.xlu0 %722
    %v725 = vadd.f32 %v715, %v723
    %v726 = vtanh.pop %v725
    %728 = vrot.lane.b32.xlu0 %v726, 64
    %v729 = vpop.permute.xlu0 %728
    %v731 = vmul.f32 %v713, %v729
    %s732 = smul.u32 4, 2
    %s733 = smul.addr %s732, 8
    %s734 = scalar_lea.vmem [#allocation4], %s733
    %v735 = vld [vmem:[%s734 + $0x8] sm:$0xff]
    %v736 = vadd.f32 %v735, %v699
    %v737 = vxor.u32 %v736, 2147483648
    %v738 = vmul.f32 %v737, 1.442695
    %v739 = vpow.pop %v738
    %v740 = vadd.f32 %v739, 1.0
    %v741 = vrcp.pop %v740
    %v742 = vmul.f32 1.0, %v741
    %v743 = vtanh.pop %v736
    %v744 = vmul.f32 %v742, %v587
    %746 = vrot.lane.b32.xlu0 %v743, 64
    %v747 = vpop.permute.xlu0 %746
    %v749 = vmul.f32 %v742, %v747
    %751 = vrot.lane.b32.xlu0 %v749, 32
    %v752 = vpop.permute.xlu0 %751
    %v754 = vadd.f32 %v744, %v752
    %v755 = vtanh.pop %v754
    %757 = vrot.lane.b32.xlu0 %v755, 64
    %v758 = vpop.permute.xlu0 %757
    %v760 = vmul.f32 %v742, %v758
    %762 = vrot.lane.b32.xlu0 %v731, 32
    %v763 = vpop.permute.xlu0 %762
    %s765 = scalar_lea.vmem [#allocation2], 24
    %766 = vst.msk [vmem:[%s765] sm:$0xff] %vm264, %v763
    %768 = vrot.lane.b32.xlu0 %v760, 32
    %v769 = vpop.permute.xlu0 %768
    %s771 = scalar_lea.vmem [#allocation3], 32
    %772 = vst.msk [vmem:[%s771] sm:$0xff] %vm264, %v769
    %773 = vrot.lane.b32.xlu0 %v760, 64
    %v774 = vpop.permute.xlu0 %773
    %v776 = vsel %vm264, %v763, %v774
    %v777 = vpack.c.bf16 %v776, %v776
    %v778 = vld [vmem:[%s2] sm:$0xff]
    %v779 = vld [vmem:[%s2 + $0x8] sm:$0xff]
    %v780 = vld [vmem:[%s2 + $0x10] sm:$0xff]
    %v781 = vld [vmem:[%s2 + $0x18] sm:$0xff]
    %v782 = vld [vmem:[%s2 + $0x20] sm:$0xff]
    %v783 = vld [vmem:[%s2 + $0x28] sm:$0xff]
    %v784 = vld [vmem:[%s2 + $0x30] sm:$0xff]
    %v785 = vld [vmem:[%s2 + $0x38] sm:$0xff]
    %v794 = vunpack.c.l.b16 %v778
    %v795 = vunpack.c.h.b16 %v778
    %v796 = vunpack.c.l.b16 %v779
    %v797 = vunpack.c.h.b16 %v779
    %v798 = vunpack.c.l.b16 %v780
    %v799 = vunpack.c.h.b16 %v780
    %v800 = vunpack.c.l.b16 %v781
    %v801 = vunpack.c.h.b16 %v781
    %v802 = vunpack.c.l.b16 %v782
    %v803 = vunpack.c.h.b16 %v782
    %v804 = vunpack.c.l.b16 %v783
    %v805 = vunpack.c.h.b16 %v783
    %v806 = vunpack.c.l.b16 %v784
    %v807 = vunpack.c.h.b16 %v784
    %v808 = vunpack.c.l.b16 %v785
    %v809 = vunpack.c.h.b16 %v785
    %v810 = vpack.c.b16 %v796, %v794
    %v811 = vpack.c.b16 %v797, %v795
    %v812 = vpack.c.b16 %v800, %v798
    %v813 = vpack.c.b16 %v801, %v799
    %v814 = vpack.c.b16 %v804, %v802
    %v815 = vpack.c.b16 %v805, %v803
    %v816 = vpack.c.b16 %v808, %v806
    %v817 = vpack.c.b16 %v809, %v807
    %v827 = vsel %vm324, %v777, 0
    %829 = vmatprep.subr.bf16.mxu0 %v811
    %830 = vmatpush1.bf16.msra.mxu0 %v810
    %831 = vmatprep.subr.bf16.mxu0 %v813
    %832 = vmatpush1.bf16.msra.mxu0 %v812
    %833 = vmatprep.subr.bf16.mxu0 %v815
    %834 = vmatpush1.bf16.msra.mxu0 %v814
    %835 = vmatprep.subr.bf16.mxu0 %v817
    %836 = vmatpush1.bf16.msra.mxu0 %v816
    %837 = vmatprep.subr.bf16.mxu0 0
    %838 = vmatpush1.bf16.msra.mxu0 0
    %839 = vmatprep.subr.bf16.mxu0 0
    %840 = vmatpush1.bf16.msra.mxu0 0
    %841 = vmatprep.subr.bf16.mxu0 0
    %842 = vmatpush1.bf16.msra.mxu0 0
    %843 = vmatprep.subr.bf16.mxu0 0
    %844 = vmatpush1.bf16.msra.mxu0 0
    %845 = vmatprep.subr.bf16.mxu0 0
    %846 = vmatpush1.bf16.msra.mxu0 0
    %847 = vmatprep.subr.bf16.mxu0 0
    %848 = vmatpush1.bf16.msra.mxu0 0
    %849 = vmatprep.subr.bf16.mxu0 0
    %850 = vmatpush1.bf16.msra.mxu0 0
    %851 = vmatprep.subr.bf16.mxu0 0
    %852 = vmatpush1.bf16.msra.mxu0 0
    %853 = vmatprep.subr.bf16.mxu0 0
    %854 = vmatpush1.bf16.msra.mxu0 0
    %855 = vmatprep.subr.bf16.mxu0 0
    %856 = vmatpush1.bf16.msra.mxu0 0
    %857 = vmatprep.subr.bf16.mxu0 0
    %858 = vmatpush1.bf16.msra.mxu0 0
    %859 = vmatprep.subr.bf16.mxu0 0
    %860 = vmatpush1.bf16.msra.mxu0 0
    %861 = vmatprep.mubr.bf16.mxu0 0
    %862 = vmatmul.mubr.bf16.gmra.mrb[0].mxu0 %v827
    %v863 = vpop.f32.mrb[0].mxu0
    %v864 = vadd.f32 0.0, %v863
    %v865 = vpop.f32.mrb[0].mxu0
    %v866 = vadd.f32 0.0, %v865
    %v867 = vpop.f32.mrb[0].mxu0
    %v868 = vpop.f32.mrb[0].mxu0
    %869 = vdwg.mxu0
    %v870 = vld [vmem:[%s734] sm:$0xff]
    %v871 = vadd.f32 %v870, %v864
    %v872 = vxor.u32 %v871, 2147483648
    %v873 = vmul.f32 %v872, 1.442695
    %v874 = vpow.pop %v873
    %v875 = vadd.f32 %v874, 1.0
    %v876 = vrcp.pop %v875
    %v877 = vmul.f32 1.0, %v876
    %v878 = vtanh.pop %v871
    %v879 = vmul.f32 %v877, %v725
    %881 = vrot.lane.b32.xlu0 %v878, 64
    %v882 = vpop.permute.xlu0 %881
    %v884 = vmul.f32 %v877, %v882
    %886 = vrot.lane.b32.xlu0 %v884, 32
    %v887 = vpop.permute.xlu0 %886
    %v889 = vadd.f32 %v879, %v887
    %v890 = vtanh.pop %v889
    %892 = vrot.lane.b32.xlu0 %v890, 64
    %v893 = vpop.permute.xlu0 %892
    %v895 = vmul.f32 %v877, %v893
    %v896 = vld [vmem:[%s705 + $0x8] sm:$0xff]
    %v897 = vadd.f32 %v896, %v866
    %v898 = vxor.u32 %v897, 2147483648
    %v899 = vmul.f32 %v898, 1.442695
    %v900 = vpow.pop %v899
    %v901 = vadd.f32 %v900, 1.0
    %v902 = vrcp.pop %v901
    %v903 = vmul.f32 1.0, %v902
    %v904 = vtanh.pop %v897
    %v905 = vmul.f32 %v903, %v754
    %907 = vrot.lane.b32.xlu0 %v904, 64
    %v908 = vpop.permute.xlu0 %907
    %v910 = vmul.f32 %v903, %v908
    %912 = vrot.lane.b32.xlu0 %v910, 32
    %v913 = vpop.permute.xlu0 %912
    %v915 = vadd.f32 %v905, %v913
    %v916 = vtanh.pop %v915
    %918 = vrot.lane.b32.xlu0 %v916, 64
    %v919 = vpop.permute.xlu0 %918
    %v921 = vmul.f32 %v903, %v919
    %923 = vrot.lane.b32.xlu0 %v895, 32
    %v924 = vpop.permute.xlu0 %923
    %s926 = scalar_lea.vmem [#allocation2], 32
    %927 = vst.msk [vmem:[%s926] sm:$0xff] %vm264, %v924
    %929 = vrot.lane.b32.xlu0 %v921, 32
    %v930 = vpop.permute.xlu0 %929
    %s932 = scalar_lea.vmem [#allocation3], 24
    %933 = vst.msk [vmem:[%s932] sm:$0xff] %vm264, %v930
    %934 = vrot.lane.b32.xlu0 %v921, 64
    %v935 = vpop.permute.xlu0 %934
    %v937 = vsel %vm264, %v924, %v935
    %v938 = vpack.c.bf16 %v937, %v937
    %v939 = vld [vmem:[%s2] sm:$0xff]
    %v940 = vld [vmem:[%s2 + $0x8] sm:$0xff]
    %v941 = vld [vmem:[%s2 + $0x10] sm:$0xff]
    %v942 = vld [vmem:[%s2 + $0x18] sm:$0xff]
    %v943 = vld [vmem:[%s2 + $0x20] sm:$0xff]
    %v944 = vld [vmem:[%s2 + $0x28] sm:$0xff]
    %v945 = vld [vmem:[%s2 + $0x30] sm:$0xff]
    %v946 = vld [vmem:[%s2 + $0x38] sm:$0xff]
    %v955 = vunpack.c.l.b16 %v939
    %v956 = vunpack.c.h.b16 %v939
    %v957 = vunpack.c.l.b16 %v940
    %v958 = vunpack.c.h.b16 %v940
    %v959 = vunpack.c.l.b16 %v941
    %v960 = vunpack.c.h.b16 %v941
    %v961 = vunpack.c.l.b16 %v942
    %v962 = vunpack.c.h.b16 %v942
    %v963 = vunpack.c.l.b16 %v943
    %v964 = vunpack.c.h.b16 %v943
    %v965 = vunpack.c.l.b16 %v944
    %v966 = vunpack.c.h.b16 %v944
    %v967 = vunpack.c.l.b16 %v945
    %v968 = vunpack.c.h.b16 %v945
    %v969 = vunpack.c.l.b16 %v946
    %v970 = vunpack.c.h.b16 %v946
    %v971 = vpack.c.b16 %v957, %v955
    %v972 = vpack.c.b16 %v958, %v956
    %v973 = vpack.c.b16 %v961, %v959
    %v974 = vpack.c.b16 %v962, %v960
    %v975 = vpack.c.b16 %v965, %v963
    %v976 = vpack.c.b16 %v966, %v964
    %v977 = vpack.c.b16 %v969, %v967
    %v978 = vpack.c.b16 %v970, %v968
    %v988 = vsel %vm324, %v938, 0
    %990 = vmatprep.subr.bf16.mxu0 %v972
    %991 = vmatpush1.bf16.msra.mxu0 %v971
    %992 = vmatprep.subr.bf16.mxu0 %v974
    %993 = vmatpush1.bf16.msra.mxu0 %v973
    %994 = vmatprep.subr.bf16.mxu0 %v976
    %995 = vmatpush1.bf16.msra.mxu0 %v975
    %996 = vmatprep.subr.bf16.mxu0 %v978
    %997 = vmatpush1.bf16.msra.mxu0 %v977
    %998 = vmatprep.subr.bf16.mxu0 0
    %999 = vmatpush1.bf16.msra.mxu0 0
    %1000 = vmatprep.subr.bf16.mxu0 0
    %1001 = vmatpush1.bf16.msra.mxu0 0
    %1002 = vmatprep.subr.bf16.mxu0 0
    %1003 = vmatpush1.bf16.msra.mxu0 0
    %1004 = vmatprep.subr.bf16.mxu0 0
    %1005 = vmatpush1.bf16.msra.mxu0 0
    %1006 = vmatprep.subr.bf16.mxu0 0
    %1007 = vmatpush1.bf16.msra.mxu0 0
    %1008 = vmatprep.subr.bf16.mxu0 0
    %1009 = vmatpush1.bf16.msra.mxu0 0
    %1010 = vmatprep.subr.bf16.mxu0 0
    %1011 = vmatpush1.bf16.msra.mxu0 0
    %1012 = vmatprep.subr.bf16.mxu0 0
    %1013 = vmatpush1.bf16.msra.mxu0 0
    %1014 = vmatprep.subr.bf16.mxu0 0
    %1015 = vmatpush1.bf16.msra.mxu0 0
    %1016 = vmatprep.subr.bf16.mxu0 0
    %1017 = vmatpush1.bf16.msra.mxu0 0
    %1018 = vmatprep.subr.bf16.mxu0 0
    %1019 = vmatpush1.bf16.msra.mxu0 0
    %1020 = vmatprep.subr.bf16.mxu0 0
    %1021 = vmatpush1.bf16.msra.mxu0 0
    %1022 = vmatprep.mubr.bf16.mxu0 0
    %1023 = vmatmul.mubr.bf16.gmra.mrb[0].mxu0 %v988
    %v1024 = vpop.f32.mrb[0].mxu0
    %v1025 = vadd.f32 0.0, %v1024
    %v1026 = vpop.f32.mrb[0].mxu0
    %v1027 = vadd.f32 0.0, %v1026
    %v1028 = vpop.f32.mrb[0].mxu0
    %v1029 = vpop.f32.mrb[0].mxu0
    %1030 = vdwg.mxu0
    %v1031 = vld [vmem:[%s567] sm:$0xff]
    %v1032 = vadd.f32 %v1031, %v1025
    %v1033 = vxor.u32 %v1032, 2147483648
    %v1034 = vmul.f32 %v1033, 1.442695
    %v1035 = vpow.pop %v1034
    %v1036 = vadd.f32 %v1035, 1.0
    %v1037 = vrcp.pop %v1036
    %v1038 = vmul.f32 1.0, %v1037
    %v1039 = vtanh.pop %v1032
    %v1040 = vmul.f32 %v1038, %v889
    %1042 = vrot.lane.b32.xlu0 %v1039, 64
    %v1043 = vpop.permute.xlu0 %1042
    %v1045 = vmul.f32 %v1038, %v1043
    %1047 = vrot.lane.b32.xlu0 %v1045, 32
    %v1048 = vpop.permute.xlu0 %1047
    %v1050 = vadd.f32 %v1040, %v1048
    %v1051 = vtanh.pop %v1050
    %1053 = vrot.lane.b32.xlu0 %v1051, 64
    %v1054 = vpop.permute.xlu0 %1053
    %v1056 = vmul.f32 %v1038, %v1054
    %v1057 = vld [vmem:[%s538 + $0x8] sm:$0xff]
    %v1058 = vadd.f32 %v1057, %v1027
    %v1059 = vxor.u32 %v1058, 2147483648
    %v1060 = vmul.f32 %v1059, 1.442695
    %v1061 = vpow.pop %v1060
    %v1062 = vadd.f32 %v1061, 1.0
    %v1063 = vrcp.pop %v1062
    %v1064 = vmul.f32 1.0, %v1063
    %v1065 = vtanh.pop %v1058
    %v1066 = vmul.f32 %v1064, %v915
    %1068 = vrot.lane.b32.xlu0 %v1065, 64
    %v1069 = vpop.permute.xlu0 %1068
    %v1071 = vmul.f32 %v1064, %v1069
    %1073 = vrot.lane.b32.xlu0 %v1071, 32
    %v1074 = vpop.permute.xlu0 %1073
    %v1076 = vadd.f32 %v1066, %v1074
    %v1077 = vtanh.pop %v1076
    %1079 = vrot.lane.b32.xlu0 %v1077, 64
    %v1080 = vpop.permute.xlu0 %1079
    %v1082 = vmul.f32 %v1064, %v1080
    %1084 = vrot.lane.b32.xlu0 %v1056, 32
    %v1085 = vpop.permute.xlu0 %1084
    %s1087 = scalar_lea.vmem [#allocation2], 40
    %1088 = vst.msk [vmem:[%s1087] sm:$0xff] %vm264, %v1085
    %1090 = vrot.lane.b32.xlu0 %v1082, 32
    %v1091 = vpop.permute.xlu0 %1090
    %s1093 = scalar_lea.vmem [#allocation3], 16
    %1094 = vst.msk [vmem:[%s1093] sm:$0xff] %vm264, %v1091
    %1095 = vrot.lane.b32.xlu0 %v1082, 64
    %v1096 = vpop.permute.xlu0 %1095
    %v1098 = vsel %vm264, %v1085, %v1096
    %v1099 = vpack.c.bf16 %v1098, %v1098
    %v1100 = vld [vmem:[%s2] sm:$0xff]
    %v1101 = vld [vmem:[%s2 + $0x8] sm:$0xff]
    %v1102 = vld [vmem:[%s2 + $0x10] sm:$0xff]
    %v1103 = vld [vmem:[%s2 + $0x18] sm:$0xff]
    %v1104 = vld [vmem:[%s2 + $0x20] sm:$0xff]
    %v1105 = vld [vmem:[%s2 + $0x28] sm:$0xff]
    %v1106 = vld [vmem:[%s2 + $0x30] sm:$0xff]
    %v1107 = vld [vmem:[%s2 + $0x38] sm:$0xff]
    %v1116 = vunpack.c.l.b16 %v1100
    %v1117 = vunpack.c.h.b16 %v1100
    %v1118 = vunpack.c.l.b16 %v1101
    %v1119 = vunpack.c.h.b16 %v1101
    %v1120 = vunpack.c.l.b16 %v1102
    %v1121 = vunpack.c.h.b16 %v1102
    %v1122 = vunpack.c.l.b16 %v1103
    %v1123 = vunpack.c.h.b16 %v1103
    %v1124 = vunpack.c.l.b16 %v1104
    %v1125 = vunpack.c.h.b16 %v1104
    %v1126 = vunpack.c.l.b16 %v1105
    %v1127 = vunpack.c.h.b16 %v1105
    %v1128 = vunpack.c.l.b16 %v1106
    %v1129 = vunpack.c.h.b16 %v1106
    %v1130 = vunpack.c.l.b16 %v1107
    %v1131 = vunpack.c.h.b16 %v1107
    %v1132 = vpack.c.b16 %v1118, %v1116
    %v1133 = vpack.c.b16 %v1119, %v1117
    %v1134 = vpack.c.b16 %v1122, %v1120
    %v1135 = vpack.c.b16 %v1123, %v1121
    %v1136 = vpack.c.b16 %v1126, %v1124
    %v1137 = vpack.c.b16 %v1127, %v1125
    %v1138 = vpack.c.b16 %v1130, %v1128
    %v1139 = vpack.c.b16 %v1131, %v1129
    %v1149 = vsel %vm324, %v1099, 0
    %1151 = vmatprep.subr.bf16.mxu0 %v1133
    %1152 = vmatpush1.bf16.msra.mxu0 %v1132
    %1153 = vmatprep.subr.bf16.mxu0 %v1135
    %1154 = vmatpush1.bf16.msra.mxu0 %v1134
    %1155 = vmatprep.subr.bf16.mxu0 %v1137
    %1156 = vmatpush1.bf16.msra.mxu0 %v1136
    %1157 = vmatprep.subr.bf16.mxu0 %v1139
    %1158 = vmatpush1.bf16.msra.mxu0 %v1138
    %1159 = vmatprep.subr.bf16.mxu0 0
    %1160 = vmatpush1.bf16.msra.mxu0 0
    %1161 = vmatprep.subr.bf16.mxu0 0
    %1162 = vmatpush1.bf16.msra.mxu0 0
    %1163 = vmatprep.subr.bf16.mxu0 0
    %1164 = vmatpush1.bf16.msra.mxu0 0
    %1165 = vmatprep.subr.bf16.mxu0 0
    %1166 = vmatpush1.bf16.msra.mxu0 0
    %1167 = vmatprep.subr.bf16.mxu0 0
    %1168 = vmatpush1.bf16.msra.mxu0 0
    %1169 = vmatprep.subr.bf16.mxu0 0
    %1170 = vmatpush1.bf16.msra.mxu0 0
    %1171 = vmatprep.subr.bf16.mxu0 0
    %1172 = vmatpush1.bf16.msra.mxu0 0
    %1173 = vmatprep.subr.bf16.mxu0 0
    %1174 = vmatpush1.bf16.msra.mxu0 0
    %1175 = vmatprep.subr.bf16.mxu0 0
    %1176 = vmatpush1.bf16.msra.mxu0 0
    %1177 = vmatprep.subr.bf16.mxu0 0
    %1178 = vmatpush1.bf16.msra.mxu0 0
    %1179 = vmatprep.subr.bf16.mxu0 0
    %1180 = vmatpush1.bf16.msra.mxu0 0
    %1181 = vmatprep.subr.bf16.mxu0 0
    %1182 = vmatpush1.bf16.msra.mxu0 0
    %1183 = vmatprep.mubr.bf16.mxu0 0
    %1184 = vmatmul.mubr.bf16.gmra.mrb[0].mxu0 %v1149
    %v1185 = vpop.f32.mrb[0].mxu0
    %v1186 = vadd.f32 0.0, %v1185
    %v1187 = vpop.f32.mrb[0].mxu0
    %v1188 = vadd.f32 0.0, %v1187
    %v1189 = vpop.f32.mrb[0].mxu0
    %v1190 = vpop.f32.mrb[0].mxu0
    %1191 = vdwg.mxu0
    %v1192 = vld [vmem:[%s400] sm:$0xff]
    %v1193 = vadd.f32 %v1192, %v1186
    %v1194 = vxor.u32 %v1193, 2147483648
    %v1195 = vmul.f32 %v1194, 1.442695
    %v1196 = vpow.pop %v1195
    %v1197 = vadd.f32 %v1196, 1.0
    %v1198 = vrcp.pop %v1197
    %v1199 = vmul.f32 1.0, %v1198
    %v1200 = vtanh.pop %v1193
    %v1201 = vmul.f32 %v1199, %v1050
    %1203 = vrot.lane.b32.xlu0 %v1200, 64
    %v1204 = vpop.permute.xlu0 %1203
    %v1206 = vmul.f32 %v1199, %v1204
    %1208 = vrot.lane.b32.xlu0 %v1206, 32
    %v1209 = vpop.permute.xlu0 %1208
    %v1211 = vadd.f32 %v1201, %v1209
    %v1212 = vtanh.pop %v1211
    %1214 = vrot.lane.b32.xlu0 %v1212, 64
    %v1215 = vpop.permute.xlu0 %1214
    %v1217 = vmul.f32 %v1199, %v1215
    %v1218 = vld [vmem:[%s371 + $0x8] sm:$0xff]
    %v1219 = vadd.f32 %v1218, %v1188
    %v1220 = vxor.u32 %v1219, 2147483648
    %v1221 = vmul.f32 %v1220, 1.442695
    %v1222 = vpow.pop %v1221
    %v1223 = vadd.f32 %v1222, 1.0
    %v1224 = vrcp.pop %v1223
    %v1225 = vmul.f32 1.0, %v1224
    %v1226 = vtanh.pop %v1219
    %v1227 = vmul.f32 %v1225, %v1076
    %1229 = vrot.lane.b32.xlu0 %v1226, 64
    %v1230 = vpop.permute.xlu0 %1229
    %v1232 = vmul.f32 %v1225, %v1230
    %1234 = vrot.lane.b32.xlu0 %v1232, 32
    %v1235 = vpop.permute.xlu0 %1234
    %v1237 = vadd.f32 %v1227, %v1235
    %v1238 = vtanh.pop %v1237
    %1240 = vrot.lane.b32.xlu0 %v1238, 64
    %v1241 = vpop.permute.xlu0 %1240
    %v1243 = vmul.f32 %v1225, %v1241
    %1245 = vrot.lane.b32.xlu0 %v1217, 32
    %v1246 = vpop.permute.xlu0 %1245
    %s1248 = scalar_lea.vmem [#allocation2], 48
    %1249 = vst.msk [vmem:[%s1248] sm:$0xff] %vm264, %v1246
    %1251 = vrot.lane.b32.xlu0 %v1243, 32
    %v1252 = vpop.permute.xlu0 %1251
    %s1254 = scalar_lea.vmem [#allocation3], 8
    %1255 = vst.msk [vmem:[%s1254] sm:$0xff] %vm264, %v1252
    %1256 = vrot.lane.b32.xlu0 %v1243, 64
    %v1257 = vpop.permute.xlu0 %1256
    %v1259 = vsel %vm264, %v1246, %v1257
    %v1260 = vpack.c.bf16 %v1259, %v1259
    %v1261 = vld [vmem:[%s2] sm:$0xff]
    %v1262 = vld [vmem:[%s2 + $0x8] sm:$0xff]
    %v1263 = vld [vmem:[%s2 + $0x10] sm:$0xff]
    %v1264 = vld [vmem:[%s2 + $0x18] sm:$0xff]
    %v1265 = vld [vmem:[%s2 + $0x20] sm:$0xff]
    %v1266 = vld [vmem:[%s2 + $0x28] sm:$0xff]
    %v1267 = vld [vmem:[%s2 + $0x30] sm:$0xff]
    %v1268 = vld [vmem:[%s2 + $0x38] sm:$0xff]
    %v1277 = vunpack.c.l.b16 %v1261
    %v1278 = vunpack.c.h.b16 %v1261
    %v1279 = vunpack.c.l.b16 %v1262
    %v1280 = vunpack.c.h.b16 %v1262
    %v1281 = vunpack.c.l.b16 %v1263
    %v1282 = vunpack.c.h.b16 %v1263
    %v1283 = vunpack.c.l.b16 %v1264
    %v1284 = vunpack.c.h.b16 %v1264
    %v1285 = vunpack.c.l.b16 %v1265
    %v1286 = vunpack.c.h.b16 %v1265
    %v1287 = vunpack.c.l.b16 %v1266
    %v1288 = vunpack.c.h.b16 %v1266
    %v1289 = vunpack.c.l.b16 %v1267
    %v1290 = vunpack.c.h.b16 %v1267
    %v1291 = vunpack.c.l.b16 %v1268
    %v1292 = vunpack.c.h.b16 %v1268
    %v1293 = vpack.c.b16 %v1279, %v1277
    %v1294 = vpack.c.b16 %v1280, %v1278
    %v1295 = vpack.c.b16 %v1283, %v1281
    %v1296 = vpack.c.b16 %v1284, %v1282
    %v1297 = vpack.c.b16 %v1287, %v1285
    %v1298 = vpack.c.b16 %v1288, %v1286
    %v1299 = vpack.c.b16 %v1291, %v1289
    %v1300 = vpack.c.b16 %v1292, %v1290
    %v1310 = vsel %vm324, %v1260, 0
    %1312 = vmatprep.subr.bf16.mxu0 %v1294
    %1313 = vmatpush1.bf16.msra.mxu0 %v1293
    %1314 = vmatprep.subr.bf16.mxu0 %v1296
    %1315 = vmatpush1.bf16.msra.mxu0 %v1295
    %1316 = vmatprep.subr.bf16.mxu0 %v1298
    %1317 = vmatpush1.bf16.msra.mxu0 %v1297
    %1318 = vmatprep.subr.bf16.mxu0 %v1300
    %1319 = vmatpush1.bf16.msra.mxu0 %v1299
    %1320 = vmatprep.subr.bf16.mxu0 0
    %1321 = vmatpush1.bf16.msra.mxu0 0
    %1322 = vmatprep.subr.bf16.mxu0 0
    %1323 = vmatpush1.bf16.msra.mxu0 0
    %1324 = vmatprep.subr.bf16.mxu0 0
    %1325 = vmatpush1.bf16.msra.mxu0 0
    %1326 = vmatprep.subr.bf16.mxu0 0
    %1327 = vmatpush1.bf16.msra.mxu0 0
    %1328 = vmatprep.subr.bf16.mxu0 0
    %1329 = vmatpush1.bf16.msra.mxu0 0
    %1330 = vmatprep.subr.bf16.mxu0 0
    %1331 = vmatpush1.bf16.msra.mxu0 0
    %1332 = vmatprep.subr.bf16.mxu0 0
    %1333 = vmatpush1.bf16.msra.mxu0 0
    %1334 = vmatprep.subr.bf16.mxu0 0
    %1335 = vmatpush1.bf16.msra.mxu0 0
    %1336 = vmatprep.subr.bf16.mxu0 0
    %1337 = vmatpush1.bf16.msra.mxu0 0
    %1338 = vmatprep.subr.bf16.mxu0 0
    %1339 = vmatpush1.bf16.msra.mxu0 0
    %1340 = vmatprep.subr.bf16.mxu0 0
    %1341 = vmatpush1.bf16.msra.mxu0 0
    %1342 = vmatprep.subr.bf16.mxu0 0
    %1343 = vmatpush1.bf16.msra.mxu0 0
    %1344 = vmatprep.mubr.bf16.mxu0 0
    %1345 = vmatmul.mubr.bf16.gmra.mrb[0].mxu0 %v1310
    %v1346 = vpop.f32.mrb[0].mxu0
    %v1347 = vadd.f32 0.0, %v1346
    %v1348 = vpop.f32.mrb[0].mxu0
    %v1349 = vadd.f32 0.0, %v1348
    %v1350 = vpop.f32.mrb[0].mxu0
    %v1351 = vpop.f32.mrb[0].mxu0
    %1352 = vdwg.mxu0
    %s1353 = smul.u32 7, 2
    %s1354 = smul.addr %s1353, 8
    %s1355 = scalar_lea.vmem [#allocation4], %s1354
    %v1356 = vld [vmem:[%s1355] sm:$0xff]
    %v1357 = vadd.f32 %v1356, %v1347
    %v1358 = vxor.u32 %v1357, 2147483648
    %v1359 = vmul.f32 %v1358, 1.442695
    %v1360 = vpow.pop %v1359
    %v1361 = vadd.f32 %v1360, 1.0
    %v1362 = vrcp.pop %v1361
    %v1363 = vmul.f32 1.0, %v1362
    %v1364 = vtanh.pop %v1357
    %v1365 = vmul.f32 %v1363, %v1211
    %1367 = vrot.lane.b32.xlu0 %v1364, 64
    %v1368 = vpop.permute.xlu0 %1367
    %v1370 = vmul.f32 %v1363, %v1368
    %1372 = vrot.lane.b32.xlu0 %v1370, 32
    %v1373 = vpop.permute.xlu0 %1372
    %v1375 = vadd.f32 %v1365, %v1373
    %v1376 = vtanh.pop %v1375
    %1378 = vrot.lane.b32.xlu0 %v1376, 64
    %v1379 = vpop.permute.xlu0 %1378
    %v1381 = vmul.f32 %v1363, %v1379
    %s1382 = smul.u32 0, 2
    %s1383 = smul.addr %s1382, 8
    %s1384 = scalar_lea.vmem [#allocation4], %s1383
    %v1385 = vld [vmem:[%s1384 + $0x8] sm:$0xff]
    %v1386 = vadd.f32 %v1385, %v1349
    %v1387 = vxor.u32 %v1386, 2147483648
    %v1388 = vmul.f32 %v1387, 1.442695
    %v1389 = vpow.pop %v1388
    %v1390 = vadd.f32 %v1389, 1.0
    %v1391 = vrcp.pop %v1390
    %v1392 = vmul.f32 1.0, %v1391
    %v1393 = vtanh.pop %v1386
    %v1394 = vmul.f32 %v1392, %v1237
    %1396 = vrot.lane.b32.xlu0 %v1393, 64
    %v1397 = vpop.permute.xlu0 %1396
    %v1399 = vmul.f32 %v1392, %v1397
    %1401 = vrot.lane.b32.xlu0 %v1399, 32
    %v1402 = vpop.permute.xlu0 %1401
    %v1404 = vadd.f32 %v1394, %v1402
    %v1405 = vtanh.pop %v1404
    %1407 = vrot.lane.b32.xlu0 %v1405, 64
    %v1408 = vpop.permute.xlu0 %1407
    %v1410 = vmul.f32 %v1392, %v1408
    %1412 = vrot.lane.b32.xlu0 %v1381, 32
    %v1413 = vpop.permute.xlu0 %1412
    %s1415 = scalar_lea.vmem [#allocation2], 56
    %1416 = vst.msk [vmem:[%s1415] sm:$0xff] %vm264, %v1413
    %1418 = vrot.lane.b32.xlu0 %v1410, 32
    %v1419 = vpop.permute.xlu0 %1418
    %1421 = vst.msk [vmem:[#allocation3] sm:$0xff] %vm264, %v1419
    %v1422 = vld [vmem:[#allocation2] sm:$0xff]
    %v1423 = vld [vmem:[#allocation2 + $0x8] sm:$0xff]
    %v1424 = vld [vmem:[#allocation2 + $0x10] sm:$0xff]
    %v1425 = vld [vmem:[#allocation2 + $0x18] sm:$0xff]
    %v1426 = vld [vmem:[#allocation2 + $0x20] sm:$0xff]
    %v1427 = vld [vmem:[#allocation2 + $0x28] sm:$0xff]
    %v1428 = vld [vmem:[#allocation2 + $0x30] sm:$0xff]
    %v1429 = vld [vmem:[#allocation2 + $0x38] sm:$0xff]
    %v1430 = vpack.c.bf16 %v1423, %v1422
    %v1431 = vpack.c.bf16 %v1425, %v1424
    %v1432 = vpack.c.bf16 %v1427, %v1426
    %v1433 = vpack.c.bf16 %v1429, %v1428
    %v1434 = vld [vmem:[%s4] sm:$0xff]
    %v1435 = vld [vmem:[%s4 + $0x8] sm:$0xff]
    %v1436 = vld [vmem:[%s4 + $0x10] sm:$0xff]
    %v1437 = vld [vmem:[%s4 + $0x18] sm:$0xff]
    %v1438 = vld [vmem:[#allocation3] sm:$0xff]
    %v1439 = vld [vmem:[#allocation3 + $0x8] sm:$0xff]
    %v1440 = vld [vmem:[#allocation3 + $0x10] sm:$0xff]
    %v1441 = vld [vmem:[#allocation3 + $0x18] sm:$0xff]
    %v1442 = vld [vmem:[#allocation3 + $0x20] sm:$0xff]
    %v1443 = vld [vmem:[#allocation3 + $0x28] sm:$0xff]
    %v1444 = vld [vmem:[#allocation3 + $0x30] sm:$0xff]
    %v1445 = vld [vmem:[#allocation3 + $0x38] sm:$0xff]
    %v1446 = vpack.c.bf16 %v1439, %v1438
    %v1447 = vpack.c.bf16 %v1441, %v1440
    %v1448 = vpack.c.bf16 %v1443, %v1442
    %v1449 = vpack.c.bf16 %v1445, %v1444
    %v1450 = vld [vmem:[%s4 + $0x20] sm:$0xff]
    %v1451 = vld [vmem:[%s4 + $0x28] sm:$0xff]
    %v1452 = vld [vmem:[%s4 + $0x30] sm:$0xff]
    %v1453 = vld [vmem:[%s4 + $0x38] sm:$0xff]
    %v1458 = vunpack.c.l.b16 %v1450
    %v1459 = vunpack.c.h.b16 %v1450
    %v1460 = vunpack.c.l.b16 %v1451
    %v1461 = vunpack.c.h.b16 %v1451
    %v1462 = vunpack.c.l.b16 %v1452
    %v1463 = vunpack.c.h.b16 %v1452
    %v1464 = vunpack.c.l.b16 %v1453
    %v1465 = vunpack.c.h.b16 %v1453
    %v1466 = vpack.c.b16 %v1460, %v1458
    %v1467 = vpack.c.b16 %v1461, %v1459
    %v1468 = vpack.c.b16 %v1464, %v1462
    %v1469 = vpack.c.b16 %v1465, %v1463
    %v1475 = vsel %vm264, %v1446, 0
    %v1478 = vsel %vm264, %v1447, 0
    %v1481 = vsel %vm264, %v1448, 0
    %v1484 = vsel %vm264, %v1449, 0
    %1486 = vmatprep.subr.bf16.mxu0 %v1467
    %1487 = vmatpush1.bf16.msra.mxu0 %v1466
    %1488 = vmatprep.subr.bf16.mxu0 %v1469
    %1489 = vmatpush1.bf16.msra.mxu0 %v1468
    %1490 = vmatprep.subr.bf16.mxu0 0
    %1491 = vmatpush1.bf16.msra.mxu0 0
    %1492 = vmatprep.subr.bf16.mxu0 0
    %1493 = vmatpush1.bf16.msra.mxu0 0
    %1494 = vmatprep.subr.bf16.mxu0 0
    %1495 = vmatpush1.bf16.msra.mxu0 0
    %1496 = vmatprep.subr.bf16.mxu0 0
    %1497 = vmatpush1.bf16.msra.mxu0 0
    %1498 = vmatprep.subr.bf16.mxu0 0
    %1499 = vmatpush1.bf16.msra.mxu0 0
    %1500 = vmatprep.subr.bf16.mxu0 0
    %1501 = vmatpush1.bf16.msra.mxu0 0
    %1502 = vmatprep.subr.bf16.mxu0 0
    %1503 = vmatpush1.bf16.msra.mxu0 0
    %1504 = vmatprep.subr.bf16.mxu0 0
    %1505 = vmatpush1.bf16.msra.mxu0 0
    %1506 = vmatprep.subr.bf16.mxu0 0
    %1507 = vmatpush1.bf16.msra.mxu0 0
    %1508 = vmatprep.subr.bf16.mxu0 0
    %1509 = vmatpush1.bf16.msra.mxu0 0
    %1510 = vmatprep.subr.bf16.mxu0 0
    %1511 = vmatpush1.bf16.msra.mxu0 0
    %1512 = vmatprep.subr.bf16.mxu0 0
    %1513 = vmatpush1.bf16.msra.mxu0 0
    %1514 = vmatprep.subr.bf16.mxu0 0
    %1515 = vmatpush1.bf16.msra.mxu0 0
    %1516 = vmatprep.subr.bf16.mxu0 0
    %1517 = vmatpush1.bf16.msra.mxu0 0
    %1518 = vmatprep.mubr.bf16.mxu0 0
    %1519 = vmatmul.mubr.bf16.gmra.mrb[0].mxu0 %v1475
    %v1520 = vpop.f32.mrb[0].mxu0
    %v1521 = vadd.f32 0.0, %v1520
    %v1522 = vpop.f32.mrb[0].mxu0
    %v1523 = vadd.f32 0.0, %v1522
    %v1524 = vpop.f32.mrb[0].mxu0
    %v1525 = vadd.f32 0.0, %v1524
    %v1526 = vpop.f32.mrb[0].mxu0
    %v1527 = vadd.f32 0.0, %v1526
    %1528 = vmatprep.mubr.bf16.mxu0 0
    %1529 = vmatmul.mubr.bf16.gmra.mrb[0].mxu0 %v1478
    %v1530 = vpop.f32.mrb[0].mxu0
    %v1531 = vadd.f32 0.0, %v1530
    %v1532 = vpop.f32.mrb[0].mxu0
    %v1533 = vadd.f32 0.0, %v1532
    %v1534 = vpop.f32.mrb[0].mxu0
    %v1535 = vadd.f32 0.0, %v1534
    %v1536 = vpop.f32.mrb[0].mxu0
    %v1537 = vadd.f32 0.0, %v1536
    %1538 = vmatprep.mubr.bf16.mxu0 0
    %1539 = vmatmul.mubr.bf16.gmra.mrb[0].mxu0 %v1481
    %v1540 = vpop.f32.mrb[0].mxu0
    %v1541 = vadd.f32 0.0, %v1540
    %v1542 = vpop.f32.mrb[0].mxu0
    %v1543 = vadd.f32 0.0, %v1542
    %v1544 = vpop.f32.mrb[0].mxu0
    %v1545 = vadd.f32 0.0, %v1544
    %v1546 = vpop.f32.mrb[0].mxu0
    %v1547 = vadd.f32 0.0, %v1546
    %1548 = vmatprep.mubr.bf16.mxu0 0
    %1549 = vmatmul.mubr.bf16.gmra.mrb[0].mxu0 %v1484
    %v1550 = vpop.f32.mrb[0].mxu0
    %v1551 = vadd.f32 0.0, %v1550
    %v1552 = vpop.f32.mrb[0].mxu0
    %v1553 = vadd.f32 0.0, %v1552
    %v1554 = vpop.f32.mrb[0].mxu0
    %v1555 = vadd.f32 0.0, %v1554
    %v1556 = vpop.f32.mrb[0].mxu0
    %v1557 = vadd.f32 0.0, %v1556
    %1558 = vdwg.mxu0
    %v1563 = vunpack.c.l.b16 %v1434
    %v1564 = vunpack.c.h.b16 %v1434
    %v1565 = vunpack.c.l.b16 %v1435
    %v1566 = vunpack.c.h.b16 %v1435
    %v1567 = vunpack.c.l.b16 %v1436
    %v1568 = vunpack.c.h.b16 %v1436
    %v1569 = vunpack.c.l.b16 %v1437
    %v1570 = vunpack.c.h.b16 %v1437
    %v1571 = vpack.c.b16 %v1565, %v1563
    %v1572 = vpack.c.b16 %v1566, %v1564
    %v1573 = vpack.c.b16 %v1569, %v1567
    %v1574 = vpack.c.b16 %v1570, %v1568
    %v1580 = vsel %vm264, %v1430, 0
    %v1583 = vsel %vm264, %v1431, 0
    %v1586 = vsel %vm264, %v1432, 0
    %v1589 = vsel %vm264, %v1433, 0
    %1591 = vmatprep.subr.bf16.mxu0 %v1572
    %1592 = vmatpush1.bf16.msra.mxu0 %v1571
    %1593 = vmatprep.subr.bf16.mxu0 %v1574
    %1594 = vmatpush1.bf16.msra.mxu0 %v1573
    %1595 = vmatprep.subr.bf16.mxu0 0
    %1596 = vmatpush1.bf16.msra.mxu0 0
    %1597 = vmatprep.subr.bf16.mxu0 0
    %1598 = vmatpush1.bf16.msra.mxu0 0
    %1599 = vmatprep.subr.bf16.mxu0 0
    %1600 = vmatpush1.bf16.msra.mxu0 0
    %1601 = vmatprep.subr.bf16.mxu0 0
    %1602 = vmatpush1.bf16.msra.mxu0 0
    %1603 = vmatprep.subr.bf16.mxu0 0
    %1604 = vmatpush1.bf16.msra.mxu0 0
    %1605 = vmatprep.subr.bf16.mxu0 0
    %1606 = vmatpush1.bf16.msra.mxu0 0
    %1607 = vmatprep.subr.bf16.mxu0 0
    %1608 = vmatpush1.bf16.msra.mxu0 0
    %1609 = vmatprep.subr.bf16.mxu0 0
    %1610 = vmatpush1.bf16.msra.mxu0 0
    %1611 = vmatprep.subr.bf16.mxu0 0
    %1612 = vmatpush1.bf16.msra.mxu0 0
    %1613 = vmatprep.subr.bf16.mxu0 0
    %1614 = vmatpush1.bf16.msra.mxu0 0
    %1615 = vmatprep.subr.bf16.mxu0 0
    %1616 = vmatpush1.bf16.msra.mxu0 0
    %1617 = vmatprep.subr.bf16.mxu0 0
    %1618 = vmatpush1.bf16.msra.mxu0 0
    %1619 = vmatprep.subr.bf16.mxu0 0
    %1620 = vmatpush1.bf16.msra.mxu0 0
    %1621 = vmatprep.subr.bf16.mxu0 0
    %1622 = vmatpush1.bf16.msra.mxu0 0
    %1623 = vmatprep.mubr.bf16.mxu0 0
    %1624 = vmatmul.mubr.bf16.gmra.mrb[0].mxu0 %v1580
    %v1625 = vpop.f32.mrb[0].mxu0
    %v1626 = vadd.f32 %v1521, %v1625
    %v1627 = vpop.f32.mrb[0].mxu0
    %v1628 = vadd.f32 %v1523, %v1627
    %v1629 = vpop.f32.mrb[0].mxu0
    %v1630 = vadd.f32 %v1525, %v1629
    %v1631 = vpop.f32.mrb[0].mxu0
    %v1632 = vadd.f32 %v1527, %v1631
    %1633 = vmatprep.mubr.bf16.mxu0 0
    %1634 = vmatmul.mubr.bf16.gmra.mrb[0].mxu0 %v1583
    %v1635 = vpop.f32.mrb[0].mxu0
    %v1636 = vadd.f32 %v1531, %v1635
    %v1637 = vpop.f32.mrb[0].mxu0
    %v1638 = vadd.f32 %v1533, %v1637
    %v1639 = vpop.f32.mrb[0].mxu0
    %v1640 = vadd.f32 %v1535, %v1639
    %v1641 = vpop.f32.mrb[0].mxu0
    %v1642 = vadd.f32 %v1537, %v1641
    %1643 = vmatprep.mubr.bf16.mxu0 0
    %1644 = vmatmul.mubr.bf16.gmra.mrb[0].mxu0 %v1586
    %v1645 = vpop.f32.mrb[0].mxu0
    %v1646 = vadd.f32 %v1541, %v1645
    %v1647 = vpop.f32.mrb[0].mxu0
    %v1648 = vadd.f32 %v1543, %v1647
    %v1649 = vpop.f32.mrb[0].mxu0
    %v1650 = vadd.f32 %v1545, %v1649
    %v1651 = vpop.f32.mrb[0].mxu0
    %v1652 = vadd.f32 %v1547, %v1651
    %1653 = vmatprep.mubr.bf16.mxu0 0
    %1654 = vmatmul.mubr.bf16.gmra.mrb[0].mxu0 %v1589
    %v1655 = vpop.f32.mrb[0].mxu0
    %v1656 = vadd.f32 %v1551, %v1655
    %v1657 = vpop.f32.mrb[0].mxu0
    %v1658 = vadd.f32 %v1553, %v1657
    %v1659 = vpop.f32.mrb[0].mxu0
    %v1660 = vadd.f32 %v1555, %v1659
    %v1661 = vpop.f32.mrb[0].mxu0
    %v1662 = vadd.f32 %v1557, %v1661
    %1663 = vdwg.mxu0
    %v1664 = vld [vmem:[%s6] sm:$0x3]
    %v1666 = vlaneseq
    %v1667 = vshrl.u32 %v1666, 7
    %v1668 = vsub.s32 0, %v1667
    %v1669 = vrot.slane %v1664, %v1668
    %v1670 = vlaneseq
    %v1671 = vshrl.u32 %v1670, 7
    %v1672 = vsub.s32 1, %v1671
    %v1673 = vrot.slane %v1664, %v1672
    %v1676 = vadd.f32 %v1626, %v1669
    %v1677 = vadd.f32 %v1628, %v1673
    %v1678 = vadd.f32 %v1630, %v1669
    %v1679 = vadd.f32 %v1632, %v1673
    %v1680 = vadd.f32 %v1636, %v1669
    %v1681 = vadd.f32 %v1638, %v1673
    %v1682 = vadd.f32 %v1640, %v1669
    %v1683 = vadd.f32 %v1642, %v1673
    %v1684 = vadd.f32 %v1646, %v1669
    %v1685 = vadd.f32 %v1648, %v1673
    %v1686 = vadd.f32 %v1650, %v1669
    %v1687 = vadd.f32 %v1652, %v1673
    %v1688 = vadd.f32 %v1656, %v1669
    %v1689 = vadd.f32 %v1658, %v1673
    %v1690 = vadd.f32 %v1660, %v1669
    %v1691 = vadd.f32 %v1662, %v1673
    %1692 = vst [vmem:[#allocation4] sm:$0xff] %v1676
    %1693 = vst [vmem:[#allocation4 + $0x8] sm:$0xff] %v1677
    %1694 = vst [vmem:[#allocation4 + $0x10] sm:$0xff] %v1678
    %1695 = vst [vmem:[#allocation4 + $0x18] sm:$0xff] %v1679
    %1696 = vst [vmem:[#allocation4 + $0x20] sm:$0xff] %v1680
    %1697 = vst [vmem:[#allocation4 + $0x28] sm:$0xff] %v1681
    %1698 = vst [vmem:[#allocation4 + $0x30] sm:$0xff] %v1682
    %1699 = vst [vmem:[#allocation4 + $0x38] sm:$0xff] %v1683
    %1700 = vst [vmem:[#allocation4 + $0x40] sm:$0xff] %v1684
    %1701 = vst [vmem:[#allocation4 + $0x48] sm:$0xff] %v1685
    %1702 = vst [vmem:[#allocation4 + $0x50] sm:$0xff] %v1686
    %1703 = vst [vmem:[#allocation4 + $0x58] sm:$0xff] %v1687
    %1704 = vst [vmem:[#allocation4 + $0x60] sm:$0xff] %v1688
    %1705 = vst [vmem:[#allocation4 + $0x68] sm:$0xff] %v1689
    %1706 = vst [vmem:[#allocation4 + $0x70] sm:$0xff] %v1690
    %1707 = vst [vmem:[#allocation4 + $0x78] sm:$0xff] %v1691
    %v1708 = vld [vmem:[#allocation4] sm:$0xff]
    %v1709 = vxor.u32 %v1708, 2147483648
    %v1710 = vmul.f32 %v1709, 1.442695
    %v1711 = vpow.pop %v1710
    %v1712 = vadd.f32 %v1711, 1.0
    %v1713 = vrcp.pop %v1712
    %v1714 = vmul.f32 1.0, %v1713
    %v1715 = vtanh.pop %v1708
    %v1716 = vmul.f32 %v1714, 0.0
    %1718 = vrot.lane.b32.xlu0 %v1715, 64
    %v1719 = vpop.permute.xlu0 %1718
    %v1721 = vmul.f32 %v1714, %v1719
    %1723 = vrot.lane.b32.xlu0 %v1721, 32
    %v1724 = vpop.permute.xlu0 %1723
    %v1726 = vadd.f32 %v1716, %v1724
    %v1727 = vtanh.pop %v1726
    %1729 = vrot.lane.b32.xlu0 %v1727, 64
    %v1730 = vpop.permute.xlu0 %1729
    %v1732 = vmul.f32 %v1714, %v1730
    %v1733 = vld [vmem:[#allocation4 + $0x78] sm:$0xff]
    %v1734 = vxor.u32 %v1733, 2147483648
    %v1735 = vmul.f32 %v1734, 1.442695
    %v1736 = vpow.pop %v1735
    %v1737 = vadd.f32 %v1736, 1.0
    %v1738 = vrcp.pop %v1737
    %v1739 = vmul.f32 1.0, %v1738
    %v1740 = vtanh.pop %v1733
    %v1741 = vmul.f32 %v1739, 0.0
    %1743 = vrot.lane.b32.xlu0 %v1740, 64
    %v1744 = vpop.permute.xlu0 %1743
    %v1746 = vmul.f32 %v1739, %v1744
    %1748 = vrot.lane.b32.xlu0 %v1746, 32
    %v1749 = vpop.permute.xlu0 %1748
    %v1751 = vadd.f32 %v1741, %v1749
    %v1752 = vtanh.pop %v1751
    %1754 = vrot.lane.b32.xlu0 %v1752, 64
    %v1755 = vpop.permute.xlu0 %1754
    %v1757 = vmul.f32 %v1739, %v1755
    %1759 = vrot.lane.b32.xlu0 %v1732, 32
    %v1760 = vpop.permute.xlu0 %1759
    %1762 = vst.msk [vmem:[#allocation2] sm:$0xff] %vm264, %v1760
    %1764 = vrot.lane.b32.xlu0 %v1757, 32
    %v1765 = vpop.permute.xlu0 %1764
    %1767 = vst.msk [vmem:[#allocation3 + $0x38] sm:$0xff] %vm264, %v1765
    %1768 = vrot.lane.b32.xlu0 %v1757, 64
    %v1769 = vpop.permute.xlu0 %1768
    %v1771 = vsel %vm264, %v1760, %v1769
    %v1772 = vpack.c.bf16 %v1771, %v1771
    %v1773 = vld [vmem:[#allocation9] sm:$0xff]
    %v1774 = vld [vmem:[#allocation9 + $0x8] sm:$0xff]
    %v1775 = vld [vmem:[#allocation9 + $0x10] sm:$0xff]
    %v1776 = vld [vmem:[#allocation9 + $0x18] sm:$0xff]
    %v1777 = vld [vmem:[#allocation9 + $0x20] sm:$0xff]
    %v1778 = vld [vmem:[#allocation9 + $0x28] sm:$0xff]
    %v1779 = vld [vmem:[#allocation9 + $0x30] sm:$0xff]
    %v1780 = vld [vmem:[#allocation9 + $0x38] sm:$0xff]
    %v1789 = vunpack.c.l.b16 %v1773
    %v1790 = vunpack.c.h.b16 %v1773
    %v1791 = vunpack.c.l.b16 %v1774
    %v1792 = vunpack.c.h.b16 %v1774
    %v1793 = vunpack.c.l.b16 %v1775
    %v1794 = vunpack.c.h.b16 %v1775
    %v1795 = vunpack.c.l.b16 %v1776
    %v1796 = vunpack.c.h.b16 %v1776
    %v1797 = vunpack.c.l.b16 %v1777
    %v1798 = vunpack.c.h.b16 %v1777
    %v1799 = vunpack.c.l.b16 %v1778
    %v1800 = vunpack.c.h.b16 %v1778
    %v1801 = vunpack.c.l.b16 %v1779
    %v1802 = vunpack.c.h.b16 %v1779
    %v1803 = vunpack.c.l.b16 %v1780
    %v1804 = vunpack.c.h.b16 %v1780
    %v1805 = vpack.c.b16 %v1791, %v1789
    %v1806 = vpack.c.b16 %v1792, %v1790
    %v1807 = vpack.c.b16 %v1795, %v1793
    %v1808 = vpack.c.b16 %v1796, %v1794
    %v1809 = vpack.c.b16 %v1799, %v1797
    %v1810 = vpack.c.b16 %v1800, %v1798
    %v1811 = vpack.c.b16 %v1803, %v1801
    %v1812 = vpack.c.b16 %v1804, %v1802
    %v1822 = vsel %vm324, %v1772, 0
    %1824 = vmatprep.subr.bf16.mxu0 %v1806
    %1825 = vmatpush1.bf16.msra.mxu0 %v1805
    %1826 = vmatprep.subr.bf16.mxu0 %v1808
    %1827 = vmatpush1.bf16.msra.mxu0 %v1807
    %1828 = vmatprep.subr.bf16.mxu0 %v1810
    %1829 = vmatpush1.bf16.msra.mxu0 %v1809
    %1830 = vmatprep.subr.bf16.mxu0 %v1812
    %1831 = vmatpush1.bf16.msra.mxu0 %v1811
    %1832 = vmatprep.subr.bf16.mxu0 0
    %1833 = vmatpush1.bf16.msra.mxu0 0
    %1834 = vmatprep.subr.bf16.mxu0 0
    %1835 = vmatpush1.bf16.msra.mxu0 0
    %1836 = vmatprep.subr.bf16.mxu0 0
    %1837 = vmatpush1.bf16.msra.mxu0 0
    %1838 = vmatprep.subr.bf16.mxu0 0
    %1839 = vmatpush1.bf16.msra.mxu0 0
    %1840 = vmatprep.subr.bf16.mxu0 0
    %1841 = vmatpush1.bf16.msra.mxu0 0
    %1842 = vmatprep.subr.bf16.mxu0 0
    %1843 = vmatpush1.bf16.msra.mxu0 0
    %1844 = vmatprep.subr.bf16.mxu0 0
    %1845 = vmatpush1.bf16.msra.mxu0 0
    %1846 = vmatprep.subr.bf16.mxu0 0
    %1847 = vmatpush1.bf16.msra.mxu0 0
    %1848 = vmatprep.subr.bf16.mxu0 0
    %1849 = vmatpush1.bf16.msra.mxu0 0
    %1850 = vmatprep.subr.bf16.mxu0 0
    %1851 = vmatpush1.bf16.msra.mxu0 0
    %1852 = vmatprep.subr.bf16.mxu0 0
    %1853 = vmatpush1.bf16.msra.mxu0 0
    %1854 = vmatprep.subr.bf16.mxu0 0
    %1855 = vmatpush1.bf16.msra.mxu0 0
    %1856 = vmatprep.mubr.bf16.mxu0 0
    %1857 = vmatmul.mubr.bf16.gmra.mrb[0].mxu0 %v1822
    %v1858 = vpop.f32.mrb[0].mxu0
    %v1859 = vadd.f32 0.0, %v1858
    %v1860 = vpop.f32.mrb[0].mxu0
    %v1861 = vadd.f32 0.0, %v1860
    %v1862 = vpop.f32.mrb[0].mxu0
    %v1863 = vpop.f32.mrb[0].mxu0
    %1864 = vdwg.mxu0
    %v1865 = vld [vmem:[%s371] sm:$0xff]
    %v1866 = vadd.f32 %v1865, %v1859
    %v1867 = vxor.u32 %v1866, 2147483648
    %v1868 = vmul.f32 %v1867, 1.442695
    %v1869 = vpow.pop %v1868
    %v1870 = vadd.f32 %v1869, 1.0
    %v1871 = vrcp.pop %v1870
    %v1872 = vmul.f32 1.0, %v1871
    %v1873 = vtanh.pop %v1866
    %v1874 = vmul.f32 %v1872, %v1726
    %1876 = vrot.lane.b32.xlu0 %v1873, 64
    %v1877 = vpop.permute.xlu0 %1876
    %v1879 = vmul.f32 %v1872, %v1877
    %1881 = vrot.lane.b32.xlu0 %v1879, 32
    %v1882 = vpop.permute.xlu0 %1881
    %v1884 = vadd.f32 %v1874, %v1882
    %v1885 = vtanh.pop %v1884
    %1887 = vrot.lane.b32.xlu0 %v1885, 64
    %v1888 = vpop.permute.xlu0 %1887
    %v1890 = vmul.f32 %v1872, %v1888
    %v1891 = vld [vmem:[%s400 + $0x8] sm:$0xff]
    %v1892 = vadd.f32 %v1891, %v1861
    %v1893 = vxor.u32 %v1892, 2147483648
    %v1894 = vmul.f32 %v1893, 1.442695
    %v1895 = vpow.pop %v1894
    %v1896 = vadd.f32 %v1895, 1.0
    %v1897 = vrcp.pop %v1896
    %v1898 = vmul.f32 1.0, %v1897
    %v1899 = vtanh.pop %v1892
    %v1900 = vmul.f32 %v1898, %v1751
    %1902 = vrot.lane.b32.xlu0 %v1899, 64
    %v1903 = vpop.permute.xlu0 %1902
    %v1905 = vmul.f32 %v1898, %v1903
    %1907 = vrot.lane.b32.xlu0 %v1905, 32
    %v1908 = vpop.permute.xlu0 %1907
    %v1910 = vadd.f32 %v1900, %v1908
    %v1911 = vtanh.pop %v1910
    %1913 = vrot.lane.b32.xlu0 %v1911, 64
    %v1914 = vpop.permute.xlu0 %1913
    %v1916 = vmul.f32 %v1898, %v1914
    %1918 = vrot.lane.b32.xlu0 %v1890, 32
    %v1919 = vpop.permute.xlu0 %1918
    %1921 = vst.msk [vmem:[%s431] sm:$0xff] %vm264, %v1919
    %1923 = vrot.lane.b32.xlu0 %v1916, 32
    %v1924 = vpop.permute.xlu0 %1923
    %1926 = vst.msk [vmem:[%s437] sm:$0xff] %vm264, %v1924
    %1927 = vrot.lane.b32.xlu0 %v1916, 64
    %v1928 = vpop.permute.xlu0 %1927
    %v1930 = vsel %vm264, %v1919, %v1928
    %v1931 = vpack.c.bf16 %v1930, %v1930
    %v1932 = vld [vmem:[#allocation9] sm:$0xff]
    %v1933 = vld [vmem:[#allocation9 + $0x8] sm:$0xff]
    %v1934 = vld [vmem:[#allocation9 + $0x10] sm:$0xff]
    %v1935 = vld [vmem:[#allocation9 + $0x18] sm:$0xff]
    %v1936 = vld [vmem:[#allocation9 + $0x20] sm:$0xff]
    %v1937 = vld [vmem:[#allocation9 + $0x28] sm:$0xff]
    %v1938 = vld [vmem:[#allocation9 + $0x30] sm:$0xff]
    %v1939 = vld [vmem:[#allocation9 + $0x38] sm:$0xff]
    %v1948 = vunpack.c.l.b16 %v1932
    %v1949 = vunpack.c.h.b16 %v1932
    %v1950 = vunpack.c.l.b16 %v1933
    %v1951 = vunpack.c.h.b16 %v1933
    %v1952 = vunpack.c.l.b16 %v1934
    %v1953 = vunpack.c.h.b16 %v1934
    %v1954 = vunpack.c.l.b16 %v1935
    %v1955 = vunpack.c.h.b16 %v1935
    %v1956 = vunpack.c.l.b16 %v1936
    %v1957 = vunpack.c.h.b16 %v1936
    %v1958 = vunpack.c.l.b16 %v1937
    %v1959 = vunpack.c.h.b16 %v1937
    %v1960 = vunpack.c.l.b16 %v1938
    %v1961 = vunpack.c.h.b16 %v1938
    %v1962 = vunpack.c.l.b16 %v1939
    %v1963 = vunpack.c.h.b16 %v1939
    %v1964 = vpack.c.b16 %v1950, %v1948
    %v1965 = vpack.c.b16 %v1951, %v1949
    %v1966 = vpack.c.b16 %v1954, %v1952
    %v1967 = vpack.c.b16 %v1955, %v1953
    %v1968 = vpack.c.b16 %v1958, %v1956
    %v1969 = vpack.c.b16 %v1959, %v1957
    %v1970 = vpack.c.b16 %v1962, %v1960
    %v1971 = vpack.c.b16 %v1963, %v1961
    %v1981 = vsel %vm324, %v1931, 0
    %1983 = vmatprep.subr.bf16.mxu0 %v1965
    %1984 = vmatpush1.bf16.msra.mxu0 %v1964
    %1985 = vmatprep.subr.bf16.mxu0 %v1967
    %1986 = vmatpush1.bf16.msra.mxu0 %v1966
    %1987 = vmatprep.subr.bf16.mxu0 %v1969
    %1988 = vmatpush1.bf16.msra.mxu0 %v1968
    %1989 = vmatprep.subr.bf16.mxu0 %v1971
    %1990 = vmatpush1.bf16.msra.mxu0 %v1970
    %1991 = vmatprep.subr.bf16.mxu0 0
    %1992 = vmatpush1.bf16.msra.mxu0 0
    %1993 = vmatprep.subr.bf16.mxu0 0
    %1994 = vmatpush1.bf16.msra.mxu0 0
    %1995 = vmatprep.subr.bf16.mxu0 0
    %1996 = vmatpush1.bf16.msra.mxu0 0
    %1997 = vmatprep.subr.bf16.mxu0 0
    %1998 = vmatpush1.bf16.msra.mxu0 0
    %1999 = vmatprep.subr.bf16.mxu0 0
    %2000 = vmatpush1.bf16.msra.mxu0 0
    %2001 = vmatprep.subr.bf16.mxu0 0
    %2002 = vmatpush1.bf16.msra.mxu0 0
    %2003 = vmatprep.subr.bf16.mxu0 0
    %2004 = vmatpush1.bf16.msra.mxu0 0
    %2005 = vmatprep.subr.bf16.mxu0 0
    %2006 = vmatpush1.bf16.msra.mxu0 0
    %2007 = vmatprep.subr.bf16.mxu0 0
    %2008 = vmatpush1.bf16.msra.mxu0 0
    %2009 = vmatprep.subr.bf16.mxu0 0
    %2010 = vmatpush1.bf16.msra.mxu0 0
    %2011 = vmatprep.subr.bf16.mxu0 0
    %2012 = vmatpush1.bf16.msra.mxu0 0
    %2013 = vmatprep.subr.bf16.mxu0 0
    %2014 = vmatpush1.bf16.msra.mxu0 0
    %2015 = vmatprep.mubr.bf16.mxu0 0
    %2016 = vmatmul.mubr.bf16.gmra.mrb[0].mxu0 %v1981
    %v2017 = vpop.f32.mrb[0].mxu0
    %v2018 = vadd.f32 0.0, %v2017
    %v2019 = vpop.f32.mrb[0].mxu0
    %v2020 = vadd.f32 0.0, %v2019
    %v2021 = vpop.f32.mrb[0].mxu0
    %v2022 = vpop.f32.mrb[0].mxu0
    %2023 = vdwg.mxu0
    %v2024 = vld [vmem:[%s538] sm:$0xff]
    %v2025 = vadd.f32 %v2024, %v2018
    %v2026 = vxor.u32 %v2025, 2147483648
    %v2027 = vmul.f32 %v2026, 1.442695
    %v2028 = vpow.pop %v2027
    %v2029 = vadd.f32 %v2028, 1.0
    %v2030 = vrcp.pop %v2029
    %v2031 = vmul.f32 1.0, %v2030
    %v2032 = vtanh.pop %v2025
    %v2033 = vmul.f32 %v2031, %v1884
    %2035 = vrot.lane.b32.xlu0 %v2032, 64
    %v2036 = vpop.permute.xlu0 %2035
    %v2038 = vmul.f32 %v2031, %v2036
    %2040 = vrot.lane.b32.xlu0 %v2038, 32
    %v2041 = vpop.permute.xlu0 %2040
    %v2043 = vadd.f32 %v2033, %v2041
    %v2044 = vtanh.pop %v2043
    %2046 = vrot.lane.b32.xlu0 %v2044, 64
    %v2047 = vpop.permute.xlu0 %2046
    %v2049 = vmul.f32 %v2031, %v2047
    %v2050 = vld [vmem:[%s567 + $0x8] sm:$0xff]
    %v2051 = vadd.f32 %v2050, %v2020
    %v2052 = vxor.u32 %v2051, 2147483648
    %v2053 = vmul.f32 %v2052, 1.442695
    %v2054 = vpow.pop %v2053
    %v2055 = vadd.f32 %v2054, 1.0
    %v2056 = vrcp.pop %v2055
    %v2057 = vmul.f32 1.0, %v2056
    %v2058 = vtanh.pop %v2051
    %v2059 = vmul.f32 %v2057, %v1910
    %2061 = vrot.lane.b32.xlu0 %v2058, 64
    %v2062 = vpop.permute.xlu0 %2061
    %v2064 = vmul.f32 %v2057, %v2062
    %2066 = vrot.lane.b32.xlu0 %v2064, 32
    %v2067 = vpop.permute.xlu0 %2066
    %v2069 = vadd.f32 %v2059, %v2067
    %v2070 = vtanh.pop %v2069
    %2072 = vrot.lane.b32.xlu0 %v2070, 64
    %v2073 = vpop.permute.xlu0 %2072
    %v2075 = vmul.f32 %v2057, %v2073
    %2077 = vrot.lane.b32.xlu0 %v2049, 32
    %v2078 = vpop.permute.xlu0 %2077
    %2080 = vst.msk [vmem:[%s598] sm:$0xff] %vm264, %v2078
    %2082 = vrot.lane.b32.xlu0 %v2075, 32
    %v2083 = vpop.permute.xlu0 %2082
    %2085 = vst.msk [vmem:[%s604] sm:$0xff] %vm264, %v2083
    %2086 = vrot.lane.b32.xlu0 %v2075, 64
    %v2087 = vpop.permute.xlu0 %2086
    %v2089 = vsel %vm264, %v2078, %v2087
    %v2090 = vpack.c.bf16 %v2089, %v2089
    %v2091 = vld [vmem:[#allocation9] sm:$0xff]
    %v2092 = vld [vmem:[#allocation9 + $0x8] sm:$0xff]
    %v2093 = vld [vmem:[#allocation9 + $0x10] sm:$0xff]
    %v2094 = vld [vmem:[#allocation9 + $0x18] sm:$0xff]
    %v2095 = vld [vmem:[#allocation9 + $0x20] sm:$0xff]
    %v2096 = vld [vmem:[#allocation9 + $0x28] sm:$0xff]
    %v2097 = vld [vmem:[#allocation9 + $0x30] sm:$0xff]
    %v2098 = vld [vmem:[#allocation9 + $0x38] sm:$0xff]
    %v2107 = vunpack.c.l.b16 %v2091
    %v2108 = vunpack.c.h.b16 %v2091
    %v2109 = vunpack.c.l.b16 %v2092
    %v2110 = vunpack.c.h.b16 %v2092
    %v2111 = vunpack.c.l.b16 %v2093
    %v2112 = vunpack.c.h.b16 %v2093
    %v2113 = vunpack.c.l.b16 %v2094
    %v2114 = vunpack.c.h.b16 %v2094
    %v2115 = vunpack.c.l.b16 %v2095
    %v2116 = vunpack.c.h.b16 %v2095
    %v2117 = vunpack.c.l.b16 %v2096
    %v2118 = vunpack.c.h.b16 %v2096
    %v2119 = vunpack.c.l.b16 %v2097
    %v2120 = vunpack.c.h.b16 %v2097
    %v2121 = vunpack.c.l.b16 %v2098
    %v2122 = vunpack.c.h.b16 %v2098
    %v2123 = vpack.c.b16 %v2109, %v2107
    %v2124 = vpack.c.b16 %v2110, %v2108
    %v2125 = vpack.c.b16 %v2113, %v2111
    %v2126 = vpack.c.b16 %v2114, %v2112
    %v2127 = vpack.c.b16 %v2117, %v2115
    %v2128 = vpack.c.b16 %v2118, %v2116
    %v2129 = vpack.c.b16 %v2121, %v2119
    %v2130 = vpack.c.b16 %v2122, %v2120
    %v2140 = vsel %vm324, %v2090, 0
    %2142 = vmatprep.subr.bf16.mxu0 %v2124
    %2143 = vmatpush1.bf16.msra.mxu0 %v2123
    %2144 = vmatprep.subr.bf16.mxu0 %v2126
    %2145 = vmatpush1.bf16.msra.mxu0 %v2125
    %2146 = vmatprep.subr.bf16.mxu0 %v2128
    %2147 = vmatpush1.bf16.msra.mxu0 %v2127
    %2148 = vmatprep.subr.bf16.mxu0 %v2130
    %2149 = vmatpush1.bf16.msra.mxu0 %v2129
    %2150 = vmatprep.subr.bf16.mxu0 0
    %2151 = vmatpush1.bf16.msra.mxu0 0
    %2152 = vmatprep.subr.bf16.mxu0 0
    %2153 = vmatpush1.bf16.msra.mxu0 0
    %2154 = vmatprep.subr.bf16.mxu0 0
    %2155 = vmatpush1.bf16.msra.mxu0 0
    %2156 = vmatprep.subr.bf16.mxu0 0
    %2157 = vmatpush1.bf16.msra.mxu0 0
    %2158 = vmatprep.subr.bf16.mxu0 0
    %2159 = vmatpush1.bf16.msra.mxu0 0
    %2160 = vmatprep.subr.bf16.mxu0 0
    %2161 = vmatpush1.bf16.msra.mxu0 0
    %2162 = vmatprep.subr.bf16.mxu0 0
    %2163 = vmatpush1.bf16.msra.mxu0 0
    %2164 = vmatprep.subr.bf16.mxu0 0
    %2165 = vmatpush1.bf16.msra.mxu0 0
    %2166 = vmatprep.subr.bf16.mxu0 0
    %2167 = vmatpush1.bf16.msra.mxu0 0
    %2168 = vmatprep.subr.bf16.mxu0 0
    %2169 = vmatpush1.bf16.msra.mxu0 0
    %2170 = vmatprep.subr.bf16.mxu0 0
    %2171 = vmatpush1.bf16.msra.mxu0 0
    %2172 = vmatprep.subr.bf16.mxu0 0
    %2173 = vmatpush1.bf16.msra.mxu0 0
    %2174 = vmatprep.mubr.bf16.mxu0 0
    %2175 = vmatmul.mubr.bf16.gmra.mrb[0].mxu0 %v2140
    %v2176 = vpop.f32.mrb[0].mxu0
    %v2177 = vadd.f32 0.0, %v2176
    %v2178 = vpop.f32.mrb[0].mxu0
    %v2179 = vadd.f32 0.0, %v2178
    %v2180 = vpop.f32.mrb[0].mxu0
    %v2181 = vpop.f32.mrb[0].mxu0
    %2182 = vdwg.mxu0
    %v2183 = vld [vmem:[%s705] sm:$0xff]
    %v2184 = vadd.f32 %v2183, %v2177
    %v2185 = vxor.u32 %v2184, 2147483648
    %v2186 = vmul.f32 %v2185, 1.442695
    %v2187 = vpow.pop %v2186
    %v2188 = vadd.f32 %v2187, 1.0
    %v2189 = vrcp.pop %v2188
    %v2190 = vmul.f32 1.0, %v2189
    %v2191 = vtanh.pop %v2184
    %v2192 = vmul.f32 %v2190, %v2043
    %2194 = vrot.lane.b32.xlu0 %v2191, 64
    %v2195 = vpop.permute.xlu0 %2194
    %v2197 = vmul.f32 %v2190, %v2195
    %2199 = vrot.lane.b32.xlu0 %v2197, 32
    %v2200 = vpop.permute.xlu0 %2199
    %v2202 = vadd.f32 %v2192, %v2200
    %v2203 = vtanh.pop %v2202
    %2205 = vrot.lane.b32.xlu0 %v2203, 64
    %v2206 = vpop.permute.xlu0 %2205
    %v2208 = vmul.f32 %v2190, %v2206
    %v2209 = vld [vmem:[%s734 + $0x8] sm:$0xff]
    %v2210 = vadd.f32 %v2209, %v2179
    %v2211 = vxor.u32 %v2210, 2147483648
    %v2212 = vmul.f32 %v2211, 1.442695
    %v2213 = vpow.pop %v2212
    %v2214 = vadd.f32 %v2213, 1.0
    %v2215 = vrcp.pop %v2214
    %v2216 = vmul.f32 1.0, %v2215
    %v2217 = vtanh.pop %v2210
    %v2218 = vmul.f32 %v2216, %v2069
    %2220 = vrot.lane.b32.xlu0 %v2217, 64
    %v2221 = vpop.permute.xlu0 %2220
    %v2223 = vmul.f32 %v2216, %v2221
    %2225 = vrot.lane.b32.xlu0 %v2223, 32
    %v2226 = vpop.permute.xlu0 %2225
    %v2228 = vadd.f32 %v2218, %v2226
    %v2229 = vtanh.pop %v2228
    %2231 = vrot.lane.b32.xlu0 %v2229, 64
    %v2232 = vpop.permute.xlu0 %2231
    %v2234 = vmul.f32 %v2216, %v2232
    %2236 = vrot.lane.b32.xlu0 %v2208, 32
    %v2237 = vpop.permute.xlu0 %2236
    %2239 = vst.msk [vmem:[%s765] sm:$0xff] %vm264, %v2237
    %2241 = vrot.lane.b32.xlu0 %v2234, 32
    %v2242 = vpop.permute.xlu0 %2241
    %2244 = vst.msk [vmem:[%s771] sm:$0xff] %vm264, %v2242
    %2245 = vrot.lane.b32.xlu0 %v2234, 64
    %v2246 = vpop.permute.xlu0 %2245
    %v2248 = vsel %vm264, %v2237, %v2246
    %v2249 = vpack.c.bf16 %v2248, %v2248
    %v2250 = vld [vmem:[#allocation9] sm:$0xff]
    %v2251 = vld [vmem:[#allocation9 + $0x8] sm:$0xff]
    %v2252 = vld [vmem:[#allocation9 + $0x10] sm:$0xff]
    %v2253 = vld [vmem:[#allocation9 + $0x18] sm:$0xff]
    %v2254 = vld [vmem:[#allocation9 + $0x20] sm:$0xff]
    %v2255 = vld [vmem:[#allocation9 + $0x28] sm:$0xff]
    %v2256 = vld [vmem:[#allocation9 + $0x30] sm:$0xff]
    %v2257 = vld [vmem:[#allocation9 + $0x38] sm:$0xff]
    %v2266 = vunpack.c.l.b16 %v2250
    %v2267 = vunpack.c.h.b16 %v2250
    %v2268 = vunpack.c.l.b16 %v2251
    %v2269 = vunpack.c.h.b16 %v2251
    %v2270 = vunpack.c.l.b16 %v2252
    %v2271 = vunpack.c.h.b16 %v2252
    %v2272 = vunpack.c.l.b16 %v2253
    %v2273 = vunpack.c.h.b16 %v2253
    %v2274 = vunpack.c.l.b16 %v2254
    %v2275 = vunpack.c.h.b16 %v2254
    %v2276 = vunpack.c.l.b16 %v2255
    %v2277 = vunpack.c.h.b16 %v2255
    %v2278 = vunpack.c.l.b16 %v2256
    %v2279 = vunpack.c.h.b16 %v2256
    %v2280 = vunpack.c.l.b16 %v2257
    %v2281 = vunpack.c.h.b16 %v2257
    %v2282 = vpack.c.b16 %v2268, %v2266
    %v2283 = vpack.c.b16 %v2269, %v2267
    %v2284 = vpack.c.b16 %v2272, %v2270
    %v2285 = vpack.c.b16 %v2273, %v2271
    %v2286 = vpack.c.b16 %v2276, %v2274
    %v2287 = vpack.c.b16 %v2277, %v2275
    %v2288 = vpack.c.b16 %v2280, %v2278
    %v2289 = vpack.c.b16 %v2281, %v2279
    %v2299 = vsel %vm324, %v2249, 0
    %2301 = vmatprep.subr.bf16.mxu0 %v2283
    %2302 = vmatpush1.bf16.msra.mxu0 %v2282
    %2303 = vmatprep.subr.bf16.mxu0 %v2285
    %2304 = vmatpush1.bf16.msra.mxu0 %v2284
    %2305 = vmatprep.subr.bf16.mxu0 %v2287
    %2306 = vmatpush1.bf16.msra.mxu0 %v2286
    %2307 = vmatprep.subr.bf16.mxu0 %v2289
    %2308 = vmatpush1.bf16.msra.mxu0 %v2288
    %2309 = vmatprep.subr.bf16.mxu0 0
    %2310 = vmatpush1.bf16.msra.mxu0 0
    %2311 = vmatprep.subr.bf16.mxu0 0
    %2312 = vmatpush1.bf16.msra.mxu0 0
    %2313 = vmatprep.subr.bf16.mxu0 0
    %2314 = vmatpush1.bf16.msra.mxu0 0
    %2315 = vmatprep.subr.bf16.mxu0 0
    %2316 = vmatpush1.bf16.msra.mxu0 0
    %2317 = vmatprep.subr.bf16.mxu0 0
    %2318 = vmatpush1.bf16.msra.mxu0 0
    %2319 = vmatprep.subr.bf16.mxu0 0
    %2320 = vmatpush1.bf16.msra.mxu0 0
    %2321 = vmatprep.subr.bf16.mxu0 0
    %2322 = vmatpush1.bf16.msra.mxu0 0
    %2323 = vmatprep.subr.bf16.mxu0 0
    %2324 = vmatpush1.bf16.msra.mxu0 0
    %2325 = vmatprep.subr.bf16.mxu0 0
    %2326 = vmatpush1.bf16.msra.mxu0 0
    %2327 = vmatprep.subr.bf16.mxu0 0
    %2328 = vmatpush1.bf16.msra.mxu0 0
    %2329 = vmatprep.subr.bf16.mxu0 0
    %2330 = vmatpush1.bf16.msra.mxu0 0
    %2331 = vmatprep.subr.bf16.mxu0 0
    %2332 = vmatpush1.bf16.msra.mxu0 0
    %2333 = vmatprep.mubr.bf16.mxu0 0
    %2334 = vmatmul.mubr.bf16.gmra.mrb[0].mxu0 %v2299
    %v2335 = vpop.f32.mrb[0].mxu0
    %v2336 = vadd.f32 0.0, %v2335
    %v2337 = vpop.f32.mrb[0].mxu0
    %v2338 = vadd.f32 0.0, %v2337
    %v2339 = vpop.f32.mrb[0].mxu0
    %v2340 = vpop.f32.mrb[0].mxu0
    %2341 = vdwg.mxu0
    %v2342 = vld [vmem:[%s734] sm:$0xff]
    %v2343 = vadd.f32 %v2342, %v2336
    %v2344 = vxor.u32 %v2343, 2147483648
    %v2345 = vmul.f32 %v2344, 1.442695
    %v2346 = vpow.pop %v2345
    %v2347 = vadd.f32 %v2346, 1.0
    %v2348 = vrcp.pop %v2347
    %v2349 = vmul.f32 1.0, %v2348
    %v2350 = vtanh.pop %v2343
    %v2351 = vmul.f32 %v2349, %v2202
    %2353 = vrot.lane.b32.xlu0 %v2350, 64
    %v2354 = vpop.permute.xlu0 %2353
    %v2356 = vmul.f32 %v2349, %v2354
    %2358 = vrot.lane.b32.xlu0 %v2356, 32
    %v2359 = vpop.permute.xlu0 %2358
    %v2361 = vadd.f32 %v2351, %v2359
    %v2362 = vtanh.pop %v2361
    %2364 = vrot.lane.b32.xlu0 %v2362, 64
    %v2365 = vpop.permute.xlu0 %2364
    %v2367 = vmul.f32 %v2349, %v2365
    %v2368 = vld [vmem:[%s705 + $0x8] sm:$0xff]
    %v2369 = vadd.f32 %v2368, %v2338
    %v2370 = vxor.u32 %v2369, 2147483648
    %v2371 = vmul.f32 %v2370, 1.442695
    %v2372 = vpow.pop %v2371
    %v2373 = vadd.f32 %v2372, 1.0
    %v2374 = vrcp.pop %v2373
    %v2375 = vmul.f32 1.0, %v2374
    %v2376 = vtanh.pop %v2369
    %v2377 = vmul.f32 %v2375, %v2228
    %2379 = vrot.lane.b32.xlu0 %v2376, 64
    %v2380 = vpop.permute.xlu0 %2379
    %v2382 = vmul.f32 %v2375, %v2380
    %2384 = vrot.lane.b32.xlu0 %v2382, 32
    %v2385 = vpop.permute.xlu0 %2384
    %v2387 = vadd.f32 %v2377, %v2385
    %v2388 = vtanh.pop %v2387
    %2390 = vrot.lane.b32.xlu0 %v2388, 64
    %v2391 = vpop.permute.xlu0 %2390
    %v2393 = vmul.f32 %v2375, %v2391
    %2395 = vrot.lane.b32.xlu0 %v2367, 32
    %v2396 = vpop.permute.xlu0 %2395
    %2398 = vst.msk [vmem:[%s926] sm:$0xff] %vm264, %v2396
    %2400 = vrot.lane.b32.xlu0 %v2393, 32
    %v2401 = vpop.permute.xlu0 %2400
    %2403 = vst.msk [vmem:[%s932] sm:$0xff] %vm264, %v2401
    %2404 = vrot.lane.b32.xlu0 %v2393, 64
    %v2405 = vpop.permute.xlu0 %2404
    %v2407 = vsel %vm264, %v2396, %v2405
    %v2408 = vpack.c.bf16 %v2407, %v2407
    %v2409 = vld [vmem:[#allocation9] sm:$0xff]
    %v2410 = vld [vmem:[#allocation9 + $0x8] sm:$0xff]
    %v2411 = vld [vmem:[#allocation9 + $0x10] sm:$0xff]
    %v2412 = vld [vmem:[#allocation9 + $0x18] sm:$0xff]
    %v2413 = vld [vmem:[#allocation9 + $0x20] sm:$0xff]
    %v2414 = vld [vmem:[#allocation9 + $0x28] sm:$0xff]
    %v2415 = vld [vmem:[#allocation9 + $0x30] sm:$0xff]
    %v2416 = vld [vmem:[#allocation9 + $0x38] sm:$0xff]
    %v2425 = vunpack.c.l.b16 %v2409
    %v2426 = vunpack.c.h.b16 %v2409
    %v2427 = vunpack.c.l.b16 %v2410
    %v2428 = vunpack.c.h.b16 %v2410
    %v2429 = vunpack.c.l.b16 %v2411
    %v2430 = vunpack.c.h.b16 %v2411
    %v2431 = vunpack.c.l.b16 %v2412
    %v2432 = vunpack.c.h.b16 %v2412
    %v2433 = vunpack.c.l.b16 %v2413
    %v2434 = vunpack.c.h.b16 %v2413
    %v2435 = vunpack.c.l.b16 %v2414
    %v2436 = vunpack.c.h.b16 %v2414
    %v2437 = vunpack.c.l.b16 %v2415
    %v2438 = vunpack.c.h.b16 %v2415
    %v2439 = vunpack.c.l.b16 %v2416
    %v2440 = vunpack.c.h.b16 %v2416
    %v2441 = vpack.c.b16 %v2427, %v2425
    %v2442 = vpack.c.b16 %v2428, %v2426
    %v2443 = vpack.c.b16 %v2431, %v2429
    %v2444 = vpack.c.b16 %v2432, %v2430
    %v2445 = vpack.c.b16 %v2435, %v2433
    %v2446 = vpack.c.b16 %v2436, %v2434
    %v2447 = vpack.c.b16 %v2439, %v2437
    %v2448 = vpack.c.b16 %v2440, %v2438
    %v2458 = vsel %vm324, %v2408, 0
    %2460 = vmatprep.subr.bf16.mxu0 %v2442
    %2461 = vmatpush1.bf16.msra.mxu0 %v2441
    %2462 = vmatprep.subr.bf16.mxu0 %v2444
    %2463 = vmatpush1.bf16.msra.mxu0 %v2443
    %2464 = vmatprep.subr.bf16.mxu0 %v2446
    %2465 = vmatpush1.bf16.msra.mxu0 %v2445
    %2466 = vmatprep.subr.bf16.mxu0 %v2448
    %2467 = vmatpush1.bf16.msra.mxu0 %v2447
    %2468 = vmatprep.subr.bf16.mxu0 0
    %2469 = vmatpush1.bf16.msra.mxu0 0
    %2470 = vmatprep.subr.bf16.mxu0 0
    %2471 = vmatpush1.bf16.msra.mxu0 0
    %2472 = vmatprep.subr.bf16.mxu0 0
    %2473 = vmatpush1.bf16.msra.mxu0 0
    %2474 = vmatprep.subr.bf16.mxu0 0
    %2475 = vmatpush1.bf16.msra.mxu0 0
    %2476 = vmatprep.subr.bf16.mxu0 0
    %2477 = vmatpush1.bf16.msra.mxu0 0
    %2478 = vmatprep.subr.bf16.mxu0 0
    %2479 = vmatpush1.bf16.msra.mxu0 0
    %2480 = vmatprep.subr.bf16.mxu0 0
    %2481 = vmatpush1.bf16.msra.mxu0 0
    %2482 = vmatprep.subr.bf16.mxu0 0
    %2483 = vmatpush1.bf16.msra.mxu0 0
    %2484 = vmatprep.subr.bf16.mxu0 0
    %2485 = vmatpush1.bf16.msra.mxu0 0
    %2486 = vmatprep.subr.bf16.mxu0 0
    %2487 = vmatpush1.bf16.msra.mxu0 0
    %2488 = vmatprep.subr.bf16.mxu0 0
    %2489 = vmatpush1.bf16.msra.mxu0 0
    %2490 = vmatprep.subr.bf16.mxu0 0
    %2491 = vmatpush1.bf16.msra.mxu0 0
    %2492 = vmatprep.mubr.bf16.mxu0 0
    %2493 = vmatmul.mubr.bf16.gmra.mrb[0].mxu0 %v2458
    %v2494 = vpop.f32.mrb[0].mxu0
    %v2495 = vadd.f32 0.0, %v2494
    %v2496 = vpop.f32.mrb[0].mxu0
    %v2497 = vadd.f32 0.0, %v2496
    %v2498 = vpop.f32.mrb[0].mxu0
    %v2499 = vpop.f32.mrb[0].mxu0
    %2500 = vdwg.mxu0
    %v2501 = vld [vmem:[%s567] sm:$0xff]
    %v2502 = vadd.f32 %v2501, %v2495
    %v2503 = vxor.u32 %v2502, 2147483648
    %v2504 = vmul.f32 %v2503, 1.442695
    %v2505 = vpow.pop %v2504
    %v2506 = vadd.f32 %v2505, 1.0
    %v2507 = vrcp.pop %v2506
    %v2508 = vmul.f32 1.0, %v2507
    %v2509 = vtanh.pop %v2502
    %v2510 = vmul.f32 %v2508, %v2361
    %2512 = vrot.lane.b32.xlu0 %v2509, 64
    %v2513 = vpop.permute.xlu0 %2512
    %v2515 = vmul.f32 %v2508, %v2513
    %2517 = vrot.lane.b32.xlu0 %v2515, 32
    %v2518 = vpop.permute.xlu0 %2517
    %v2520 = vadd.f32 %v2510, %v2518
    %v2521 = vtanh.pop %v2520
    %2523 = vrot.lane.b32.xlu0 %v2521, 64
    %v2524 = vpop.permute.xlu0 %2523
    %v2526 = vmul.f32 %v2508, %v2524
    %v2527 = vld [vmem:[%s538 + $0x8] sm:$0xff]
    %v2528 = vadd.f32 %v2527, %v2497
    %v2529 = vxor.u32 %v2528, 2147483648
    %v2530 = vmul.f32 %v2529, 1.442695
    %v2531 = vpow.pop %v2530
    %v2532 = vadd.f32 %v2531, 1.0
    %v2533 = vrcp.pop %v2532
    %v2534 = vmul.f32 1.0, %v2533
    %v2535 = vtanh.pop %v2528
    %v2536 = vmul.f32 %v2534, %v2387
    %2538 = vrot.lane.b32.xlu0 %v2535, 64
    %v2539 = vpop.permute.xlu0 %2538
    %v2541 = vmul.f32 %v2534, %v2539
    %2543 = vrot.lane.b32.xlu0 %v2541, 32
    %v2544 = vpop.permute.xlu0 %2543
    %v2546 = vadd.f32 %v2536, %v2544
    %v2547 = vtanh.pop %v2546
    %2549 = vrot.lane.b32.xlu0 %v2547, 64
    %v2550 = vpop.permute.xlu0 %2549
    %v2552 = vmul.f32 %v2534, %v2550
    %2554 = vrot.lane.b32.xlu0 %v2526, 32
    %v2555 = vpop.permute.xlu0 %2554
    %2557 = vst.msk [vmem:[%s1087] sm:$0xff] %vm264, %v2555
    %2559 = vrot.lane.b32.xlu0 %v2552, 32
    %v2560 = vpop.permute.xlu0 %2559
    %2562 = vst.msk [vmem:[%s1093] sm:$0xff] %vm264, %v2560
    %2563 = vrot.lane.b32.xlu0 %v2552, 64
    %v2564 = vpop.permute.xlu0 %2563
    %v2566 = vsel %vm264, %v2555, %v2564
    %v2567 = vpack.c.bf16 %v2566, %v2566
    %v2568 = vld [vmem:[#allocation9] sm:$0xff]
    %v2569 = vld [vmem:[#allocation9 + $0x8] sm:$0xff]
    %v2570 = vld [vmem:[#allocation9 + $0x10] sm:$0xff]
    %v2571 = vld [vmem:[#allocation9 + $0x18] sm:$0xff]
    %v2572 = vld [vmem:[#allocation9 + $0x20] sm:$0xff]
    %v2573 = vld [vmem:[#allocation9 + $0x28] sm:$0xff]
    %v2574 = vld [vmem:[#allocation9 + $0x30] sm:$0xff]
    %v2575 = vld [vmem:[#allocation9 + $0x38] sm:$0xff]
    %v2584 = vunpack.c.l.b16 %v2568
    %v2585 = vunpack.c.h.b16 %v2568
    %v2586 = vunpack.c.l.b16 %v2569
    %v2587 = vunpack.c.h.b16 %v2569
    %v2588 = vunpack.c.l.b16 %v2570
    %v2589 = vunpack.c.h.b16 %v2570
    %v2590 = vunpack.c.l.b16 %v2571
    %v2591 = vunpack.c.h.b16 %v2571
    %v2592 = vunpack.c.l.b16 %v2572
    %v2593 = vunpack.c.h.b16 %v2572
    %v2594 = vunpack.c.l.b16 %v2573
    %v2595 = vunpack.c.h.b16 %v2573
    %v2596 = vunpack.c.l.b16 %v2574
    %v2597 = vunpack.c.h.b16 %v2574
    %v2598 = vunpack.c.l.b16 %v2575
    %v2599 = vunpack.c.h.b16 %v2575
    %v2600 = vpack.c.b16 %v2586, %v2584
    %v2601 = vpack.c.b16 %v2587, %v2585
    %v2602 = vpack.c.b16 %v2590, %v2588
    %v2603 = vpack.c.b16 %v2591, %v2589
    %v2604 = vpack.c.b16 %v2594, %v2592
    %v2605 = vpack.c.b16 %v2595, %v2593
    %v2606 = vpack.c.b16 %v2598, %v2596
    %v2607 = vpack.c.b16 %v2599, %v2597
    %v2617 = vsel %vm324, %v2567, 0
    %2619 = vmatprep.subr.bf16.mxu0 %v2601
    %2620 = vmatpush1.bf16.msra.mxu0 %v2600
    %2621 = vmatprep.subr.bf16.mxu0 %v2603
    %2622 = vmatpush1.bf16.msra.mxu0 %v2602
    %2623 = vmatprep.subr.bf16.mxu0 %v2605
    %2624 = vmatpush1.bf16.msra.mxu0 %v2604
    %2625 = vmatprep.subr.bf16.mxu0 %v2607
    %2626 = vmatpush1.bf16.msra.mxu0 %v2606
    %2627 = vmatprep.subr.bf16.mxu0 0
    %2628 = vmatpush1.bf16.msra.mxu0 0
    %2629 = vmatprep.subr.bf16.mxu0 0
    %2630 = vmatpush1.bf16.msra.mxu0 0
    %2631 = vmatprep.subr.bf16.mxu0 0
    %2632 = vmatpush1.bf16.msra.mxu0 0
    %2633 = vmatprep.subr.bf16.mxu0 0
    %2634 = vmatpush1.bf16.msra.mxu0 0
    %2635 = vmatprep.subr.bf16.mxu0 0
    %2636 = vmatpush1.bf16.msra.mxu0 0
    %2637 = vmatprep.subr.bf16.mxu0 0
    %2638 = vmatpush1.bf16.msra.mxu0 0
    %2639 = vmatprep.subr.bf16.mxu0 0
    %2640 = vmatpush1.bf16.msra.mxu0 0
    %2641 = vmatprep.subr.bf16.mxu0 0
    %2642 = vmatpush1.bf16.msra.mxu0 0
    %2643 = vmatprep.subr.bf16.mxu0 0
    %2644 = vmatpush1.bf16.msra.mxu0 0
    %2645 = vmatprep.subr.bf16.mxu0 0
    %2646 = vmatpush1.bf16.msra.mxu0 0
    %2647 = vmatprep.subr.bf16.mxu0 0
    %2648 = vmatpush1.bf16.msra.mxu0 0
    %2649 = vmatprep.subr.bf16.mxu0 0
    %2650 = vmatpush1.bf16.msra.mxu0 0
    %2651 = vmatprep.mubr.bf16.mxu0 0
    %2652 = vmatmul.mubr.bf16.gmra.mrb[0].mxu0 %v2617
    %v2653 = vpop.f32.mrb[0].mxu0
    %v2654 = vadd.f32 0.0, %v2653
    %v2655 = vpop.f32.mrb[0].mxu0
    %v2656 = vadd.f32 0.0, %v2655
    %v2657 = vpop.f32.mrb[0].mxu0
    %v2658 = vpop.f32.mrb[0].mxu0
    %2659 = vdwg.mxu0
    %v2660 = vld [vmem:[%s400] sm:$0xff]
    %v2661 = vadd.f32 %v2660, %v2654
    %v2662 = vxor.u32 %v2661, 2147483648
    %v2663 = vmul.f32 %v2662, 1.442695
    %v2664 = vpow.pop %v2663
    %v2665 = vadd.f32 %v2664, 1.0
    %v2666 = vrcp.pop %v2665
    %v2667 = vmul.f32 1.0, %v2666
    %v2668 = vtanh.pop %v2661
    %v2669 = vmul.f32 %v2667, %v2520
    %2671 = vrot.lane.b32.xlu0 %v2668, 64
    %v2672 = vpop.permute.xlu0 %2671
    %v2674 = vmul.f32 %v2667, %v2672
    %2676 = vrot.lane.b32.xlu0 %v2674, 32
    %v2677 = vpop.permute.xlu0 %2676
    %v2679 = vadd.f32 %v2669, %v2677
    %v2680 = vtanh.pop %v2679
    %2682 = vrot.lane.b32.xlu0 %v2680, 64
    %v2683 = vpop.permute.xlu0 %2682
    %v2685 = vmul.f32 %v2667, %v2683
    %v2686 = vld [vmem:[%s371 + $0x8] sm:$0xff]
    %v2687 = vadd.f32 %v2686, %v2656
    %v2688 = vxor.u32 %v2687, 2147483648
    %v2689 = vmul.f32 %v2688, 1.442695
    %v2690 = vpow.pop %v2689
    %v2691 = vadd.f32 %v2690, 1.0
    %v2692 = vrcp.pop %v2691
    %v2693 = vmul.f32 1.0, %v2692
    %v2694 = vtanh.pop %v2687
    %v2695 = vmul.f32 %v2693, %v2546
    %2697 = vrot.lane.b32.xlu0 %v2694, 64
    %v2698 = vpop.permute.xlu0 %2697
    %v2700 = vmul.f32 %v2693, %v2698
    %2702 = vrot.lane.b32.xlu0 %v2700, 32
    %v2703 = vpop.permute.xlu0 %2702
    %v2705 = vadd.f32 %v2695, %v2703
    %v2706 = vtanh.pop %v2705
    %2708 = vrot.lane.b32.xlu0 %v2706, 64
    %v2709 = vpop.permute.xlu0 %2708
    %v2711 = vmul.f32 %v2693, %v2709
    %2713 = vrot.lane.b32.xlu0 %v2685, 32
    %v2714 = vpop.permute.xlu0 %2713
    %2716 = vst.msk [vmem:[%s1248] sm:$0xff] %vm264, %v2714
    %2718 = vrot.lane.b32.xlu0 %v2711, 32
    %v2719 = vpop.permute.xlu0 %2718
    %2721 = vst.msk [vmem:[%s1254] sm:$0xff] %vm264, %v2719
    %2722 = vrot.lane.b32.xlu0 %v2711, 64
    %v2723 = vpop.permute.xlu0 %2722
    %v2725 = vsel %vm264, %v2714, %v2723
    %v2726 = vpack.c.bf16 %v2725, %v2725
    %v2727 = vld [vmem:[#allocation9] sm:$0xff]
    %v2728 = vld [vmem:[#allocation9 + $0x8] sm:$0xff]
    %v2729 = vld [vmem:[#allocation9 + $0x10] sm:$0xff]
    %v2730 = vld [vmem:[#allocation9 + $0x18] sm:$0xff]
    %v2731 = vld [vmem:[#allocation9 + $0x20] sm:$0xff]
    %v2732 = vld [vmem:[#allocation9 + $0x28] sm:$0xff]
    %v2733 = vld [vmem:[#allocation9 + $0x30] sm:$0xff]
    %v2734 = vld [vmem:[#allocation9 + $0x38] sm:$0xff]
    %v2743 = vunpack.c.l.b16 %v2727
    %v2744 = vunpack.c.h.b16 %v2727
    %v2745 = vunpack.c.l.b16 %v2728
    %v2746 = vunpack.c.h.b16 %v2728
    %v2747 = vunpack.c.l.b16 %v2729
    %v2748 = vunpack.c.h.b16 %v2729
    %v2749 = vunpack.c.l.b16 %v2730
    %v2750 = vunpack.c.h.b16 %v2730
    %v2751 = vunpack.c.l.b16 %v2731
    %v2752 = vunpack.c.h.b16 %v2731
    %v2753 = vunpack.c.l.b16 %v2732
    %v2754 = vunpack.c.h.b16 %v2732
    %v2755 = vunpack.c.l.b16 %v2733
    %v2756 = vunpack.c.h.b16 %v2733
    %v2757 = vunpack.c.l.b16 %v2734
    %v2758 = vunpack.c.h.b16 %v2734
    %v2759 = vpack.c.b16 %v2745, %v2743
    %v2760 = vpack.c.b16 %v2746, %v2744
    %v2761 = vpack.c.b16 %v2749, %v2747
    %v2762 = vpack.c.b16 %v2750, %v2748
    %v2763 = vpack.c.b16 %v2753, %v2751
    %v2764 = vpack.c.b16 %v2754, %v2752
    %v2765 = vpack.c.b16 %v2757, %v2755
    %v2766 = vpack.c.b16 %v2758, %v2756
    %v2776 = vsel %vm324, %v2726, 0
    %2778 = vmatprep.subr.bf16.mxu0 %v2760
    %2779 = vmatpush1.bf16.msra.mxu0 %v2759
    %2780 = vmatprep.subr.bf16.mxu0 %v2762
    %2781 = vmatpush1.bf16.msra.mxu0 %v2761
    %2782 = vmatprep.subr.bf16.mxu0 %v2764
    %2783 = vmatpush1.bf16.msra.mxu0 %v2763
    %2784 = vmatprep.subr.bf16.mxu0 %v2766
    %2785 = vmatpush1.bf16.msra.mxu0 %v2765
    %2786 = vmatprep.subr.bf16.mxu0 0
    %2787 = vmatpush1.bf16.msra.mxu0 0
    %2788 = vmatprep.subr.bf16.mxu0 0
    %2789 = vmatpush1.bf16.msra.mxu0 0
    %2790 = vmatprep.subr.bf16.mxu0 0
    %2791 = vmatpush1.bf16.msra.mxu0 0
    %2792 = vmatprep.subr.bf16.mxu0 0
    %2793 = vmatpush1.bf16.msra.mxu0 0
    %2794 = vmatprep.subr.bf16.mxu0 0
    %2795 = vmatpush1.bf16.msra.mxu0 0
    %2796 = vmatprep.subr.bf16.mxu0 0
    %2797 = vmatpush1.bf16.msra.mxu0 0
    %2798 = vmatprep.subr.bf16.mxu0 0
    %2799 = vmatpush1.bf16.msra.mxu0 0
    %2800 = vmatprep.subr.bf16.mxu0 0
    %2801 = vmatpush1.bf16.msra.mxu0 0
    %2802 = vmatprep.subr.bf16.mxu0 0
    %2803 = vmatpush1.bf16.msra.mxu0 0
    %2804 = vmatprep.subr.bf16.mxu0 0
    %2805 = vmatpush1.bf16.msra.mxu0 0
    %2806 = vmatprep.subr.bf16.mxu0 0
    %2807 = vmatpush1.bf16.msra.mxu0 0
    %2808 = vmatprep.subr.bf16.mxu0 0
    %2809 = vmatpush1.bf16.msra.mxu0 0
    %2810 = vmatprep.mubr.bf16.mxu0 0
    %2811 = vmatmul.mubr.bf16.gmra.mrb[0].mxu0 %v2776
    %v2812 = vpop.f32.mrb[0].mxu0
    %v2813 = vadd.f32 0.0, %v2812
    %v2814 = vpop.f32.mrb[0].mxu0
    %v2815 = vadd.f32 0.0, %v2814
    %v2816 = vpop.f32.mrb[0].mxu0
    %v2817 = vpop.f32.mrb[0].mxu0
    %2818 = vdwg.mxu0
    %v2819 = vld [vmem:[%s1355] sm:$0xff]
    %v2820 = vadd.f32 %v2819, %v2813
    %v2821 = vxor.u32 %v2820, 2147483648
    %v2822 = vmul.f32 %v2821, 1.442695
    %v2823 = vpow.pop %v2822
    %v2824 = vadd.f32 %v2823, 1.0
    %v2825 = vrcp.pop %v2824
    %v2826 = vmul.f32 1.0, %v2825
    %v2827 = vtanh.pop %v2820
    %v2828 = vmul.f32 %v2826, %v2679
    %2830 = vrot.lane.b32.xlu0 %v2827, 64
    %v2831 = vpop.permute.xlu0 %2830
    %v2833 = vmul.f32 %v2826, %v2831
    %2835 = vrot.lane.b32.xlu0 %v2833, 32
    %v2836 = vpop.permute.xlu0 %2835
    %v2838 = vadd.f32 %v2828, %v2836
    %v2839 = vtanh.pop %v2838
    %2841 = vrot.lane.b32.xlu0 %v2839, 64
    %v2842 = vpop.permute.xlu0 %2841
    %v2844 = vmul.f32 %v2826, %v2842
    %v2845 = vld [vmem:[%s1384 + $0x8] sm:$0xff]
    %v2846 = vadd.f32 %v2845, %v2815
    %v2847 = vxor.u32 %v2846, 2147483648
    %v2848 = vmul.f32 %v2847, 1.442695
    %v2849 = vpow.pop %v2848
    %v2850 = vadd.f32 %v2849, 1.0
    %v2851 = vrcp.pop %v2850
    %v2852 = vmul.f32 1.0, %v2851
    %v2853 = vtanh.pop %v2846
    %v2854 = vmul.f32 %v2852, %v2705
    %2856 = vrot.lane.b32.xlu0 %v2853, 64
    %v2857 = vpop.permute.xlu0 %2856
    %v2859 = vmul.f32 %v2852, %v2857
    %2861 = vrot.lane.b32.xlu0 %v2859, 32
    %v2862 = vpop.permute.xlu0 %2861
    %v2864 = vadd.f32 %v2854, %v2862
    %v2865 = vtanh.pop %v2864
    %2867 = vrot.lane.b32.xlu0 %v2865, 64
    %v2868 = vpop.permute.xlu0 %2867
    %v2870 = vmul.f32 %v2852, %v2868
    %2872 = vrot.lane.b32.xlu0 %v2844, 32
    %v2873 = vpop.permute.xlu0 %2872
    %2875 = vst.msk [vmem:[%s1415] sm:$0xff] %vm264, %v2873
    %2877 = vrot.lane.b32.xlu0 %v2870, 32
    %v2878 = vpop.permute.xlu0 %2877
    %2880 = vst.msk [vmem:[#allocation3] sm:$0xff] %vm264, %v2878
    %v2881 = vld [vmem:[#allocation2] sm:$0xff]
    %v2882 = vld [vmem:[#allocation2 + $0x8] sm:$0xff]
    %v2883 = vld [vmem:[#allocation2 + $0x10] sm:$0xff]
    %v2884 = vld [vmem:[#allocation2 + $0x18] sm:$0xff]
    %v2885 = vld [vmem:[#allocation2 + $0x20] sm:$0xff]
    %v2886 = vld [vmem:[#allocation2 + $0x28] sm:$0xff]
    %v2887 = vld [vmem:[#allocation2 + $0x30] sm:$0xff]
    %v2888 = vld [vmem:[#allocation2 + $0x38] sm:$0xff]
    %v2889 = vpack.c.bf16 %v2882, %v2881
    %v2890 = vpack.c.bf16 %v2884, %v2883
    %v2891 = vpack.c.bf16 %v2886, %v2885
    %v2892 = vpack.c.bf16 %v2888, %v2887
    %v2893 = vld [vmem:[%s7] sm:$0xf]
    %v2894 = vld [vmem:[%s7 + $0x4] sm:$0xf]
    %v2895 = vld [vmem:[%s7 + $0x8] sm:$0xf]
    %v2896 = vld [vmem:[%s7 + $0xc] sm:$0xf]
    %v2897 = vld [vmem:[#allocation3] sm:$0xff]
    %v2898 = vld [vmem:[#allocation3 + $0x8] sm:$0xff]
    %v2899 = vld [vmem:[#allocation3 + $0x10] sm:$0xff]
    %v2900 = vld [vmem:[#allocation3 + $0x18] sm:$0xff]
    %v2901 = vld [vmem:[#allocation3 + $0x20] sm:$0xff]
    %v2902 = vld [vmem:[#allocation3 + $0x28] sm:$0xff]
    %v2903 = vld [vmem:[#allocation3 + $0x30] sm:$0xff]
    %v2904 = vld [vmem:[#allocation3 + $0x38] sm:$0xff]
    %v2905 = vpack.c.bf16 %v2898, %v2897
    %v2906 = vpack.c.bf16 %v2900, %v2899
    %v2907 = vpack.c.bf16 %v2902, %v2901
    %v2908 = vpack.c.bf16 %v2904, %v2903
    %v2909 = vld [vmem:[%s7 + $0x10] sm:$0xf]
    %v2910 = vld [vmem:[%s7 + $0x14] sm:$0xf]
    %v2911 = vld [vmem:[%s7 + $0x18] sm:$0xf]
    %v2912 = vld [vmem:[%s7 + $0x1c] sm:$0xf]
    %v2917 = vunpack.c.l.b16 %v2909
    %v2918 = vunpack.c.l.b16 %v2910
    %v2919 = vunpack.c.l.b16 %v2911
    %v2920 = vunpack.c.l.b16 %v2912
    %v2921 = vpack.c.b16 %v2918, %v2917
    %v2922 = vpack.c.b16 %v2920, %v2919
    %v2926 = vsel %vm264, %v2905, 0
    %v2929 = vsel %vm264, %v2906, 0
    %v2932 = vsel %vm264, %v2907, 0
    %v2935 = vsel %vm264, %v2908, 0
    %2937 = vmatprep.subr.bf16.mxu0 0
    %2938 = vmatpush1.bf16.msra.mxu0 %v2921
    %2939 = vmatprep.subr.bf16.mxu0 0
    %2940 = vmatpush1.bf16.msra.mxu0 %v2922
    %2941 = vmatprep.subr.bf16.mxu0 0
    %2942 = vmatpush1.bf16.msra.mxu0 0
    %2943 = vmatprep.subr.bf16.mxu0 0
    %2944 = vmatpush1.bf16.msra.mxu0 0
    %2945 = vmatprep.subr.bf16.mxu0 0
    %2946 = vmatpush1.bf16.msra.mxu0 0
    %2947 = vmatprep.subr.bf16.mxu0 0
    %2948 = vmatpush1.bf16.msra.mxu0 0
    %2949 = vmatprep.subr.bf16.mxu0 0
    %2950 = vmatpush1.bf16.msra.mxu0 0
    %2951 = vmatprep.subr.bf16.mxu0 0
    %2952 = vmatpush1.bf16.msra.mxu0 0
    %2953 = vmatprep.subr.bf16.mxu0 0
    %2954 = vmatpush1.bf16.msra.mxu0 0
    %2955 = vmatprep.subr.bf16.mxu0 0
    %2956 = vmatpush1.bf16.msra.mxu0 0
    %2957 = vmatprep.subr.bf16.mxu0 0
    %2958 = vmatpush1.bf16.msra.mxu0 0
    %2959 = vmatprep.subr.bf16.mxu0 0
    %2960 = vmatpush1.bf16.msra.mxu0 0
    %2961 = vmatprep.subr.bf16.mxu0 0
    %2962 = vmatpush1.bf16.msra.mxu0 0
    %2963 = vmatprep.subr.bf16.mxu0 0
    %2964 = vmatpush1.bf16.msra.mxu0 0
    %2965 = vmatprep.subr.bf16.mxu0 0
    %2966 = vmatpush1.bf16.msra.mxu0 0
    %2967 = vmatprep.subr.bf16.mxu0 0
    %2968 = vmatpush1.bf16.msra.mxu0 0
    %2969 = vmatprep.mubr.bf16.mxu0 0
    %2970 = vmatmul.mubr.bf16.gmra.mrb[0].mxu0 %v2926
    %v2971 = vpop.f32.mrb[0].mxu0
    %v2972 = vadd.f32 0.0, %v2971
    %v2973 = vpop.f32.mrb[0].mxu0
    %v2974 = vpop.f32.mrb[0].mxu0
    %v2975 = vadd.f32 0.0, %v2974
    %v2976 = vpop.f32.mrb[0].mxu0
    %2977 = vmatprep.mubr.bf16.mxu0 0
    %2978 = vmatmul.mubr.bf16.gmra.mrb[0].mxu0 %v2929
    %v2979 = vpop.f32.mrb[0].mxu0
    %v2980 = vadd.f32 0.0, %v2979
    %v2981 = vpop.f32.mrb[0].mxu0
    %v2982 = vpop.f32.mrb[0].mxu0
    %v2983 = vadd.f32 0.0, %v2982
    %v2984 = vpop.f32.mrb[0].mxu0
    %2985 = vmatprep.mubr.bf16.mxu0 0
    %2986 = vmatmul.mubr.bf16.gmra.mrb[0].mxu0 %v2932
    %v2987 = vpop.f32.mrb[0].mxu0
    %v2988 = vadd.f32 0.0, %v2987
    %v2989 = vpop.f32.mrb[0].mxu0
    %v2990 = vpop.f32.mrb[0].mxu0
    %v2991 = vadd.f32 0.0, %v2990
    %v2992 = vpop.f32.mrb[0].mxu0
    %2993 = vmatprep.mubr.bf16.mxu0 0
    %2994 = vmatmul.mubr.bf16.gmra.mrb[0].mxu0 %v2935
    %v2995 = vpop.f32.mrb[0].mxu0
    %v2996 = vadd.f32 0.0, %v2995
    %v2997 = vpop.f32.mrb[0].mxu0
    %v2998 = vpop.f32.mrb[0].mxu0
    %v2999 = vadd.f32 0.0, %v2998
    %v3000 = vpop.f32.mrb[0].mxu0
    %3001 = vdwg.mxu0
    %v3006 = vunpack.c.l.b16 %v2893
    %v3007 = vunpack.c.l.b16 %v2894
    %v3008 = vunpack.c.l.b16 %v2895
    %v3009 = vunpack.c.l.b16 %v2896
    %v3010 = vpack.c.b16 %v3007, %v3006
    %v3011 = vpack.c.b16 %v3009, %v3008
    %v3015 = vsel %vm264, %v2889, 0
    %v3018 = vsel %vm264, %v2890, 0
    %v3021 = vsel %vm264, %v2891, 0
    %v3024 = vsel %vm264, %v2892, 0
    %3026 = vmatprep.subr.bf16.mxu0 0
    %3027 = vmatpush1.bf16.msra.mxu0 %v3010
    %3028 = vmatprep.subr.bf16.mxu0 0
    %3029 = vmatpush1.bf16.msra.mxu0 %v3011
    %3030 = vmatprep.subr.bf16.mxu0 0
    %3031 = vmatpush1.bf16.msra.mxu0 0
    %3032 = vmatprep.subr.bf16.mxu0 0
    %3033 = vmatpush1.bf16.msra.mxu0 0
    %3034 = vmatprep.subr.bf16.mxu0 0
    %3035 = vmatpush1.bf16.msra.mxu0 0
    %3036 = vmatprep.subr.bf16.mxu0 0
    %3037 = vmatpush1.bf16.msra.mxu0 0
    %3038 = vmatprep.subr.bf16.mxu0 0
    %3039 = vmatpush1.bf16.msra.mxu0 0
    %3040 = vmatprep.subr.bf16.mxu0 0
    %3041 = vmatpush1.bf16.msra.mxu0 0
    %3042 = vmatprep.subr.bf16.mxu0 0
    %3043 = vmatpush1.bf16.msra.mxu0 0
    %3044 = vmatprep.subr.bf16.mxu0 0
    %3045 = vmatpush1.bf16.msra.mxu0 0
    %3046 = vmatprep.subr.bf16.mxu0 0
    %3047 = vmatpush1.bf16.msra.mxu0 0
    %3048 = vmatprep.subr.bf16.mxu0 0
    %3049 = vmatpush1.bf16.msra.mxu0 0
    %3050 = vmatprep.subr.bf16.mxu0 0
    %3051 = vmatpush1.bf16.msra.mxu0 0
    %3052 = vmatprep.subr.bf16.mxu0 0
    %3053 = vmatpush1.bf16.msra.mxu0 0
    %3054 = vmatprep.subr.bf16.mxu0 0
    %3055 = vmatpush1.bf16.msra.mxu0 0
    %3056 = vmatprep.subr.bf16.mxu0 0
    %3057 = vmatpush1.bf16.msra.mxu0 0
    %3058 = vmatprep.mubr.bf16.mxu0 0
    %3059 = vmatmul.mubr.bf16.gmra.mrb[0].mxu0 %v3015
    %v3060 = vpop.f32.mrb[0].mxu0
    %v3061 = vadd.f32 %v2972, %v3060
    %v3062 = vpop.f32.mrb[0].mxu0
    %v3063 = vpop.f32.mrb[0].mxu0
    %v3064 = vadd.f32 %v2975, %v3063
    %v3065 = vpop.f32.mrb[0].mxu0
    %3066 = vmatprep.mubr.bf16.mxu0 0
    %3067 = vmatmul.mubr.bf16.gmra.mrb[0].mxu0 %v3018
    %v3068 = vpop.f32.mrb[0].mxu0
    %v3069 = vadd.f32 %v2980, %v3068
    %v3070 = vpop.f32.mrb[0].mxu0
    %v3071 = vpop.f32.mrb[0].mxu0
    %v3072 = vadd.f32 %v2983, %v3071
    %v3073 = vpop.f32.mrb[0].mxu0
    %3074 = vmatprep.mubr.bf16.mxu0 0
    %3075 = vmatmul.mubr.bf16.gmra.mrb[0].mxu0 %v3021
    %v3076 = vpop.f32.mrb[0].mxu0
    %v3077 = vadd.f32 %v2988, %v3076
    %v3078 = vpop.f32.mrb[0].mxu0
    %v3079 = vpop.f32.mrb[0].mxu0
    %v3080 = vadd.f32 %v2991, %v3079
    %v3081 = vpop.f32.mrb[0].mxu0
    %3082 = vmatprep.mubr.bf16.mxu0 0
    %3083 = vmatmul.mubr.bf16.gmra.mrb[0].mxu0 %v3024
    %v3084 = vpop.f32.mrb[0].mxu0
    %v3085 = vadd.f32 %v2996, %v3084
    %v3086 = vpop.f32.mrb[0].mxu0
    %v3087 = vpop.f32.mrb[0].mxu0
    %v3088 = vadd.f32 %v2999, %v3087
    %v3089 = vpop.f32.mrb[0].mxu0
    %3090 = vdwg.mxu0
    %v3091 = vld [vmem:[%s8] sm:$0x1]
    %v3093 = vlaneseq
    %v3094 = vshrl.u32 %v3093, 7
    %v3095 = vsub.s32 0, %v3094
    %v3096 = vrot.slane %v3091, %v3095
    %v3098 = vadd.f32 %v3061, %v3096
    %v3099 = vadd.f32 %v3064, %v3096
    %v3100 = vadd.f32 %v3069, %v3096
    %v3101 = vadd.f32 %v3072, %v3096
    %v3102 = vadd.f32 %v3077, %v3096
    %v3103 = vadd.f32 %v3080, %v3096
    %v3104 = vadd.f32 %v3085, %v3096
    %v3105 = vadd.f32 %v3088, %v3096
    %vm3106 = vcmask 15360
    %3107 = vst.msk [vmem:[%s9] sm:$0xff] %vm3106, %v3098
    %3108 = vst.msk [vmem:[%s9 + $0x8] sm:$0xff] %vm3106, %v3099
    %3109 = vst.msk [vmem:[%s9 + $0x10] sm:$0xff] %vm3106, %v3100
    %3110 = vst.msk [vmem:[%s9 + $0x18] sm:$0xff] %vm3106, %v3101
    %3111 = vst.msk [vmem:[%s9 + $0x20] sm:$0xff] %vm3106, %v3102
    %3112 = vst.msk [vmem:[%s9 + $0x28] sm:$0xff] %vm3106, %v3103
    %3113 = vst.msk [vmem:[%s9 + $0x30] sm:$0xff] %vm3106, %v3104
    %3114 = vst.msk [vmem:[%s9 + $0x38] sm:$0xff] %vm3106, %v3105
    // Predicated region
    $region50: #{tpu_custom_call.1} parent=1 // pred_check
      _
    $region51: #{tpu_custom_call.1} parent=1 // pred_check_branch
      %3116 = sbr.rel (0) target = $region53
    $region52: #{tpu_custom_call.1} parent=1 // pred_region
      _
    $region53: #{tpu_custom_call.1} parent=1 // pred_fallthru
      _
    // Predicated region
    $region54: #{tpu_custom_call.1} parent=1 // pred_check
      _
    $region55: #{tpu_custom_call.1} parent=1 // pred_check_branch
      %3118 = sbr.rel (0) target = $region57
    $region56: #{tpu_custom_call.1} parent=1 // pred_region
      _
    $region57: #{tpu_custom_call.1} parent=1 // pred_fallthru
      _
    %3119 = vsyncpa [#allocation6], 1
    %3120 = vsyncpa [#allocation8], 1

</llo_original>
